<compile_context>
chip_gen: v6e
topology: v6e:2x2x1
jax: 0.10.0
libtpu: 0.0.40
codegen_flags: <defaults>
</compile_context>

<pallas_src>
import jax
import jax.numpy as jnp
from jax.experimental import pallas as pl
from jax.experimental.pallas import tpu as pltpu

# ----------------------------- model dims (small) ---------------------------
EMBED = 16      # embed_size        (orig 32)
HIDDEN = 32     # hidden_size       (orig 800)
NUM_LAYERS = 3  # num_layers        (orig 3)
CLASSES = 128   # number_of_classes (orig 1000)
BATCH = 8       # batch             (orig 100)
SEQ = 10        # seq length forced by linear(hidden*10) + reshape semantics


# --------------------------- fused RNNLM Pallas kernel -----------------------
def _rnnlm_fused_kernel(x_ref,                                   # (T*B, E) bf16, time-major rows
                        wih0_ref, whh0_ref, b0_ref,              # layer 0 (bf16, bf16, f32)
                        wih1_ref, whh1_ref, b1_ref,              # layer 1
                        wih2_ref, whh2_ref, b2_ref,              # layer 2
                        h0_ref, c0_ref,                          # (L, B, H) f32
                        wlin_ref, blin_ref,                      # (T*H, C) bf16, (1, C) f32
                        logits_ref, hn_ref, cn_ref,              # outputs (f32)
                        gx_buf, seq_buf, hcol_buf):              # VMEM scratch (f32)
    T, B, H = SEQ, BATCH, HIDDEN
    wih_refs = (wih0_ref, wih1_ref, wih2_ref)
    whh_refs = (whh0_ref, whh1_ref, whh2_ref)
    b_refs = (b0_ref, b1_ref, b2_ref)

    for layer in range(NUM_LAYERS):
        # --- hoisted input projection: all T timesteps in ONE MXU matmul ----
        if layer == 0:
            src2d = x_ref[...]                                        # (T*B, E) bf16
        else:
            # (T, B, H) f32 -> (T*B, H); B==8 sublanes => layout-preserving.
            src2d = seq_buf[...].reshape(T * B, H).astype(jnp.bfloat16)
        gx_buf[...] = (jnp.dot(src2d, wih_refs[layer][...],
                               preferred_element_type=jnp.float32)
                       + b_refs[layer][...]).reshape(T, B, 4 * H)

        # (H, 4H) bf16 — 2 vregs at test dims, fine to hold in registers.
        # TODO(synk): at H=800 read the Ref inside the dot instead (avoid spill).
        whh_l = whh_refs[layer][...]
        is_last = layer == NUM_LAYERS - 1

        h = h0_ref[layer]                                             # (B, H) f32
        c = c0_ref[layer]

        # Fully-unrolled static time loop: every slice start below is a
        # compile-time constant.  Only h @ W_hh is on the serial chain.
        for t in range(T):
            gates = gx_buf[t] + jnp.dot(h.astype(jnp.bfloat16), whh_l,
                                        preferred_element_type=jnp.float32)
            # gate column layout is [i | f | o | g] (reordered in the wrapper):
            # one sigmoid over the contiguous 3H slice, one tanh over the rest.
            sig = jax.nn.sigmoid(gates[:, 0:3 * H])
            i_g = sig[:, 0:H]
            f_g = sig[:, H:2 * H]
            o_g = sig[:, 2 * H:3 * H]
            g_g = jnp.tanh(gates[:, 3 * H:4 * H])
            c = f_g * c + i_g * g_g
            h = o_g * jnp.tanh(c)
            if not is_last:
                seq_buf[t] = h                    # next layer's input, VMEM only
            else:
                hcol_buf[:, t * H:(t + 1) * H] = h   # classifier slab (B, T*H)

        hn_ref[layer] = h
        cn_ref[layer] = c

    # --- classifier hoisted OUT of the recurrence: one (B,T*H) @ (T*H,C) ----
    logits_ref[...] = (jnp.dot(hcol_buf[...].astype(jnp.bfloat16), wlin_ref[...],
                               preferred_element_type=jnp.float32)
                       + blin_ref[...])


def _reorder_gates(w):
    """Permute gate blocks from PyTorch's [i|f|g|o] to the kernel's [i|f|o|g]."""
    i_g, f_g, g_g, o_g = jnp.split(w, 4, axis=-1)
    return jnp.concatenate([i_g, f_g, o_g, g_g], axis=-1)


def rnnlm_forward(params, x, h, c):
    """x: (B, T, E) batch-first; h, c: (NUM_LAYERS, B, H) float32.

    Returns (logits, (h_n, c_n)).  Dropouts are identity (eval mode).
    """
    B, T, E = x.shape
    # time-major flattened rows (row index = t*B + b), bf16 MXU operand
    x_flat = jnp.transpose(x, (1, 0, 2)).reshape(T * B, E).astype(jnp.bfloat16)

    kernel_lstm = []
    for w_ih, w_hh, bias in params["lstm"]:
        kernel_lstm.append((_reorder_gates(w_ih).astype(jnp.bfloat16),
                            _reorder_gates(w_hh).astype(jnp.bfloat16),
                            _reorder_gates(bias)))                 # bias stays f32
    (w_ih0, w_hh0, b0), (w_ih1, w_hh1, b1), (w_ih2, w_hh2, b2) = kernel_lstm
    w_lin = params["w_lin"].astype(jnp.bfloat16)
    b_lin = params["b_lin"]

    out_shapes = (
        jax.ShapeDtypeStruct((B, CLASSES), jnp.float32),
        jax.ShapeDtypeStruct((NUM_LAYERS, B, HIDDEN), jnp.float32),
        jax.ShapeDtypeStruct((NUM_LAYERS, B, HIDDEN), jnp.float32),
    )
    vmem_spec = pl.BlockSpec(memory_space=pltpu.MemorySpace.VMEM)

    logits, h_n, c_n = pl.pallas_call(
        _rnnlm_fused_kernel,
        out_shape=out_shapes,
        in_specs=[vmem_spec] * 14,
        out_specs=[vmem_spec] * 3,
        scratch_shapes=[
            pltpu.VMEM((SEQ, BATCH, 4 * HIDDEN), jnp.float32),  # gx_buf: hoisted x-proj
            pltpu.VMEM((SEQ, BATCH, HIDDEN), jnp.float32),      # seq_buf: layer output
            pltpu.VMEM((BATCH, SEQ * HIDDEN), jnp.float32),     # hcol_buf: classifier slab
        ],
    )(x_flat,
      w_ih0, w_hh0, b0,
      w_ih1, w_hh1, b1,
      w_ih2, w_hh2, b2,
      h, c,
      w_lin, b_lin)
    return logits, (h_n, c_n)


# ------------------------------- parameter init ------------------------------
def init_params(key):
    params = {"lstm": []}
    k = 1.0 / jnp.sqrt(jnp.float32(HIDDEN))
    for layer in range(NUM_LAYERS):
        d_in = EMBED if layer == 0 else HIDDEN
        key, k1, k2, k3, k4 = jax.random.split(key, 5)
        w_ih = jax.random.uniform(k1, (d_in, 4 * HIDDEN), jnp.float32, -k, k)
        w_hh = jax.random.uniform(k2, (HIDDEN, 4 * HIDDEN), jnp.float32, -k, k)
        b_ih = jax.random.uniform(k3, (4 * HIDDEN,), jnp.float32, -k, k)
        b_hh = jax.random.uniform(k4, (4 * HIDDEN,), jnp.float32, -k, k)
        # PyTorch gate order [i|f|g|o]; b_ih + b_hh folded (same semantics).
        params["lstm"].append((w_ih, w_hh, (b_ih + b_hh)[None, :]))
    key, k5, k6 = jax.random.split(key, 3)
    kl = 1.0 / jnp.sqrt(jnp.float32(HIDDEN * SEQ))
    params["w_lin"] = jax.random.uniform(
        k5, (HIDDEN * SEQ, CLASSES), jnp.float32, -kl, kl)
    params["b_lin"] = jax.random.uniform(
        k6, (1, CLASSES), jnp.float32, -kl, kl)
    return params


# ------------------------- pure-JAX reference (checking) ---------------------
def rnnlm_reference(params, x, h, c):
    """Mirrors the kernel's bf16-weight / bf16-operand, f32-accumulate math."""
    B, T, _ = x.shape
    f32 = jnp.float32
    layer_in = x                                    # (B, T, D_in) f32
    h_out, c_out = [], []
    for layer in range(NUM_LAYERS):
        w_ih, w_hh, bias = params["lstm"][layer]
        w_ih_b = w_ih.astype(jnp.bfloat16)
        w_hh_b = w_hh.astype(jnp.bfloat16)
        hh, cc = h[layer], c[layer]
        outs = []
        for t in range(T):
            xt = layer_in[:, t, :].astype(jnp.bfloat16)
            gates = (jnp.dot(xt, w_ih_b, preferred_element_type=f32)
                     + jnp.dot(hh.astype(jnp.bfloat16), w_hh_b,
                               preferred_element_type=f32)
                     + bias)
            i_g = jax.nn.sigmoid(gates[:, 0:HIDDEN])
            f_g = jax.nn.sigmoid(gates[:, HIDDEN:2 * HIDDEN])
            g_g = jnp.tanh(gates[:, 2 * HIDDEN:3 * HIDDEN])
            o_g = jax.nn.sigmoid(gates[:, 3 * HIDDEN:4 * HIDDEN])
            cc = f_g * cc + i_g * g_g
            hh = o_g * jnp.tanh(cc)
            outs.append(hh)
        layer_in = jnp.stack(outs, axis=1)          # (B, T, H)
        h_out.append(hh)
        c_out.append(cc)
    flat = layer_in.reshape(B, T * HIDDEN).astype(jnp.bfloat16)
    logits = (jnp.dot(flat, params["w_lin"].astype(jnp.bfloat16),
                      preferred_element_type=f32) + params["b_lin"])
    return logits, (jnp.stack(h_out), jnp.stack(c_out))


# ------------------------------------ main -----------------------------------
if __name__ == "__main__":
    key = jax.random.PRNGKey(0)
    key, kp, kx, kh, kc = jax.random.split(key, 5)

    params = init_params(kp)
    x = jax.random.normal(kx, (BATCH, SEQ, EMBED), jnp.float32)
    h0 = jax.random.normal(kh, (NUM_LAYERS, BATCH, HIDDEN), jnp.float32)
    c0 = jax.random.normal(kc, (NUM_LAYERS, BATCH, HIDDEN), jnp.float32)

    logits, (h_n, c_n) = jax.jit(rnnlm_forward)(params, x, h0, c0)
    jax.block_until_ready((logits, h_n, c_n))

    assert logits.shape == (BATCH, CLASSES)
    assert h_n.shape == (NUM_LAYERS, BATCH, HIDDEN)
    assert c_n.shape == (NUM_LAYERS, BATCH, HIDDEN)

    # correctness check against a precision-matched pure-JAX reference
    ref_logits, (ref_h, ref_c) = jax.jit(rnnlm_reference)(params, x, h0, c0)
    jax.block_until_ready((ref_logits, ref_h, ref_c))
    assert jnp.allclose(logits, ref_logits, rtol=1e-2, atol=1e-2)
    assert jnp.allclose(h_n, ref_h, rtol=1e-2, atol=1e-2)
    assert jnp.allclose(c_n, ref_c, rtol=1e-2, atol=1e-2)

    print("KERNEL_OK")
</pallas_src>

<mosaic_0001>
module attributes {stable_mosaic.version = 11 : i64} {
  func.func @_rnnlm_fused_kernel(%arg0: memref<80x16xbf16, #tpu.memory_space<vmem>>, %arg1: memref<16x128xbf16, #tpu.memory_space<vmem>>, %arg2: memref<32x128xbf16, #tpu.memory_space<vmem>>, %arg3: memref<1x128xf32, #tpu.memory_space<vmem>>, %arg4: memref<32x128xbf16, #tpu.memory_space<vmem>>, %arg5: memref<32x128xbf16, #tpu.memory_space<vmem>>, %arg6: memref<1x128xf32, #tpu.memory_space<vmem>>, %arg7: memref<32x128xbf16, #tpu.memory_space<vmem>>, %arg8: memref<32x128xbf16, #tpu.memory_space<vmem>>, %arg9: memref<1x128xf32, #tpu.memory_space<vmem>>, %arg10: memref<3x8x32xf32, #tpu.memory_space<vmem>>, %arg11: memref<3x8x32xf32, #tpu.memory_space<vmem>>, %arg12: memref<320x128xbf16, #tpu.memory_space<vmem>>, %arg13: memref<1x128xf32, #tpu.memory_space<vmem>>, %arg14: memref<8x128xf32, #tpu.memory_space<vmem>>, %arg15: memref<3x8x32xf32, #tpu.memory_space<vmem>>, %arg16: memref<3x8x32xf32, #tpu.memory_space<vmem>>, %arg17: memref<10x8x128xf32, #tpu.memory_space<vmem>>, %arg18: memref<10x8x32xf32, #tpu.memory_space<vmem>>, %arg19: memref<8x320xf32, #tpu.memory_space<vmem>>) attributes {dimension_semantics = [], scalar_prefetch = 0 : i64, scratch_operands = 3 : i64, tpu.core_type = #tpu.core_type<tc>} {
    %c0 = arith.constant 0 : index
    %c0_0 = arith.constant 0 : index
    %0 = vector.load %arg0[%c0, %c0_0] : memref<80x16xbf16, #tpu.memory_space<vmem>>, vector<80x16xbf16>
    %c0_1 = arith.constant 0 : index
    %c0_2 = arith.constant 0 : index
    %1 = vector.load %arg1[%c0_1, %c0_2] : memref<16x128xbf16, #tpu.memory_space<vmem>>, vector<16x128xbf16>
    %cst = arith.constant dense<0.000000e+00> : vector<80x128xf32>
    %2 = tpu.matmul %0, %1, %cst {dimension_numbers = #tpu.dot_dimension_numbers<[1], [0], [0], [1], [0, 0, 1, 1], [], []>} : vector<80x16xbf16>, vector<16x128xbf16>, vector<80x128xf32> -> vector<80x128xf32>
    %c0_3 = arith.constant 0 : index
    %c0_4 = arith.constant 0 : index
    %3 = vector.load %arg3[%c0_3, %c0_4] : memref<1x128xf32, #tpu.memory_space<vmem>>, vector<1x128xf32>
    %4 = vector.broadcast %3 : vector<1x128xf32> to vector<80x128xf32>
    %5 = arith.addf %2, %4 : vector<80x128xf32>
    %6 = vector.shape_cast %5 : vector<80x128xf32> to vector<10x8x128xf32>
    %c0_5 = arith.constant 0 : index
    %c0_6 = arith.constant 0 : index
    %c0_7 = arith.constant 0 : index
    %7 = vector.load %arg17[%c0_5, %c0_6, %c0_7] : memref<10x8x128xf32, #tpu.memory_space<vmem>>, vector<10x8x128xf32>
    tpu.vector_store %arg17[%c0_5, %c0_6, %c0_7], %6 {strides = array<i32>} : memref<10x8x128xf32, #tpu.memory_space<vmem>>, vector<10x8x128xf32>,
    %c0_8 = arith.constant 0 : index
    %c0_9 = arith.constant 0 : index
    %8 = vector.load %arg2[%c0_8, %c0_9] : memref<32x128xbf16, #tpu.memory_space<vmem>>, vector<32x128xbf16>
    %c0_10 = arith.constant 0 : index
    %c0_11 = arith.constant 0 : index
    %c0_12 = arith.constant 0 : index
    %9 = vector.load %arg10[%c0_10, %c0_11, %c0_12] : memref<3x8x32xf32, #tpu.memory_space<vmem>>, vector<1x8x32xf32>
    %10 = vector.shape_cast %9 : vector<1x8x32xf32> to vector<8x32xf32>
    %c0_13 = arith.constant 0 : index
    %c0_14 = arith.constant 0 : index
    %c0_15 = arith.constant 0 : index
    %11 = vector.load %arg11[%c0_13, %c0_14, %c0_15] : memref<3x8x32xf32, #tpu.memory_space<vmem>>, vector<1x8x32xf32>
    %12 = vector.shape_cast %11 : vector<1x8x32xf32> to vector<8x32xf32>
    %c0_16 = arith.constant 0 : index
    %c0_17 = arith.constant 0 : index
    %c0_18 = arith.constant 0 : index
    %13 = vector.load %arg17[%c0_16, %c0_17, %c0_18] : memref<10x8x128xf32, #tpu.memory_space<vmem>>, vector<1x8x128xf32>
    %14 = vector.shape_cast %13 : vector<1x8x128xf32> to vector<8x128xf32>
    %15 = arith.truncf %10 : vector<8x32xf32> to vector<8x32xbf16>
    %cst_19 = arith.constant dense<0.000000e+00> : vector<8x128xf32>
    %16 = tpu.matmul %15, %8, %cst_19 {dimension_numbers = #tpu.dot_dimension_numbers<[1], [0], [0], [1], [0, 0, 1, 1], [], []>} : vector<8x32xbf16>, vector<32x128xbf16>, vector<8x128xf32> -> vector<8x128xf32>
    %17 = arith.addf %14, %16 : vector<8x128xf32>
    %18 = vector.extract_strided_slice %17 {offsets = [0, 0], sizes = [8, 96], strides = [1, 1]} : vector<8x128xf32> to vector<8x96xf32>
    %19 = arith.negf %18 : vector<8x96xf32>
    %20 = math.exp %19 : vector<8x96xf32>
    %cst_20 = arith.constant 1.000000e+00 : f32
    %21 = vector.broadcast %cst_20 : f32 to vector<8x96xf32>
    %22 = arith.addf %21, %20 : vector<8x96xf32>
    %23 = arith.divf %21, %22 : vector<8x96xf32>
    %24 = vector.extract_strided_slice %23 {offsets = [0, 0], sizes = [8, 32], strides = [1, 1]} : vector<8x96xf32> to vector<8x32xf32>
    %25 = vector.extract_strided_slice %23 {offsets = [0, 32], sizes = [8, 32], strides = [1, 1]} : vector<8x96xf32> to vector<8x32xf32>
    %26 = vector.extract_strided_slice %23 {offsets = [0, 64], sizes = [8, 32], strides = [1, 1]} : vector<8x96xf32> to vector<8x32xf32>
    %27 = vector.extract_strided_slice %17 {offsets = [0, 96], sizes = [8, 32], strides = [1, 1]} : vector<8x128xf32> to vector<8x32xf32>
    %28 = math.tanh %27 : vector<8x32xf32>
    %29 = arith.mulf %25, %12 : vector<8x32xf32>
    %30 = arith.mulf %24, %28 : vector<8x32xf32>
    %31 = arith.addf %29, %30 : vector<8x32xf32>
    %32 = math.tanh %31 : vector<8x32xf32>
    %33 = arith.mulf %26, %32 : vector<8x32xf32>
    %c0_21 = arith.constant 0 : index
    %c0_22 = arith.constant 0 : index
    %c0_23 = arith.constant 0 : index
    %34 = vector.load %arg18[%c0_21, %c0_22, %c0_23] : memref<10x8x32xf32, #tpu.memory_space<vmem>>, vector<1x8x32xf32>
    %35 = vector.shape_cast %34 : vector<1x8x32xf32> to vector<8x32xf32>
    %36 = vector.shape_cast %33 : vector<8x32xf32> to vector<1x8x32xf32>
    tpu.vector_store %arg18[%c0_21, %c0_22, %c0_23], %36 {strides = array<i32>} : memref<10x8x32xf32, #tpu.memory_space<vmem>>, vector<1x8x32xf32>,
    %c1 = arith.constant 1 : index
    %c0_24 = arith.constant 0 : index
    %c0_25 = arith.constant 0 : index
    %37 = vector.load %arg17[%c1, %c0_24, %c0_25] : memref<10x8x128xf32, #tpu.memory_space<vmem>>, vector<1x8x128xf32>
    %38 = vector.shape_cast %37 : vector<1x8x128xf32> to vector<8x128xf32>
    %39 = arith.truncf %33 : vector<8x32xf32> to vector<8x32xbf16>
    %cst_26 = arith.constant dense<0.000000e+00> : vector<8x128xf32>
    %40 = tpu.matmul %39, %8, %cst_26 {dimension_numbers = #tpu.dot_dimension_numbers<[1], [0], [0], [1], [0, 0, 1, 1], [], []>} : vector<8x32xbf16>, vector<32x128xbf16>, vector<8x128xf32> -> vector<8x128xf32>
    %41 = arith.addf %38, %40 : vector<8x128xf32>
    %42 = vector.extract_strided_slice %41 {offsets = [0, 0], sizes = [8, 96], strides = [1, 1]} : vector<8x128xf32> to vector<8x96xf32>
    %43 = arith.negf %42 : vector<8x96xf32>
    %44 = math.exp %43 : vector<8x96xf32>
    %cst_27 = arith.constant 1.000000e+00 : f32
    %45 = vector.broadcast %cst_27 : f32 to vector<8x96xf32>
    %46 = arith.addf %45, %44 : vector<8x96xf32>
    %47 = arith.divf %45, %46 : vector<8x96xf32>
    %48 = vector.extract_strided_slice %47 {offsets = [0, 0], sizes = [8, 32], strides = [1, 1]} : vector<8x96xf32> to vector<8x32xf32>
    %49 = vector.extract_strided_slice %47 {offsets = [0, 32], sizes = [8, 32], strides = [1, 1]} : vector<8x96xf32> to vector<8x32xf32>
    %50 = vector.extract_strided_slice %47 {offsets = [0, 64], sizes = [8, 32], strides = [1, 1]} : vector<8x96xf32> to vector<8x32xf32>
    %51 = vector.extract_strided_slice %41 {offsets = [0, 96], sizes = [8, 32], strides = [1, 1]} : vector<8x128xf32> to vector<8x32xf32>
    %52 = math.tanh %51 : vector<8x32xf32>
    %53 = arith.mulf %49, %31 : vector<8x32xf32>
    %54 = arith.mulf %48, %52 : vector<8x32xf32>
    %55 = arith.addf %53, %54 : vector<8x32xf32>
    %56 = math.tanh %55 : vector<8x32xf32>
    %57 = arith.mulf %50, %56 : vector<8x32xf32>
    %c1_28 = arith.constant 1 : index
    %c0_29 = arith.constant 0 : index
    %c0_30 = arith.constant 0 : index
    %58 = vector.load %arg18[%c1_28, %c0_29, %c0_30] : memref<10x8x32xf32, #tpu.memory_space<vmem>>, vector<1x8x32xf32>
    %59 = vector.shape_cast %58 : vector<1x8x32xf32> to vector<8x32xf32>
    %60 = vector.shape_cast %57 : vector<8x32xf32> to vector<1x8x32xf32>
    tpu.vector_store %arg18[%c1_28, %c0_29, %c0_30], %60 {strides = array<i32>} : memref<10x8x32xf32, #tpu.memory_space<vmem>>, vector<1x8x32xf32>,
    %c2 = arith.constant 2 : index
    %c0_31 = arith.constant 0 : index
    %c0_32 = arith.constant 0 : index
    %61 = vector.load %arg17[%c2, %c0_31, %c0_32] : memref<10x8x128xf32, #tpu.memory_space<vmem>>, vector<1x8x128xf32>
    %62 = vector.shape_cast %61 : vector<1x8x128xf32> to vector<8x128xf32>
    %63 = arith.truncf %57 : vector<8x32xf32> to vector<8x32xbf16>
    %cst_33 = arith.constant dense<0.000000e+00> : vector<8x128xf32>
    %64 = tpu.matmul %63, %8, %cst_33 {dimension_numbers = #tpu.dot_dimension_numbers<[1], [0], [0], [1], [0, 0, 1, 1], [], []>} : vector<8x32xbf16>, vector<32x128xbf16>, vector<8x128xf32> -> vector<8x128xf32>
    %65 = arith.addf %62, %64 : vector<8x128xf32>
    %66 = vector.extract_strided_slice %65 {offsets = [0, 0], sizes = [8, 96], strides = [1, 1]} : vector<8x128xf32> to vector<8x96xf32>
    %67 = arith.negf %66 : vector<8x96xf32>
    %68 = math.exp %67 : vector<8x96xf32>
    %cst_34 = arith.constant 1.000000e+00 : f32
    %69 = vector.broadcast %cst_34 : f32 to vector<8x96xf32>
    %70 = arith.addf %69, %68 : vector<8x96xf32>
    %71 = arith.divf %69, %70 : vector<8x96xf32>
    %72 = vector.extract_strided_slice %71 {offsets = [0, 0], sizes = [8, 32], strides = [1, 1]} : vector<8x96xf32> to vector<8x32xf32>
    %73 = vector.extract_strided_slice %71 {offsets = [0, 32], sizes = [8, 32], strides = [1, 1]} : vector<8x96xf32> to vector<8x32xf32>
    %74 = vector.extract_strided_slice %71 {offsets = [0, 64], sizes = [8, 32], strides = [1, 1]} : vector<8x96xf32> to vector<8x32xf32>
    %75 = vector.extract_strided_slice %65 {offsets = [0, 96], sizes = [8, 32], strides = [1, 1]} : vector<8x128xf32> to vector<8x32xf32>
    %76 = math.tanh %75 : vector<8x32xf32>
    %77 = arith.mulf %73, %55 : vector<8x32xf32>
    %78 = arith.mulf %72, %76 : vector<8x32xf32>
    %79 = arith.addf %77, %78 : vector<8x32xf32>
    %80 = math.tanh %79 : vector<8x32xf32>
    %81 = arith.mulf %74, %80 : vector<8x32xf32>
    %c2_35 = arith.constant 2 : index
    %c0_36 = arith.constant 0 : index
    %c0_37 = arith.constant 0 : index
    %82 = vector.load %arg18[%c2_35, %c0_36, %c0_37] : memref<10x8x32xf32, #tpu.memory_space<vmem>>, vector<1x8x32xf32>
    %83 = vector.shape_cast %82 : vector<1x8x32xf32> to vector<8x32xf32>
    %84 = vector.shape_cast %81 : vector<8x32xf32> to vector<1x8x32xf32>
    tpu.vector_store %arg18[%c2_35, %c0_36, %c0_37], %84 {strides = array<i32>} : memref<10x8x32xf32, #tpu.memory_space<vmem>>, vector<1x8x32xf32>,
    %c3 = arith.constant 3 : index
    %c0_38 = arith.constant 0 : index
    %c0_39 = arith.constant 0 : index
    %85 = vector.load %arg17[%c3, %c0_38, %c0_39] : memref<10x8x128xf32, #tpu.memory_space<vmem>>, vector<1x8x128xf32>
    %86 = vector.shape_cast %85 : vector<1x8x128xf32> to vector<8x128xf32>
    %87 = arith.truncf %81 : vector<8x32xf32> to vector<8x32xbf16>
    %cst_40 = arith.constant dense<0.000000e+00> : vector<8x128xf32>
    %88 = tpu.matmul %87, %8, %cst_40 {dimension_numbers = #tpu.dot_dimension_numbers<[1], [0], [0], [1], [0, 0, 1, 1], [], []>} : vector<8x32xbf16>, vector<32x128xbf16>, vector<8x128xf32> -> vector<8x128xf32>
    %89 = arith.addf %86, %88 : vector<8x128xf32>
    %90 = vector.extract_strided_slice %89 {offsets = [0, 0], sizes = [8, 96], strides = [1, 1]} : vector<8x128xf32> to vector<8x96xf32>
    %91 = arith.negf %90 : vector<8x96xf32>
    %92 = math.exp %91 : vector<8x96xf32>
    %cst_41 = arith.constant 1.000000e+00 : f32
    %93 = vector.broadcast %cst_41 : f32 to vector<8x96xf32>
    %94 = arith.addf %93, %92 : vector<8x96xf32>
    %95 = arith.divf %93, %94 : vector<8x96xf32>
    %96 = vector.extract_strided_slice %95 {offsets = [0, 0], sizes = [8, 32], strides = [1, 1]} : vector<8x96xf32> to vector<8x32xf32>
    %97 = vector.extract_strided_slice %95 {offsets = [0, 32], sizes = [8, 32], strides = [1, 1]} : vector<8x96xf32> to vector<8x32xf32>
    %98 = vector.extract_strided_slice %95 {offsets = [0, 64], sizes = [8, 32], strides = [1, 1]} : vector<8x96xf32> to vector<8x32xf32>
    %99 = vector.extract_strided_slice %89 {offsets = [0, 96], sizes = [8, 32], strides = [1, 1]} : vector<8x128xf32> to vector<8x32xf32>
    %100 = math.tanh %99 : vector<8x32xf32>
    %101 = arith.mulf %97, %79 : vector<8x32xf32>
    %102 = arith.mulf %96, %100 : vector<8x32xf32>
    %103 = arith.addf %101, %102 : vector<8x32xf32>
    %104 = math.tanh %103 : vector<8x32xf32>
    %105 = arith.mulf %98, %104 : vector<8x32xf32>
    %c3_42 = arith.constant 3 : index
    %c0_43 = arith.constant 0 : index
    %c0_44 = arith.constant 0 : index
    %106 = vector.load %arg18[%c3_42, %c0_43, %c0_44] : memref<10x8x32xf32, #tpu.memory_space<vmem>>, vector<1x8x32xf32>
    %107 = vector.shape_cast %106 : vector<1x8x32xf32> to vector<8x32xf32>
    %108 = vector.shape_cast %105 : vector<8x32xf32> to vector<1x8x32xf32>
    tpu.vector_store %arg18[%c3_42, %c0_43, %c0_44], %108 {strides = array<i32>} : memref<10x8x32xf32, #tpu.memory_space<vmem>>, vector<1x8x32xf32>,
    %c4 = arith.constant 4 : index
    %c0_45 = arith.constant 0 : index
    %c0_46 = arith.constant 0 : index
    %109 = vector.load %arg17[%c4, %c0_45, %c0_46] : memref<10x8x128xf32, #tpu.memory_space<vmem>>, vector<1x8x128xf32>
    %110 = vector.shape_cast %109 : vector<1x8x128xf32> to vector<8x128xf32>
    %111 = arith.truncf %105 : vector<8x32xf32> to vector<8x32xbf16>
    %cst_47 = arith.constant dense<0.000000e+00> : vector<8x128xf32>
    %112 = tpu.matmul %111, %8, %cst_47 {dimension_numbers = #tpu.dot_dimension_numbers<[1], [0], [0], [1], [0, 0, 1, 1], [], []>} : vector<8x32xbf16>, vector<32x128xbf16>, vector<8x128xf32> -> vector<8x128xf32>
    %113 = arith.addf %110, %112 : vector<8x128xf32>
    %114 = vector.extract_strided_slice %113 {offsets = [0, 0], sizes = [8, 96], strides = [1, 1]} : vector<8x128xf32> to vector<8x96xf32>
    %115 = arith.negf %114 : vector<8x96xf32>
    %116 = math.exp %115 : vector<8x96xf32>
    %cst_48 = arith.constant 1.000000e+00 : f32
    %117 = vector.broadcast %cst_48 : f32 to vector<8x96xf32>
    %118 = arith.addf %117, %116 : vector<8x96xf32>
    %119 = arith.divf %117, %118 : vector<8x96xf32>
    %120 = vector.extract_strided_slice %119 {offsets = [0, 0], sizes = [8, 32], strides = [1, 1]} : vector<8x96xf32> to vector<8x32xf32>
    %121 = vector.extract_strided_slice %119 {offsets = [0, 32], sizes = [8, 32], strides = [1, 1]} : vector<8x96xf32> to vector<8x32xf32>
    %122 = vector.extract_strided_slice %119 {offsets = [0, 64], sizes = [8, 32], strides = [1, 1]} : vector<8x96xf32> to vector<8x32xf32>
    %123 = vector.extract_strided_slice %113 {offsets = [0, 96], sizes = [8, 32], strides = [1, 1]} : vector<8x128xf32> to vector<8x32xf32>
    %124 = math.tanh %123 : vector<8x32xf32>
    %125 = arith.mulf %121, %103 : vector<8x32xf32>
    %126 = arith.mulf %120, %124 : vector<8x32xf32>
    %127 = arith.addf %125, %126 : vector<8x32xf32>
    %128 = math.tanh %127 : vector<8x32xf32>
    %129 = arith.mulf %122, %128 : vector<8x32xf32>
    %c4_49 = arith.constant 4 : index
    %c0_50 = arith.constant 0 : index
    %c0_51 = arith.constant 0 : index
    %130 = vector.load %arg18[%c4_49, %c0_50, %c0_51] : memref<10x8x32xf32, #tpu.memory_space<vmem>>, vector<1x8x32xf32>
    %131 = vector.shape_cast %130 : vector<1x8x32xf32> to vector<8x32xf32>
    %132 = vector.shape_cast %129 : vector<8x32xf32> to vector<1x8x32xf32>
    tpu.vector_store %arg18[%c4_49, %c0_50, %c0_51], %132 {strides = array<i32>} : memref<10x8x32xf32, #tpu.memory_space<vmem>>, vector<1x8x32xf32>,
    %c5 = arith.constant 5 : index
    %c0_52 = arith.constant 0 : index
    %c0_53 = arith.constant 0 : index
    %133 = vector.load %arg17[%c5, %c0_52, %c0_53] : memref<10x8x128xf32, #tpu.memory_space<vmem>>, vector<1x8x128xf32>
    %134 = vector.shape_cast %133 : vector<1x8x128xf32> to vector<8x128xf32>
    %135 = arith.truncf %129 : vector<8x32xf32> to vector<8x32xbf16>
    %cst_54 = arith.constant dense<0.000000e+00> : vector<8x128xf32>
    %136 = tpu.matmul %135, %8, %cst_54 {dimension_numbers = #tpu.dot_dimension_numbers<[1], [0], [0], [1], [0, 0, 1, 1], [], []>} : vector<8x32xbf16>, vector<32x128xbf16>, vector<8x128xf32> -> vector<8x128xf32>
    %137 = arith.addf %134, %136 : vector<8x128xf32>
    %138 = vector.extract_strided_slice %137 {offsets = [0, 0], sizes = [8, 96], strides = [1, 1]} : vector<8x128xf32> to vector<8x96xf32>
    %139 = arith.negf %138 : vector<8x96xf32>
    %140 = math.exp %139 : vector<8x96xf32>
    %cst_55 = arith.constant 1.000000e+00 : f32
    %141 = vector.broadcast %cst_55 : f32 to vector<8x96xf32>
    %142 = arith.addf %141, %140 : vector<8x96xf32>
    %143 = arith.divf %141, %142 : vector<8x96xf32>
    %144 = vector.extract_strided_slice %143 {offsets = [0, 0], sizes = [8, 32], strides = [1, 1]} : vector<8x96xf32> to vector<8x32xf32>
    %145 = vector.extract_strided_slice %143 {offsets = [0, 32], sizes = [8, 32], strides = [1, 1]} : vector<8x96xf32> to vector<8x32xf32>
    %146 = vector.extract_strided_slice %143 {offsets = [0, 64], sizes = [8, 32], strides = [1, 1]} : vector<8x96xf32> to vector<8x32xf32>
    %147 = vector.extract_strided_slice %137 {offsets = [0, 96], sizes = [8, 32], strides = [1, 1]} : vector<8x128xf32> to vector<8x32xf32>
    %148 = math.tanh %147 : vector<8x32xf32>
    %149 = arith.mulf %145, %127 : vector<8x32xf32>
    %150 = arith.mulf %144, %148 : vector<8x32xf32>
    %151 = arith.addf %149, %150 : vector<8x32xf32>
    %152 = math.tanh %151 : vector<8x32xf32>
    %153 = arith.mulf %146, %152 : vector<8x32xf32>
    %c5_56 = arith.constant 5 : index
    %c0_57 = arith.constant 0 : index
    %c0_58 = arith.constant 0 : index
    %154 = vector.load %arg18[%c5_56, %c0_57, %c0_58] : memref<10x8x32xf32, #tpu.memory_space<vmem>>, vector<1x8x32xf32>
    %155 = vector.shape_cast %154 : vector<1x8x32xf32> to vector<8x32xf32>
    %156 = vector.shape_cast %153 : vector<8x32xf32> to vector<1x8x32xf32>
    tpu.vector_store %arg18[%c5_56, %c0_57, %c0_58], %156 {strides = array<i32>} : memref<10x8x32xf32, #tpu.memory_space<vmem>>, vector<1x8x32xf32>,
    %c6 = arith.constant 6 : index
    %c0_59 = arith.constant 0 : index
    %c0_60 = arith.constant 0 : index
    %157 = vector.load %arg17[%c6, %c0_59, %c0_60] : memref<10x8x128xf32, #tpu.memory_space<vmem>>, vector<1x8x128xf32>
    %158 = vector.shape_cast %157 : vector<1x8x128xf32> to vector<8x128xf32>
    %159 = arith.truncf %153 : vector<8x32xf32> to vector<8x32xbf16>
    %cst_61 = arith.constant dense<0.000000e+00> : vector<8x128xf32>
    %160 = tpu.matmul %159, %8, %cst_61 {dimension_numbers = #tpu.dot_dimension_numbers<[1], [0], [0], [1], [0, 0, 1, 1], [], []>} : vector<8x32xbf16>, vector<32x128xbf16>, vector<8x128xf32> -> vector<8x128xf32>
    %161 = arith.addf %158, %160 : vector<8x128xf32>
    %162 = vector.extract_strided_slice %161 {offsets = [0, 0], sizes = [8, 96], strides = [1, 1]} : vector<8x128xf32> to vector<8x96xf32>
    %163 = arith.negf %162 : vector<8x96xf32>
    %164 = math.exp %163 : vector<8x96xf32>
    %cst_62 = arith.constant 1.000000e+00 : f32
    %165 = vector.broadcast %cst_62 : f32 to vector<8x96xf32>
    %166 = arith.addf %165, %164 : vector<8x96xf32>
    %167 = arith.divf %165, %166 : vector<8x96xf32>
    %168 = vector.extract_strided_slice %167 {offsets = [0, 0], sizes = [8, 32], strides = [1, 1]} : vector<8x96xf32> to vector<8x32xf32>
    %169 = vector.extract_strided_slice %167 {offsets = [0, 32], sizes = [8, 32], strides = [1, 1]} : vector<8x96xf32> to vector<8x32xf32>
    %170 = vector.extract_strided_slice %167 {offsets = [0, 64], sizes = [8, 32], strides = [1, 1]} : vector<8x96xf32> to vector<8x32xf32>
    %171 = vector.extract_strided_slice %161 {offsets = [0, 96], sizes = [8, 32], strides = [1, 1]} : vector<8x128xf32> to vector<8x32xf32>
    %172 = math.tanh %171 : vector<8x32xf32>
    %173 = arith.mulf %169, %151 : vector<8x32xf32>
    %174 = arith.mulf %168, %172 : vector<8x32xf32>
    %175 = arith.addf %173, %174 : vector<8x32xf32>
    %176 = math.tanh %175 : vector<8x32xf32>
    %177 = arith.mulf %170, %176 : vector<8x32xf32>
    %c6_63 = arith.constant 6 : index
    %c0_64 = arith.constant 0 : index
    %c0_65 = arith.constant 0 : index
    %178 = vector.load %arg18[%c6_63, %c0_64, %c0_65] : memref<10x8x32xf32, #tpu.memory_space<vmem>>, vector<1x8x32xf32>
    %179 = vector.shape_cast %178 : vector<1x8x32xf32> to vector<8x32xf32>
    %180 = vector.shape_cast %177 : vector<8x32xf32> to vector<1x8x32xf32>
    tpu.vector_store %arg18[%c6_63, %c0_64, %c0_65], %180 {strides = array<i32>} : memref<10x8x32xf32, #tpu.memory_space<vmem>>, vector<1x8x32xf32>,
    %c7 = arith.constant 7 : index
    %c0_66 = arith.constant 0 : index
    %c0_67 = arith.constant 0 : index
    %181 = vector.load %arg17[%c7, %c0_66, %c0_67] : memref<10x8x128xf32, #tpu.memory_space<vmem>>, vector<1x8x128xf32>
    %182 = vector.shape_cast %181 : vector<1x8x128xf32> to vector<8x128xf32>
    %183 = arith.truncf %177 : vector<8x32xf32> to vector<8x32xbf16>
    %cst_68 = arith.constant dense<0.000000e+00> : vector<8x128xf32>
    %184 = tpu.matmul %183, %8, %cst_68 {dimension_numbers = #tpu.dot_dimension_numbers<[1], [0], [0], [1], [0, 0, 1, 1], [], []>} : vector<8x32xbf16>, vector<32x128xbf16>, vector<8x128xf32> -> vector<8x128xf32>
    %185 = arith.addf %182, %184 : vector<8x128xf32>
    %186 = vector.extract_strided_slice %185 {offsets = [0, 0], sizes = [8, 96], strides = [1, 1]} : vector<8x128xf32> to vector<8x96xf32>
    %187 = arith.negf %186 : vector<8x96xf32>
    %188 = math.exp %187 : vector<8x96xf32>
    %cst_69 = arith.constant 1.000000e+00 : f32
    %189 = vector.broadcast %cst_69 : f32 to vector<8x96xf32>
    %190 = arith.addf %189, %188 : vector<8x96xf32>
    %191 = arith.divf %189, %190 : vector<8x96xf32>
    %192 = vector.extract_strided_slice %191 {offsets = [0, 0], sizes = [8, 32], strides = [1, 1]} : vector<8x96xf32> to vector<8x32xf32>
    %193 = vector.extract_strided_slice %191 {offsets = [0, 32], sizes = [8, 32], strides = [1, 1]} : vector<8x96xf32> to vector<8x32xf32>
    %194 = vector.extract_strided_slice %191 {offsets = [0, 64], sizes = [8, 32], strides = [1, 1]} : vector<8x96xf32> to vector<8x32xf32>
    %195 = vector.extract_strided_slice %185 {offsets = [0, 96], sizes = [8, 32], strides = [1, 1]} : vector<8x128xf32> to vector<8x32xf32>
    %196 = math.tanh %195 : vector<8x32xf32>
    %197 = arith.mulf %193, %175 : vector<8x32xf32>
    %198 = arith.mulf %192, %196 : vector<8x32xf32>
    %199 = arith.addf %197, %198 : vector<8x32xf32>
    %200 = math.tanh %199 : vector<8x32xf32>
    %201 = arith.mulf %194, %200 : vector<8x32xf32>
    %c7_70 = arith.constant 7 : index
    %c0_71 = arith.constant 0 : index
    %c0_72 = arith.constant 0 : index
    %202 = vector.load %arg18[%c7_70, %c0_71, %c0_72] : memref<10x8x32xf32, #tpu.memory_space<vmem>>, vector<1x8x32xf32>
    %203 = vector.shape_cast %202 : vector<1x8x32xf32> to vector<8x32xf32>
    %204 = vector.shape_cast %201 : vector<8x32xf32> to vector<1x8x32xf32>
    tpu.vector_store %arg18[%c7_70, %c0_71, %c0_72], %204 {strides = array<i32>} : memref<10x8x32xf32, #tpu.memory_space<vmem>>, vector<1x8x32xf32>,
    %c8 = arith.constant 8 : index
    %c0_73 = arith.constant 0 : index
    %c0_74 = arith.constant 0 : index
    %205 = vector.load %arg17[%c8, %c0_73, %c0_74] : memref<10x8x128xf32, #tpu.memory_space<vmem>>, vector<1x8x128xf32>
    %206 = vector.shape_cast %205 : vector<1x8x128xf32> to vector<8x128xf32>
    %207 = arith.truncf %201 : vector<8x32xf32> to vector<8x32xbf16>
    %cst_75 = arith.constant dense<0.000000e+00> : vector<8x128xf32>
    %208 = tpu.matmul %207, %8, %cst_75 {dimension_numbers = #tpu.dot_dimension_numbers<[1], [0], [0], [1], [0, 0, 1, 1], [], []>} : vector<8x32xbf16>, vector<32x128xbf16>, vector<8x128xf32> -> vector<8x128xf32>
    %209 = arith.addf %206, %208 : vector<8x128xf32>
    %210 = vector.extract_strided_slice %209 {offsets = [0, 0], sizes = [8, 96], strides = [1, 1]} : vector<8x128xf32> to vector<8x96xf32>
    %211 = arith.negf %210 : vector<8x96xf32>
    %212 = math.exp %211 : vector<8x96xf32>
    %cst_76 = arith.constant 1.000000e+00 : f32
    %213 = vector.broadcast %cst_76 : f32 to vector<8x96xf32>
    %214 = arith.addf %213, %212 : vector<8x96xf32>
    %215 = arith.divf %213, %214 : vector<8x96xf32>
    %216 = vector.extract_strided_slice %215 {offsets = [0, 0], sizes = [8, 32], strides = [1, 1]} : vector<8x96xf32> to vector<8x32xf32>
    %217 = vector.extract_strided_slice %215 {offsets = [0, 32], sizes = [8, 32], strides = [1, 1]} : vector<8x96xf32> to vector<8x32xf32>
    %218 = vector.extract_strided_slice %215 {offsets = [0, 64], sizes = [8, 32], strides = [1, 1]} : vector<8x96xf32> to vector<8x32xf32>
    %219 = vector.extract_strided_slice %209 {offsets = [0, 96], sizes = [8, 32], strides = [1, 1]} : vector<8x128xf32> to vector<8x32xf32>
    %220 = math.tanh %219 : vector<8x32xf32>
    %221 = arith.mulf %217, %199 : vector<8x32xf32>
    %222 = arith.mulf %216, %220 : vector<8x32xf32>
    %223 = arith.addf %221, %222 : vector<8x32xf32>
    %224 = math.tanh %223 : vector<8x32xf32>
    %225 = arith.mulf %218, %224 : vector<8x32xf32>
    %c8_77 = arith.constant 8 : index
    %c0_78 = arith.constant 0 : index
    %c0_79 = arith.constant 0 : index
    %226 = vector.load %arg18[%c8_77, %c0_78, %c0_79] : memref<10x8x32xf32, #tpu.memory_space<vmem>>, vector<1x8x32xf32>
    %227 = vector.shape_cast %226 : vector<1x8x32xf32> to vector<8x32xf32>
    %228 = vector.shape_cast %225 : vector<8x32xf32> to vector<1x8x32xf32>
    tpu.vector_store %arg18[%c8_77, %c0_78, %c0_79], %228 {strides = array<i32>} : memref<10x8x32xf32, #tpu.memory_space<vmem>>, vector<1x8x32xf32>,
    %c9 = arith.constant 9 : index
    %c0_80 = arith.constant 0 : index
    %c0_81 = arith.constant 0 : index
    %229 = vector.load %arg17[%c9, %c0_80, %c0_81] : memref<10x8x128xf32, #tpu.memory_space<vmem>>, vector<1x8x128xf32>
    %230 = vector.shape_cast %229 : vector<1x8x128xf32> to vector<8x128xf32>
    %231 = arith.truncf %225 : vector<8x32xf32> to vector<8x32xbf16>
    %cst_82 = arith.constant dense<0.000000e+00> : vector<8x128xf32>
    %232 = tpu.matmul %231, %8, %cst_82 {dimension_numbers = #tpu.dot_dimension_numbers<[1], [0], [0], [1], [0, 0, 1, 1], [], []>} : vector<8x32xbf16>, vector<32x128xbf16>, vector<8x128xf32> -> vector<8x128xf32>
    %233 = arith.addf %230, %232 : vector<8x128xf32>
    %234 = vector.extract_strided_slice %233 {offsets = [0, 0], sizes = [8, 96], strides = [1, 1]} : vector<8x128xf32> to vector<8x96xf32>
    %235 = arith.negf %234 : vector<8x96xf32>
    %236 = math.exp %235 : vector<8x96xf32>
    %cst_83 = arith.constant 1.000000e+00 : f32
    %237 = vector.broadcast %cst_83 : f32 to vector<8x96xf32>
    %238 = arith.addf %237, %236 : vector<8x96xf32>
    %239 = arith.divf %237, %238 : vector<8x96xf32>
    %240 = vector.extract_strided_slice %239 {offsets = [0, 0], sizes = [8, 32], strides = [1, 1]} : vector<8x96xf32> to vector<8x32xf32>
    %241 = vector.extract_strided_slice %239 {offsets = [0, 32], sizes = [8, 32], strides = [1, 1]} : vector<8x96xf32> to vector<8x32xf32>
    %242 = vector.extract_strided_slice %239 {offsets = [0, 64], sizes = [8, 32], strides = [1, 1]} : vector<8x96xf32> to vector<8x32xf32>
    %243 = vector.extract_strided_slice %233 {offsets = [0, 96], sizes = [8, 32], strides = [1, 1]} : vector<8x128xf32> to vector<8x32xf32>
    %244 = math.tanh %243 : vector<8x32xf32>
    %245 = arith.mulf %241, %223 : vector<8x32xf32>
    %246 = arith.mulf %240, %244 : vector<8x32xf32>
    %247 = arith.addf %245, %246 : vector<8x32xf32>
    %248 = math.tanh %247 : vector<8x32xf32>
    %249 = arith.mulf %242, %248 : vector<8x32xf32>
    %c9_84 = arith.constant 9 : index
    %c0_85 = arith.constant 0 : index
    %c0_86 = arith.constant 0 : index
    %250 = vector.load %arg18[%c9_84, %c0_85, %c0_86] : memref<10x8x32xf32, #tpu.memory_space<vmem>>, vector<1x8x32xf32>
    %251 = vector.shape_cast %250 : vector<1x8x32xf32> to vector<8x32xf32>
    %252 = vector.shape_cast %249 : vector<8x32xf32> to vector<1x8x32xf32>
    tpu.vector_store %arg18[%c9_84, %c0_85, %c0_86], %252 {strides = array<i32>} : memref<10x8x32xf32, #tpu.memory_space<vmem>>, vector<1x8x32xf32>,
    %c0_87 = arith.constant 0 : index
    %c0_88 = arith.constant 0 : index
    %c0_89 = arith.constant 0 : index
    %253 = vector.load %arg15[%c0_87, %c0_88, %c0_89] : memref<3x8x32xf32, #tpu.memory_space<vmem>>, vector<1x8x32xf32>
    %254 = vector.shape_cast %253 : vector<1x8x32xf32> to vector<8x32xf32>
    %255 = vector.shape_cast %249 : vector<8x32xf32> to vector<1x8x32xf32>
    tpu.vector_store %arg15[%c0_87, %c0_88, %c0_89], %255 {strides = array<i32>} : memref<3x8x32xf32, #tpu.memory_space<vmem>>, vector<1x8x32xf32>,
    %c0_90 = arith.constant 0 : index
    %c0_91 = arith.constant 0 : index
    %c0_92 = arith.constant 0 : index
    %256 = vector.load %arg16[%c0_90, %c0_91, %c0_92] : memref<3x8x32xf32, #tpu.memory_space<vmem>>, vector<1x8x32xf32>
    %257 = vector.shape_cast %256 : vector<1x8x32xf32> to vector<8x32xf32>
    %258 = vector.shape_cast %247 : vector<8x32xf32> to vector<1x8x32xf32>
    tpu.vector_store %arg16[%c0_90, %c0_91, %c0_92], %258 {strides = array<i32>} : memref<3x8x32xf32, #tpu.memory_space<vmem>>, vector<1x8x32xf32>,
    %c0_93 = arith.constant 0 : index
    %c0_94 = arith.constant 0 : index
    %c0_95 = arith.constant 0 : index
    %259 = vector.load %arg18[%c0_93, %c0_94, %c0_95] : memref<10x8x32xf32, #tpu.memory_space<vmem>>, vector<10x8x32xf32>
    %260 = vector.shape_cast %259 : vector<10x8x32xf32> to vector<80x32xf32>
    %261 = arith.truncf %260 : vector<80x32xf32> to vector<80x32xbf16>
    %c0_96 = arith.constant 0 : index
    %c0_97 = arith.constant 0 : index
    %262 = vector.load %arg4[%c0_96, %c0_97] : memref<32x128xbf16, #tpu.memory_space<vmem>>, vector<32x128xbf16>
    %cst_98 = arith.constant dense<0.000000e+00> : vector<80x128xf32>
    %263 = tpu.matmul %261, %262, %cst_98 {dimension_numbers = #tpu.dot_dimension_numbers<[1], [0], [0], [1], [0, 0, 1, 1], [], []>} : vector<80x32xbf16>, vector<32x128xbf16>, vector<80x128xf32> -> vector<80x128xf32>
    %c0_99 = arith.constant 0 : index
    %c0_100 = arith.constant 0 : index
    %264 = vector.load %arg6[%c0_99, %c0_100] : memref<1x128xf32, #tpu.memory_space<vmem>>, vector<1x128xf32>
    %265 = vector.broadcast %264 : vector<1x128xf32> to vector<80x128xf32>
    %266 = arith.addf %263, %265 : vector<80x128xf32>
    %267 = vector.shape_cast %266 : vector<80x128xf32> to vector<10x8x128xf32>
    %c0_101 = arith.constant 0 : index
    %c0_102 = arith.constant 0 : index
    %c0_103 = arith.constant 0 : index
    %268 = vector.load %arg17[%c0_101, %c0_102, %c0_103] : memref<10x8x128xf32, #tpu.memory_space<vmem>>, vector<10x8x128xf32>
    tpu.vector_store %arg17[%c0_101, %c0_102, %c0_103], %267 {strides = array<i32>} : memref<10x8x128xf32, #tpu.memory_space<vmem>>, vector<10x8x128xf32>,
    %c0_104 = arith.constant 0 : index
    %c0_105 = arith.constant 0 : index
    %269 = vector.load %arg5[%c0_104, %c0_105] : memref<32x128xbf16, #tpu.memory_space<vmem>>, vector<32x128xbf16>
    %c1_106 = arith.constant 1 : index
    %c0_107 = arith.constant 0 : index
    %c0_108 = arith.constant 0 : index
    %270 = vector.load %arg10[%c1_106, %c0_107, %c0_108] : memref<3x8x32xf32, #tpu.memory_space<vmem>>, vector<1x8x32xf32>
    %271 = vector.shape_cast %270 : vector<1x8x32xf32> to vector<8x32xf32>
    %c1_109 = arith.constant 1 : index
    %c0_110 = arith.constant 0 : index
    %c0_111 = arith.constant 0 : index
    %272 = vector.load %arg11[%c1_109, %c0_110, %c0_111] : memref<3x8x32xf32, #tpu.memory_space<vmem>>, vector<1x8x32xf32>
    %273 = vector.shape_cast %272 : vector<1x8x32xf32> to vector<8x32xf32>
    %c0_112 = arith.constant 0 : index
    %c0_113 = arith.constant 0 : index
    %c0_114 = arith.constant 0 : index
    %274 = vector.load %arg17[%c0_112, %c0_113, %c0_114] : memref<10x8x128xf32, #tpu.memory_space<vmem>>, vector<1x8x128xf32>
    %275 = vector.shape_cast %274 : vector<1x8x128xf32> to vector<8x128xf32>
    %276 = arith.truncf %271 : vector<8x32xf32> to vector<8x32xbf16>
    %cst_115 = arith.constant dense<0.000000e+00> : vector<8x128xf32>
    %277 = tpu.matmul %276, %269, %cst_115 {dimension_numbers = #tpu.dot_dimension_numbers<[1], [0], [0], [1], [0, 0, 1, 1], [], []>} : vector<8x32xbf16>, vector<32x128xbf16>, vector<8x128xf32> -> vector<8x128xf32>
    %278 = arith.addf %275, %277 : vector<8x128xf32>
    %279 = vector.extract_strided_slice %278 {offsets = [0, 0], sizes = [8, 96], strides = [1, 1]} : vector<8x128xf32> to vector<8x96xf32>
    %280 = arith.negf %279 : vector<8x96xf32>
    %281 = math.exp %280 : vector<8x96xf32>
    %cst_116 = arith.constant 1.000000e+00 : f32
    %282 = vector.broadcast %cst_116 : f32 to vector<8x96xf32>
    %283 = arith.addf %282, %281 : vector<8x96xf32>
    %284 = arith.divf %282, %283 : vector<8x96xf32>
    %285 = vector.extract_strided_slice %284 {offsets = [0, 0], sizes = [8, 32], strides = [1, 1]} : vector<8x96xf32> to vector<8x32xf32>
    %286 = vector.extract_strided_slice %284 {offsets = [0, 32], sizes = [8, 32], strides = [1, 1]} : vector<8x96xf32> to vector<8x32xf32>
    %287 = vector.extract_strided_slice %284 {offsets = [0, 64], sizes = [8, 32], strides = [1, 1]} : vector<8x96xf32> to vector<8x32xf32>
    %288 = vector.extract_strided_slice %278 {offsets = [0, 96], sizes = [8, 32], strides = [1, 1]} : vector<8x128xf32> to vector<8x32xf32>
    %289 = math.tanh %288 : vector<8x32xf32>
    %290 = arith.mulf %286, %273 : vector<8x32xf32>
    %291 = arith.mulf %285, %289 : vector<8x32xf32>
    %292 = arith.addf %290, %291 : vector<8x32xf32>
    %293 = math.tanh %292 : vector<8x32xf32>
    %294 = arith.mulf %287, %293 : vector<8x32xf32>
    %c0_117 = arith.constant 0 : index
    %c0_118 = arith.constant 0 : index
    %c0_119 = arith.constant 0 : index
    %295 = vector.load %arg18[%c0_117, %c0_118, %c0_119] : memref<10x8x32xf32, #tpu.memory_space<vmem>>, vector<1x8x32xf32>
    %296 = vector.shape_cast %295 : vector<1x8x32xf32> to vector<8x32xf32>
    %297 = vector.shape_cast %294 : vector<8x32xf32> to vector<1x8x32xf32>
    tpu.vector_store %arg18[%c0_117, %c0_118, %c0_119], %297 {strides = array<i32>} : memref<10x8x32xf32, #tpu.memory_space<vmem>>, vector<1x8x32xf32>,
    %c1_120 = arith.constant 1 : index
    %c0_121 = arith.constant 0 : index
    %c0_122 = arith.constant 0 : index
    %298 = vector.load %arg17[%c1_120, %c0_121, %c0_122] : memref<10x8x128xf32, #tpu.memory_space<vmem>>, vector<1x8x128xf32>
    %299 = vector.shape_cast %298 : vector<1x8x128xf32> to vector<8x128xf32>
    %300 = arith.truncf %294 : vector<8x32xf32> to vector<8x32xbf16>
    %cst_123 = arith.constant dense<0.000000e+00> : vector<8x128xf32>
    %301 = tpu.matmul %300, %269, %cst_123 {dimension_numbers = #tpu.dot_dimension_numbers<[1], [0], [0], [1], [0, 0, 1, 1], [], []>} : vector<8x32xbf16>, vector<32x128xbf16>, vector<8x128xf32> -> vector<8x128xf32>
    %302 = arith.addf %299, %301 : vector<8x128xf32>
    %303 = vector.extract_strided_slice %302 {offsets = [0, 0], sizes = [8, 96], strides = [1, 1]} : vector<8x128xf32> to vector<8x96xf32>
    %304 = arith.negf %303 : vector<8x96xf32>
    %305 = math.exp %304 : vector<8x96xf32>
    %cst_124 = arith.constant 1.000000e+00 : f32
    %306 = vector.broadcast %cst_124 : f32 to vector<8x96xf32>
    %307 = arith.addf %306, %305 : vector<8x96xf32>
    %308 = arith.divf %306, %307 : vector<8x96xf32>
    %309 = vector.extract_strided_slice %308 {offsets = [0, 0], sizes = [8, 32], strides = [1, 1]} : vector<8x96xf32> to vector<8x32xf32>
    %310 = vector.extract_strided_slice %308 {offsets = [0, 32], sizes = [8, 32], strides = [1, 1]} : vector<8x96xf32> to vector<8x32xf32>
    %311 = vector.extract_strided_slice %308 {offsets = [0, 64], sizes = [8, 32], strides = [1, 1]} : vector<8x96xf32> to vector<8x32xf32>
    %312 = vector.extract_strided_slice %302 {offsets = [0, 96], sizes = [8, 32], strides = [1, 1]} : vector<8x128xf32> to vector<8x32xf32>
    %313 = math.tanh %312 : vector<8x32xf32>
    %314 = arith.mulf %310, %292 : vector<8x32xf32>
    %315 = arith.mulf %309, %313 : vector<8x32xf32>
    %316 = arith.addf %314, %315 : vector<8x32xf32>
    %317 = math.tanh %316 : vector<8x32xf32>
    %318 = arith.mulf %311, %317 : vector<8x32xf32>
    %c1_125 = arith.constant 1 : index
    %c0_126 = arith.constant 0 : index
    %c0_127 = arith.constant 0 : index
    %319 = vector.load %arg18[%c1_125, %c0_126, %c0_127] : memref<10x8x32xf32, #tpu.memory_space<vmem>>, vector<1x8x32xf32>
    %320 = vector.shape_cast %319 : vector<1x8x32xf32> to vector<8x32xf32>
    %321 = vector.shape_cast %318 : vector<8x32xf32> to vector<1x8x32xf32>
    tpu.vector_store %arg18[%c1_125, %c0_126, %c0_127], %321 {strides = array<i32>} : memref<10x8x32xf32, #tpu.memory_space<vmem>>, vector<1x8x32xf32>,
    %c2_128 = arith.constant 2 : index
    %c0_129 = arith.constant 0 : index
    %c0_130 = arith.constant 0 : index
    %322 = vector.load %arg17[%c2_128, %c0_129, %c0_130] : memref<10x8x128xf32, #tpu.memory_space<vmem>>, vector<1x8x128xf32>
    %323 = vector.shape_cast %322 : vector<1x8x128xf32> to vector<8x128xf32>
    %324 = arith.truncf %318 : vector<8x32xf32> to vector<8x32xbf16>
    %cst_131 = arith.constant dense<0.000000e+00> : vector<8x128xf32>
    %325 = tpu.matmul %324, %269, %cst_131 {dimension_numbers = #tpu.dot_dimension_numbers<[1], [0], [0], [1], [0, 0, 1, 1], [], []>} : vector<8x32xbf16>, vector<32x128xbf16>, vector<8x128xf32> -> vector<8x128xf32>
    %326 = arith.addf %323, %325 : vector<8x128xf32>
    %327 = vector.extract_strided_slice %326 {offsets = [0, 0], sizes = [8, 96], strides = [1, 1]} : vector<8x128xf32> to vector<8x96xf32>
    %328 = arith.negf %327 : vector<8x96xf32>
    %329 = math.exp %328 : vector<8x96xf32>
    %cst_132 = arith.constant 1.000000e+00 : f32
    %330 = vector.broadcast %cst_132 : f32 to vector<8x96xf32>
    %331 = arith.addf %330, %329 : vector<8x96xf32>
    %332 = arith.divf %330, %331 : vector<8x96xf32>
    %333 = vector.extract_strided_slice %332 {offsets = [0, 0], sizes = [8, 32], strides = [1, 1]} : vector<8x96xf32> to vector<8x32xf32>
    %334 = vector.extract_strided_slice %332 {offsets = [0, 32], sizes = [8, 32], strides = [1, 1]} : vector<8x96xf32> to vector<8x32xf32>
    %335 = vector.extract_strided_slice %332 {offsets = [0, 64], sizes = [8, 32], strides = [1, 1]} : vector<8x96xf32> to vector<8x32xf32>
    %336 = vector.extract_strided_slice %326 {offsets = [0, 96], sizes = [8, 32], strides = [1, 1]} : vector<8x128xf32> to vector<8x32xf32>
    %337 = math.tanh %336 : vector<8x32xf32>
    %338 = arith.mulf %334, %316 : vector<8x32xf32>
    %339 = arith.mulf %333, %337 : vector<8x32xf32>
    %340 = arith.addf %338, %339 : vector<8x32xf32>
    %341 = math.tanh %340 : vector<8x32xf32>
    %342 = arith.mulf %335, %341 : vector<8x32xf32>
    %c2_133 = arith.constant 2 : index
    %c0_134 = arith.constant 0 : index
    %c0_135 = arith.constant 0 : index
    %343 = vector.load %arg18[%c2_133, %c0_134, %c0_135] : memref<10x8x32xf32, #tpu.memory_space<vmem>>, vector<1x8x32xf32>
    %344 = vector.shape_cast %343 : vector<1x8x32xf32> to vector<8x32xf32>
    %345 = vector.shape_cast %342 : vector<8x32xf32> to vector<1x8x32xf32>
    tpu.vector_store %arg18[%c2_133, %c0_134, %c0_135], %345 {strides = array<i32>} : memref<10x8x32xf32, #tpu.memory_space<vmem>>, vector<1x8x32xf32>,
    %c3_136 = arith.constant 3 : index
    %c0_137 = arith.constant 0 : index
    %c0_138 = arith.constant 0 : index
    %346 = vector.load %arg17[%c3_136, %c0_137, %c0_138] : memref<10x8x128xf32, #tpu.memory_space<vmem>>, vector<1x8x128xf32>
    %347 = vector.shape_cast %346 : vector<1x8x128xf32> to vector<8x128xf32>
    %348 = arith.truncf %342 : vector<8x32xf32> to vector<8x32xbf16>
    %cst_139 = arith.constant dense<0.000000e+00> : vector<8x128xf32>
    %349 = tpu.matmul %348, %269, %cst_139 {dimension_numbers = #tpu.dot_dimension_numbers<[1], [0], [0], [1], [0, 0, 1, 1], [], []>} : vector<8x32xbf16>, vector<32x128xbf16>, vector<8x128xf32> -> vector<8x128xf32>
    %350 = arith.addf %347, %349 : vector<8x128xf32>
    %351 = vector.extract_strided_slice %350 {offsets = [0, 0], sizes = [8, 96], strides = [1, 1]} : vector<8x128xf32> to vector<8x96xf32>
    %352 = arith.negf %351 : vector<8x96xf32>
    %353 = math.exp %352 : vector<8x96xf32>
    %cst_140 = arith.constant 1.000000e+00 : f32
    %354 = vector.broadcast %cst_140 : f32 to vector<8x96xf32>
    %355 = arith.addf %354, %353 : vector<8x96xf32>
    %356 = arith.divf %354, %355 : vector<8x96xf32>
    %357 = vector.extract_strided_slice %356 {offsets = [0, 0], sizes = [8, 32], strides = [1, 1]} : vector<8x96xf32> to vector<8x32xf32>
    %358 = vector.extract_strided_slice %356 {offsets = [0, 32], sizes = [8, 32], strides = [1, 1]} : vector<8x96xf32> to vector<8x32xf32>
    %359 = vector.extract_strided_slice %356 {offsets = [0, 64], sizes = [8, 32], strides = [1, 1]} : vector<8x96xf32> to vector<8x32xf32>
    %360 = vector.extract_strided_slice %350 {offsets = [0, 96], sizes = [8, 32], strides = [1, 1]} : vector<8x128xf32> to vector<8x32xf32>
    %361 = math.tanh %360 : vector<8x32xf32>
    %362 = arith.mulf %358, %340 : vector<8x32xf32>
    %363 = arith.mulf %357, %361 : vector<8x32xf32>
    %364 = arith.addf %362, %363 : vector<8x32xf32>
    %365 = math.tanh %364 : vector<8x32xf32>
    %366 = arith.mulf %359, %365 : vector<8x32xf32>
    %c3_141 = arith.constant 3 : index
    %c0_142 = arith.constant 0 : index
    %c0_143 = arith.constant 0 : index
    %367 = vector.load %arg18[%c3_141, %c0_142, %c0_143] : memref<10x8x32xf32, #tpu.memory_space<vmem>>, vector<1x8x32xf32>
    %368 = vector.shape_cast %367 : vector<1x8x32xf32> to vector<8x32xf32>
    %369 = vector.shape_cast %366 : vector<8x32xf32> to vector<1x8x32xf32>
    tpu.vector_store %arg18[%c3_141, %c0_142, %c0_143], %369 {strides = array<i32>} : memref<10x8x32xf32, #tpu.memory_space<vmem>>, vector<1x8x32xf32>,
    %c4_144 = arith.constant 4 : index
    %c0_145 = arith.constant 0 : index
    %c0_146 = arith.constant 0 : index
    %370 = vector.load %arg17[%c4_144, %c0_145, %c0_146] : memref<10x8x128xf32, #tpu.memory_space<vmem>>, vector<1x8x128xf32>
    %371 = vector.shape_cast %370 : vector<1x8x128xf32> to vector<8x128xf32>
    %372 = arith.truncf %366 : vector<8x32xf32> to vector<8x32xbf16>
    %cst_147 = arith.constant dense<0.000000e+00> : vector<8x128xf32>
    %373 = tpu.matmul %372, %269, %cst_147 {dimension_numbers = #tpu.dot_dimension_numbers<[1], [0], [0], [1], [0, 0, 1, 1], [], []>} : vector<8x32xbf16>, vector<32x128xbf16>, vector<8x128xf32> -> vector<8x128xf32>
    %374 = arith.addf %371, %373 : vector<8x128xf32>
    %375 = vector.extract_strided_slice %374 {offsets = [0, 0], sizes = [8, 96], strides = [1, 1]} : vector<8x128xf32> to vector<8x96xf32>
    %376 = arith.negf %375 : vector<8x96xf32>
    %377 = math.exp %376 : vector<8x96xf32>
    %cst_148 = arith.constant 1.000000e+00 : f32
    %378 = vector.broadcast %cst_148 : f32 to vector<8x96xf32>
    %379 = arith.addf %378, %377 : vector<8x96xf32>
    %380 = arith.divf %378, %379 : vector<8x96xf32>
    %381 = vector.extract_strided_slice %380 {offsets = [0, 0], sizes = [8, 32], strides = [1, 1]} : vector<8x96xf32> to vector<8x32xf32>
    %382 = vector.extract_strided_slice %380 {offsets = [0, 32], sizes = [8, 32], strides = [1, 1]} : vector<8x96xf32> to vector<8x32xf32>
    %383 = vector.extract_strided_slice %380 {offsets = [0, 64], sizes = [8, 32], strides = [1, 1]} : vector<8x96xf32> to vector<8x32xf32>
    %384 = vector.extract_strided_slice %374 {offsets = [0, 96], sizes = [8, 32], strides = [1, 1]} : vector<8x128xf32> to vector<8x32xf32>
    %385 = math.tanh %384 : vector<8x32xf32>
    %386 = arith.mulf %382, %364 : vector<8x32xf32>
    %387 = arith.mulf %381, %385 : vector<8x32xf32>
    %388 = arith.addf %386, %387 : vector<8x32xf32>
    %389 = math.tanh %388 : vector<8x32xf32>
    %390 = arith.mulf %383, %389 : vector<8x32xf32>
    %c4_149 = arith.constant 4 : index
    %c0_150 = arith.constant 0 : index
    %c0_151 = arith.constant 0 : index
    %391 = vector.load %arg18[%c4_149, %c0_150, %c0_151] : memref<10x8x32xf32, #tpu.memory_space<vmem>>, vector<1x8x32xf32>
    %392 = vector.shape_cast %391 : vector<1x8x32xf32> to vector<8x32xf32>
    %393 = vector.shape_cast %390 : vector<8x32xf32> to vector<1x8x32xf32>
    tpu.vector_store %arg18[%c4_149, %c0_150, %c0_151], %393 {strides = array<i32>} : memref<10x8x32xf32, #tpu.memory_space<vmem>>, vector<1x8x32xf32>,
    %c5_152 = arith.constant 5 : index
    %c0_153 = arith.constant 0 : index
    %c0_154 = arith.constant 0 : index
    %394 = vector.load %arg17[%c5_152, %c0_153, %c0_154] : memref<10x8x128xf32, #tpu.memory_space<vmem>>, vector<1x8x128xf32>
    %395 = vector.shape_cast %394 : vector<1x8x128xf32> to vector<8x128xf32>
    %396 = arith.truncf %390 : vector<8x32xf32> to vector<8x32xbf16>
    %cst_155 = arith.constant dense<0.000000e+00> : vector<8x128xf32>
    %397 = tpu.matmul %396, %269, %cst_155 {dimension_numbers = #tpu.dot_dimension_numbers<[1], [0], [0], [1], [0, 0, 1, 1], [], []>} : vector<8x32xbf16>, vector<32x128xbf16>, vector<8x128xf32> -> vector<8x128xf32>
    %398 = arith.addf %395, %397 : vector<8x128xf32>
    %399 = vector.extract_strided_slice %398 {offsets = [0, 0], sizes = [8, 96], strides = [1, 1]} : vector<8x128xf32> to vector<8x96xf32>
    %400 = arith.negf %399 : vector<8x96xf32>
    %401 = math.exp %400 : vector<8x96xf32>
    %cst_156 = arith.constant 1.000000e+00 : f32
    %402 = vector.broadcast %cst_156 : f32 to vector<8x96xf32>
    %403 = arith.addf %402, %401 : vector<8x96xf32>
    %404 = arith.divf %402, %403 : vector<8x96xf32>
    %405 = vector.extract_strided_slice %404 {offsets = [0, 0], sizes = [8, 32], strides = [1, 1]} : vector<8x96xf32> to vector<8x32xf32>
    %406 = vector.extract_strided_slice %404 {offsets = [0, 32], sizes = [8, 32], strides = [1, 1]} : vector<8x96xf32> to vector<8x32xf32>
    %407 = vector.extract_strided_slice %404 {offsets = [0, 64], sizes = [8, 32], strides = [1, 1]} : vector<8x96xf32> to vector<8x32xf32>
    %408 = vector.extract_strided_slice %398 {offsets = [0, 96], sizes = [8, 32], strides = [1, 1]} : vector<8x128xf32> to vector<8x32xf32>
    %409 = math.tanh %408 : vector<8x32xf32>
    %410 = arith.mulf %406, %388 : vector<8x32xf32>
    %411 = arith.mulf %405, %409 : vector<8x32xf32>
    %412 = arith.addf %410, %411 : vector<8x32xf32>
    %413 = math.tanh %412 : vector<8x32xf32>
    %414 = arith.mulf %407, %413 : vector<8x32xf32>
    %c5_157 = arith.constant 5 : index
    %c0_158 = arith.constant 0 : index
    %c0_159 = arith.constant 0 : index
    %415 = vector.load %arg18[%c5_157, %c0_158, %c0_159] : memref<10x8x32xf32, #tpu.memory_space<vmem>>, vector<1x8x32xf32>
    %416 = vector.shape_cast %415 : vector<1x8x32xf32> to vector<8x32xf32>
    %417 = vector.shape_cast %414 : vector<8x32xf32> to vector<1x8x32xf32>
    tpu.vector_store %arg18[%c5_157, %c0_158, %c0_159], %417 {strides = array<i32>} : memref<10x8x32xf32, #tpu.memory_space<vmem>>, vector<1x8x32xf32>,
    %c6_160 = arith.constant 6 : index
    %c0_161 = arith.constant 0 : index
    %c0_162 = arith.constant 0 : index
    %418 = vector.load %arg17[%c6_160, %c0_161, %c0_162] : memref<10x8x128xf32, #tpu.memory_space<vmem>>, vector<1x8x128xf32>
    %419 = vector.shape_cast %418 : vector<1x8x128xf32> to vector<8x128xf32>
    %420 = arith.truncf %414 : vector<8x32xf32> to vector<8x32xbf16>
    %cst_163 = arith.constant dense<0.000000e+00> : vector<8x128xf32>
    %421 = tpu.matmul %420, %269, %cst_163 {dimension_numbers = #tpu.dot_dimension_numbers<[1], [0], [0], [1], [0, 0, 1, 1], [], []>} : vector<8x32xbf16>, vector<32x128xbf16>, vector<8x128xf32> -> vector<8x128xf32>
    %422 = arith.addf %419, %421 : vector<8x128xf32>
    %423 = vector.extract_strided_slice %422 {offsets = [0, 0], sizes = [8, 96], strides = [1, 1]} : vector<8x128xf32> to vector<8x96xf32>
    %424 = arith.negf %423 : vector<8x96xf32>
    %425 = math.exp %424 : vector<8x96xf32>
    %cst_164 = arith.constant 1.000000e+00 : f32
    %426 = vector.broadcast %cst_164 : f32 to vector<8x96xf32>
    %427 = arith.addf %426, %425 : vector<8x96xf32>
    %428 = arith.divf %426, %427 : vector<8x96xf32>
    %429 = vector.extract_strided_slice %428 {offsets = [0, 0], sizes = [8, 32], strides = [1, 1]} : vector<8x96xf32> to vector<8x32xf32>
    %430 = vector.extract_strided_slice %428 {offsets = [0, 32], sizes = [8, 32], strides = [1, 1]} : vector<8x96xf32> to vector<8x32xf32>
    %431 = vector.extract_strided_slice %428 {offsets = [0, 64], sizes = [8, 32], strides = [1, 1]} : vector<8x96xf32> to vector<8x32xf32>
    %432 = vector.extract_strided_slice %422 {offsets = [0, 96], sizes = [8, 32], strides = [1, 1]} : vector<8x128xf32> to vector<8x32xf32>
    %433 = math.tanh %432 : vector<8x32xf32>
    %434 = arith.mulf %430, %412 : vector<8x32xf32>
    %435 = arith.mulf %429, %433 : vector<8x32xf32>
    %436 = arith.addf %434, %435 : vector<8x32xf32>
    %437 = math.tanh %436 : vector<8x32xf32>
    %438 = arith.mulf %431, %437 : vector<8x32xf32>
    %c6_165 = arith.constant 6 : index
    %c0_166 = arith.constant 0 : index
    %c0_167 = arith.constant 0 : index
    %439 = vector.load %arg18[%c6_165, %c0_166, %c0_167] : memref<10x8x32xf32, #tpu.memory_space<vmem>>, vector<1x8x32xf32>
    %440 = vector.shape_cast %439 : vector<1x8x32xf32> to vector<8x32xf32>
    %441 = vector.shape_cast %438 : vector<8x32xf32> to vector<1x8x32xf32>
    tpu.vector_store %arg18[%c6_165, %c0_166, %c0_167], %441 {strides = array<i32>} : memref<10x8x32xf32, #tpu.memory_space<vmem>>, vector<1x8x32xf32>,
    %c7_168 = arith.constant 7 : index
    %c0_169 = arith.constant 0 : index
    %c0_170 = arith.constant 0 : index
    %442 = vector.load %arg17[%c7_168, %c0_169, %c0_170] : memref<10x8x128xf32, #tpu.memory_space<vmem>>, vector<1x8x128xf32>
    %443 = vector.shape_cast %442 : vector<1x8x128xf32> to vector<8x128xf32>
    %444 = arith.truncf %438 : vector<8x32xf32> to vector<8x32xbf16>
    %cst_171 = arith.constant dense<0.000000e+00> : vector<8x128xf32>
    %445 = tpu.matmul %444, %269, %cst_171 {dimension_numbers = #tpu.dot_dimension_numbers<[1], [0], [0], [1], [0, 0, 1, 1], [], []>} : vector<8x32xbf16>, vector<32x128xbf16>, vector<8x128xf32> -> vector<8x128xf32>
    %446 = arith.addf %443, %445 : vector<8x128xf32>
    %447 = vector.extract_strided_slice %446 {offsets = [0, 0], sizes = [8, 96], strides = [1, 1]} : vector<8x128xf32> to vector<8x96xf32>
    %448 = arith.negf %447 : vector<8x96xf32>
    %449 = math.exp %448 : vector<8x96xf32>
    %cst_172 = arith.constant 1.000000e+00 : f32
    %450 = vector.broadcast %cst_172 : f32 to vector<8x96xf32>
    %451 = arith.addf %450, %449 : vector<8x96xf32>
    %452 = arith.divf %450, %451 : vector<8x96xf32>
    %453 = vector.extract_strided_slice %452 {offsets = [0, 0], sizes = [8, 32], strides = [1, 1]} : vector<8x96xf32> to vector<8x32xf32>
    %454 = vector.extract_strided_slice %452 {offsets = [0, 32], sizes = [8, 32], strides = [1, 1]} : vector<8x96xf32> to vector<8x32xf32>
    %455 = vector.extract_strided_slice %452 {offsets = [0, 64], sizes = [8, 32], strides = [1, 1]} : vector<8x96xf32> to vector<8x32xf32>
    %456 = vector.extract_strided_slice %446 {offsets = [0, 96], sizes = [8, 32], strides = [1, 1]} : vector<8x128xf32> to vector<8x32xf32>
    %457 = math.tanh %456 : vector<8x32xf32>
    %458 = arith.mulf %454, %436 : vector<8x32xf32>
    %459 = arith.mulf %453, %457 : vector<8x32xf32>
    %460 = arith.addf %458, %459 : vector<8x32xf32>
    %461 = math.tanh %460 : vector<8x32xf32>
    %462 = arith.mulf %455, %461 : vector<8x32xf32>
    %c7_173 = arith.constant 7 : index
    %c0_174 = arith.constant 0 : index
    %c0_175 = arith.constant 0 : index
    %463 = vector.load %arg18[%c7_173, %c0_174, %c0_175] : memref<10x8x32xf32, #tpu.memory_space<vmem>>, vector<1x8x32xf32>
    %464 = vector.shape_cast %463 : vector<1x8x32xf32> to vector<8x32xf32>
    %465 = vector.shape_cast %462 : vector<8x32xf32> to vector<1x8x32xf32>
    tpu.vector_store %arg18[%c7_173, %c0_174, %c0_175], %465 {strides = array<i32>} : memref<10x8x32xf32, #tpu.memory_space<vmem>>, vector<1x8x32xf32>,
    %c8_176 = arith.constant 8 : index
    %c0_177 = arith.constant 0 : index
    %c0_178 = arith.constant 0 : index
    %466 = vector.load %arg17[%c8_176, %c0_177, %c0_178] : memref<10x8x128xf32, #tpu.memory_space<vmem>>, vector<1x8x128xf32>
    %467 = vector.shape_cast %466 : vector<1x8x128xf32> to vector<8x128xf32>
    %468 = arith.truncf %462 : vector<8x32xf32> to vector<8x32xbf16>
    %cst_179 = arith.constant dense<0.000000e+00> : vector<8x128xf32>
    %469 = tpu.matmul %468, %269, %cst_179 {dimension_numbers = #tpu.dot_dimension_numbers<[1], [0], [0], [1], [0, 0, 1, 1], [], []>} : vector<8x32xbf16>, vector<32x128xbf16>, vector<8x128xf32> -> vector<8x128xf32>
    %470 = arith.addf %467, %469 : vector<8x128xf32>
    %471 = vector.extract_strided_slice %470 {offsets = [0, 0], sizes = [8, 96], strides = [1, 1]} : vector<8x128xf32> to vector<8x96xf32>
    %472 = arith.negf %471 : vector<8x96xf32>
    %473 = math.exp %472 : vector<8x96xf32>
    %cst_180 = arith.constant 1.000000e+00 : f32
    %474 = vector.broadcast %cst_180 : f32 to vector<8x96xf32>
    %475 = arith.addf %474, %473 : vector<8x96xf32>
    %476 = arith.divf %474, %475 : vector<8x96xf32>
    %477 = vector.extract_strided_slice %476 {offsets = [0, 0], sizes = [8, 32], strides = [1, 1]} : vector<8x96xf32> to vector<8x32xf32>
    %478 = vector.extract_strided_slice %476 {offsets = [0, 32], sizes = [8, 32], strides = [1, 1]} : vector<8x96xf32> to vector<8x32xf32>
    %479 = vector.extract_strided_slice %476 {offsets = [0, 64], sizes = [8, 32], strides = [1, 1]} : vector<8x96xf32> to vector<8x32xf32>
    %480 = vector.extract_strided_slice %470 {offsets = [0, 96], sizes = [8, 32], strides = [1, 1]} : vector<8x128xf32> to vector<8x32xf32>
    %481 = math.tanh %480 : vector<8x32xf32>
    %482 = arith.mulf %478, %460 : vector<8x32xf32>
    %483 = arith.mulf %477, %481 : vector<8x32xf32>
    %484 = arith.addf %482, %483 : vector<8x32xf32>
    %485 = math.tanh %484 : vector<8x32xf32>
    %486 = arith.mulf %479, %485 : vector<8x32xf32>
    %c8_181 = arith.constant 8 : index
    %c0_182 = arith.constant 0 : index
    %c0_183 = arith.constant 0 : index
    %487 = vector.load %arg18[%c8_181, %c0_182, %c0_183] : memref<10x8x32xf32, #tpu.memory_space<vmem>>, vector<1x8x32xf32>
    %488 = vector.shape_cast %487 : vector<1x8x32xf32> to vector<8x32xf32>
    %489 = vector.shape_cast %486 : vector<8x32xf32> to vector<1x8x32xf32>
    tpu.vector_store %arg18[%c8_181, %c0_182, %c0_183], %489 {strides = array<i32>} : memref<10x8x32xf32, #tpu.memory_space<vmem>>, vector<1x8x32xf32>,
    %c9_184 = arith.constant 9 : index
    %c0_185 = arith.constant 0 : index
    %c0_186 = arith.constant 0 : index
    %490 = vector.load %arg17[%c9_184, %c0_185, %c0_186] : memref<10x8x128xf32, #tpu.memory_space<vmem>>, vector<1x8x128xf32>
    %491 = vector.shape_cast %490 : vector<1x8x128xf32> to vector<8x128xf32>
    %492 = arith.truncf %486 : vector<8x32xf32> to vector<8x32xbf16>
    %cst_187 = arith.constant dense<0.000000e+00> : vector<8x128xf32>
    %493 = tpu.matmul %492, %269, %cst_187 {dimension_numbers = #tpu.dot_dimension_numbers<[1], [0], [0], [1], [0, 0, 1, 1], [], []>} : vector<8x32xbf16>, vector<32x128xbf16>, vector<8x128xf32> -> vector<8x128xf32>
    %494 = arith.addf %491, %493 : vector<8x128xf32>
    %495 = vector.extract_strided_slice %494 {offsets = [0, 0], sizes = [8, 96], strides = [1, 1]} : vector<8x128xf32> to vector<8x96xf32>
    %496 = arith.negf %495 : vector<8x96xf32>
    %497 = math.exp %496 : vector<8x96xf32>
    %cst_188 = arith.constant 1.000000e+00 : f32
    %498 = vector.broadcast %cst_188 : f32 to vector<8x96xf32>
    %499 = arith.addf %498, %497 : vector<8x96xf32>
    %500 = arith.divf %498, %499 : vector<8x96xf32>
    %501 = vector.extract_strided_slice %500 {offsets = [0, 0], sizes = [8, 32], strides = [1, 1]} : vector<8x96xf32> to vector<8x32xf32>
    %502 = vector.extract_strided_slice %500 {offsets = [0, 32], sizes = [8, 32], strides = [1, 1]} : vector<8x96xf32> to vector<8x32xf32>
    %503 = vector.extract_strided_slice %500 {offsets = [0, 64], sizes = [8, 32], strides = [1, 1]} : vector<8x96xf32> to vector<8x32xf32>
    %504 = vector.extract_strided_slice %494 {offsets = [0, 96], sizes = [8, 32], strides = [1, 1]} : vector<8x128xf32> to vector<8x32xf32>
    %505 = math.tanh %504 : vector<8x32xf32>
    %506 = arith.mulf %502, %484 : vector<8x32xf32>
    %507 = arith.mulf %501, %505 : vector<8x32xf32>
    %508 = arith.addf %506, %507 : vector<8x32xf32>
    %509 = math.tanh %508 : vector<8x32xf32>
    %510 = arith.mulf %503, %509 : vector<8x32xf32>
    %c9_189 = arith.constant 9 : index
    %c0_190 = arith.constant 0 : index
    %c0_191 = arith.constant 0 : index
    %511 = vector.load %arg18[%c9_189, %c0_190, %c0_191] : memref<10x8x32xf32, #tpu.memory_space<vmem>>, vector<1x8x32xf32>
    %512 = vector.shape_cast %511 : vector<1x8x32xf32> to vector<8x32xf32>
    %513 = vector.shape_cast %510 : vector<8x32xf32> to vector<1x8x32xf32>
    tpu.vector_store %arg18[%c9_189, %c0_190, %c0_191], %513 {strides = array<i32>} : memref<10x8x32xf32, #tpu.memory_space<vmem>>, vector<1x8x32xf32>,
    %c1_192 = arith.constant 1 : index
    %c0_193 = arith.constant 0 : index
    %c0_194 = arith.constant 0 : index
    %514 = vector.load %arg15[%c1_192, %c0_193, %c0_194] : memref<3x8x32xf32, #tpu.memory_space<vmem>>, vector<1x8x32xf32>
    %515 = vector.shape_cast %514 : vector<1x8x32xf32> to vector<8x32xf32>
    %516 = vector.shape_cast %510 : vector<8x32xf32> to vector<1x8x32xf32>
    tpu.vector_store %arg15[%c1_192, %c0_193, %c0_194], %516 {strides = array<i32>} : memref<3x8x32xf32, #tpu.memory_space<vmem>>, vector<1x8x32xf32>,
    %c1_195 = arith.constant 1 : index
    %c0_196 = arith.constant 0 : index
    %c0_197 = arith.constant 0 : index
    %517 = vector.load %arg16[%c1_195, %c0_196, %c0_197] : memref<3x8x32xf32, #tpu.memory_space<vmem>>, vector<1x8x32xf32>
    %518 = vector.shape_cast %517 : vector<1x8x32xf32> to vector<8x32xf32>
    %519 = vector.shape_cast %508 : vector<8x32xf32> to vector<1x8x32xf32>
    tpu.vector_store %arg16[%c1_195, %c0_196, %c0_197], %519 {strides = array<i32>} : memref<3x8x32xf32, #tpu.memory_space<vmem>>, vector<1x8x32xf32>,
    %c0_198 = arith.constant 0 : index
    %c0_199 = arith.constant 0 : index
    %c0_200 = arith.constant 0 : index
    %520 = vector.load %arg18[%c0_198, %c0_199, %c0_200] : memref<10x8x32xf32, #tpu.memory_space<vmem>>, vector<10x8x32xf32>
    %521 = vector.shape_cast %520 : vector<10x8x32xf32> to vector<80x32xf32>
    %522 = arith.truncf %521 : vector<80x32xf32> to vector<80x32xbf16>
    %c0_201 = arith.constant 0 : index
    %c0_202 = arith.constant 0 : index
    %523 = vector.load %arg7[%c0_201, %c0_202] : memref<32x128xbf16, #tpu.memory_space<vmem>>, vector<32x128xbf16>
    %cst_203 = arith.constant dense<0.000000e+00> : vector<80x128xf32>
    %524 = tpu.matmul %522, %523, %cst_203 {dimension_numbers = #tpu.dot_dimension_numbers<[1], [0], [0], [1], [0, 0, 1, 1], [], []>} : vector<80x32xbf16>, vector<32x128xbf16>, vector<80x128xf32> -> vector<80x128xf32>
    %c0_204 = arith.constant 0 : index
    %c0_205 = arith.constant 0 : index
    %525 = vector.load %arg9[%c0_204, %c0_205] : memref<1x128xf32, #tpu.memory_space<vmem>>, vector<1x128xf32>
    %526 = vector.broadcast %525 : vector<1x128xf32> to vector<80x128xf32>
    %527 = arith.addf %524, %526 : vector<80x128xf32>
    %528 = vector.shape_cast %527 : vector<80x128xf32> to vector<10x8x128xf32>
    %c0_206 = arith.constant 0 : index
    %c0_207 = arith.constant 0 : index
    %c0_208 = arith.constant 0 : index
    %529 = vector.load %arg17[%c0_206, %c0_207, %c0_208] : memref<10x8x128xf32, #tpu.memory_space<vmem>>, vector<10x8x128xf32>
    tpu.vector_store %arg17[%c0_206, %c0_207, %c0_208], %528 {strides = array<i32>} : memref<10x8x128xf32, #tpu.memory_space<vmem>>, vector<10x8x128xf32>,
    %c0_209 = arith.constant 0 : index
    %c0_210 = arith.constant 0 : index
    %530 = vector.load %arg8[%c0_209, %c0_210] : memref<32x128xbf16, #tpu.memory_space<vmem>>, vector<32x128xbf16>
    %c2_211 = arith.constant 2 : index
    %c0_212 = arith.constant 0 : index
    %c0_213 = arith.constant 0 : index
    %531 = vector.load %arg10[%c2_211, %c0_212, %c0_213] : memref<3x8x32xf32, #tpu.memory_space<vmem>>, vector<1x8x32xf32>
    %532 = vector.shape_cast %531 : vector<1x8x32xf32> to vector<8x32xf32>
    %c2_214 = arith.constant 2 : index
    %c0_215 = arith.constant 0 : index
    %c0_216 = arith.constant 0 : index
    %533 = vector.load %arg11[%c2_214, %c0_215, %c0_216] : memref<3x8x32xf32, #tpu.memory_space<vmem>>, vector<1x8x32xf32>
    %534 = vector.shape_cast %533 : vector<1x8x32xf32> to vector<8x32xf32>
    %c0_217 = arith.constant 0 : index
    %c0_218 = arith.constant 0 : index
    %c0_219 = arith.constant 0 : index
    %535 = vector.load %arg17[%c0_217, %c0_218, %c0_219] : memref<10x8x128xf32, #tpu.memory_space<vmem>>, vector<1x8x128xf32>
    %536 = vector.shape_cast %535 : vector<1x8x128xf32> to vector<8x128xf32>
    %537 = arith.truncf %532 : vector<8x32xf32> to vector<8x32xbf16>
    %cst_220 = arith.constant dense<0.000000e+00> : vector<8x128xf32>
    %538 = tpu.matmul %537, %530, %cst_220 {dimension_numbers = #tpu.dot_dimension_numbers<[1], [0], [0], [1], [0, 0, 1, 1], [], []>} : vector<8x32xbf16>, vector<32x128xbf16>, vector<8x128xf32> -> vector<8x128xf32>
    %539 = arith.addf %536, %538 : vector<8x128xf32>
    %540 = vector.extract_strided_slice %539 {offsets = [0, 0], sizes = [8, 96], strides = [1, 1]} : vector<8x128xf32> to vector<8x96xf32>
    %541 = arith.negf %540 : vector<8x96xf32>
    %542 = math.exp %541 : vector<8x96xf32>
    %cst_221 = arith.constant 1.000000e+00 : f32
    %543 = vector.broadcast %cst_221 : f32 to vector<8x96xf32>
    %544 = arith.addf %543, %542 : vector<8x96xf32>
    %545 = arith.divf %543, %544 : vector<8x96xf32>
    %546 = vector.extract_strided_slice %545 {offsets = [0, 0], sizes = [8, 32], strides = [1, 1]} : vector<8x96xf32> to vector<8x32xf32>
    %547 = vector.extract_strided_slice %545 {offsets = [0, 32], sizes = [8, 32], strides = [1, 1]} : vector<8x96xf32> to vector<8x32xf32>
    %548 = vector.extract_strided_slice %545 {offsets = [0, 64], sizes = [8, 32], strides = [1, 1]} : vector<8x96xf32> to vector<8x32xf32>
    %549 = vector.extract_strided_slice %539 {offsets = [0, 96], sizes = [8, 32], strides = [1, 1]} : vector<8x128xf32> to vector<8x32xf32>
    %550 = math.tanh %549 : vector<8x32xf32>
    %551 = arith.mulf %547, %534 : vector<8x32xf32>
    %552 = arith.mulf %546, %550 : vector<8x32xf32>
    %553 = arith.addf %551, %552 : vector<8x32xf32>
    %554 = math.tanh %553 : vector<8x32xf32>
    %555 = arith.mulf %548, %554 : vector<8x32xf32>
    %c0_222 = arith.constant 0 : index
    %c0_223 = arith.constant 0 : index
    %556 = vector.load %arg19[%c0_222, %c0_223] : memref<8x320xf32, #tpu.memory_space<vmem>>, vector<8x32xf32>
    tpu.vector_store %arg19[%c0_222, %c0_223], %555 {strides = array<i32>} : memref<8x320xf32, #tpu.memory_space<vmem>>, vector<8x32xf32>,
    %c1_224 = arith.constant 1 : index
    %c0_225 = arith.constant 0 : index
    %c0_226 = arith.constant 0 : index
    %557 = vector.load %arg17[%c1_224, %c0_225, %c0_226] : memref<10x8x128xf32, #tpu.memory_space<vmem>>, vector<1x8x128xf32>
    %558 = vector.shape_cast %557 : vector<1x8x128xf32> to vector<8x128xf32>
    %559 = arith.truncf %555 : vector<8x32xf32> to vector<8x32xbf16>
    %cst_227 = arith.constant dense<0.000000e+00> : vector<8x128xf32>
    %560 = tpu.matmul %559, %530, %cst_227 {dimension_numbers = #tpu.dot_dimension_numbers<[1], [0], [0], [1], [0, 0, 1, 1], [], []>} : vector<8x32xbf16>, vector<32x128xbf16>, vector<8x128xf32> -> vector<8x128xf32>
    %561 = arith.addf %558, %560 : vector<8x128xf32>
    %562 = vector.extract_strided_slice %561 {offsets = [0, 0], sizes = [8, 96], strides = [1, 1]} : vector<8x128xf32> to vector<8x96xf32>
    %563 = arith.negf %562 : vector<8x96xf32>
    %564 = math.exp %563 : vector<8x96xf32>
    %cst_228 = arith.constant 1.000000e+00 : f32
    %565 = vector.broadcast %cst_228 : f32 to vector<8x96xf32>
    %566 = arith.addf %565, %564 : vector<8x96xf32>
    %567 = arith.divf %565, %566 : vector<8x96xf32>
    %568 = vector.extract_strided_slice %567 {offsets = [0, 0], sizes = [8, 32], strides = [1, 1]} : vector<8x96xf32> to vector<8x32xf32>
    %569 = vector.extract_strided_slice %567 {offsets = [0, 32], sizes = [8, 32], strides = [1, 1]} : vector<8x96xf32> to vector<8x32xf32>
    %570 = vector.extract_strided_slice %567 {offsets = [0, 64], sizes = [8, 32], strides = [1, 1]} : vector<8x96xf32> to vector<8x32xf32>
    %571 = vector.extract_strided_slice %561 {offsets = [0, 96], sizes = [8, 32], strides = [1, 1]} : vector<8x128xf32> to vector<8x32xf32>
    %572 = math.tanh %571 : vector<8x32xf32>
    %573 = arith.mulf %569, %553 : vector<8x32xf32>
    %574 = arith.mulf %568, %572 : vector<8x32xf32>
    %575 = arith.addf %573, %574 : vector<8x32xf32>
    %576 = math.tanh %575 : vector<8x32xf32>
    %577 = arith.mulf %570, %576 : vector<8x32xf32>
    %c0_229 = arith.constant 0 : index
    %c32 = arith.constant 32 : index
    %578 = vector.load %arg19[%c0_229, %c32] : memref<8x320xf32, #tpu.memory_space<vmem>>, vector<8x32xf32>
    tpu.vector_store %arg19[%c0_229, %c32], %577 {strides = array<i32>} : memref<8x320xf32, #tpu.memory_space<vmem>>, vector<8x32xf32>,
    %c2_230 = arith.constant 2 : index
    %c0_231 = arith.constant 0 : index
    %c0_232 = arith.constant 0 : index
    %579 = vector.load %arg17[%c2_230, %c0_231, %c0_232] : memref<10x8x128xf32, #tpu.memory_space<vmem>>, vector<1x8x128xf32>
    %580 = vector.shape_cast %579 : vector<1x8x128xf32> to vector<8x128xf32>
    %581 = arith.truncf %577 : vector<8x32xf32> to vector<8x32xbf16>
    %cst_233 = arith.constant dense<0.000000e+00> : vector<8x128xf32>
    %582 = tpu.matmul %581, %530, %cst_233 {dimension_numbers = #tpu.dot_dimension_numbers<[1], [0], [0], [1], [0, 0, 1, 1], [], []>} : vector<8x32xbf16>, vector<32x128xbf16>, vector<8x128xf32> -> vector<8x128xf32>
    %583 = arith.addf %580, %582 : vector<8x128xf32>
    %584 = vector.extract_strided_slice %583 {offsets = [0, 0], sizes = [8, 96], strides = [1, 1]} : vector<8x128xf32> to vector<8x96xf32>
    %585 = arith.negf %584 : vector<8x96xf32>
    %586 = math.exp %585 : vector<8x96xf32>
    %cst_234 = arith.constant 1.000000e+00 : f32
    %587 = vector.broadcast %cst_234 : f32 to vector<8x96xf32>
    %588 = arith.addf %587, %586 : vector<8x96xf32>
    %589 = arith.divf %587, %588 : vector<8x96xf32>
    %590 = vector.extract_strided_slice %589 {offsets = [0, 0], sizes = [8, 32], strides = [1, 1]} : vector<8x96xf32> to vector<8x32xf32>
    %591 = vector.extract_strided_slice %589 {offsets = [0, 32], sizes = [8, 32], strides = [1, 1]} : vector<8x96xf32> to vector<8x32xf32>
    %592 = vector.extract_strided_slice %589 {offsets = [0, 64], sizes = [8, 32], strides = [1, 1]} : vector<8x96xf32> to vector<8x32xf32>
    %593 = vector.extract_strided_slice %583 {offsets = [0, 96], sizes = [8, 32], strides = [1, 1]} : vector<8x128xf32> to vector<8x32xf32>
    %594 = math.tanh %593 : vector<8x32xf32>
    %595 = arith.mulf %591, %575 : vector<8x32xf32>
    %596 = arith.mulf %590, %594 : vector<8x32xf32>
    %597 = arith.addf %595, %596 : vector<8x32xf32>
    %598 = math.tanh %597 : vector<8x32xf32>
    %599 = arith.mulf %592, %598 : vector<8x32xf32>
    %c0_235 = arith.constant 0 : index
    %c64 = arith.constant 64 : index
    %600 = vector.load %arg19[%c0_235, %c64] : memref<8x320xf32, #tpu.memory_space<vmem>>, vector<8x32xf32>
    tpu.vector_store %arg19[%c0_235, %c64], %599 {strides = array<i32>} : memref<8x320xf32, #tpu.memory_space<vmem>>, vector<8x32xf32>,
    %c3_236 = arith.constant 3 : index
    %c0_237 = arith.constant 0 : index
    %c0_238 = arith.constant 0 : index
    %601 = vector.load %arg17[%c3_236, %c0_237, %c0_238] : memref<10x8x128xf32, #tpu.memory_space<vmem>>, vector<1x8x128xf32>
    %602 = vector.shape_cast %601 : vector<1x8x128xf32> to vector<8x128xf32>
    %603 = arith.truncf %599 : vector<8x32xf32> to vector<8x32xbf16>
    %cst_239 = arith.constant dense<0.000000e+00> : vector<8x128xf32>
    %604 = tpu.matmul %603, %530, %cst_239 {dimension_numbers = #tpu.dot_dimension_numbers<[1], [0], [0], [1], [0, 0, 1, 1], [], []>} : vector<8x32xbf16>, vector<32x128xbf16>, vector<8x128xf32> -> vector<8x128xf32>
    %605 = arith.addf %602, %604 : vector<8x128xf32>
    %606 = vector.extract_strided_slice %605 {offsets = [0, 0], sizes = [8, 96], strides = [1, 1]} : vector<8x128xf32> to vector<8x96xf32>
    %607 = arith.negf %606 : vector<8x96xf32>
    %608 = math.exp %607 : vector<8x96xf32>
    %cst_240 = arith.constant 1.000000e+00 : f32
    %609 = vector.broadcast %cst_240 : f32 to vector<8x96xf32>
    %610 = arith.addf %609, %608 : vector<8x96xf32>
    %611 = arith.divf %609, %610 : vector<8x96xf32>
    %612 = vector.extract_strided_slice %611 {offsets = [0, 0], sizes = [8, 32], strides = [1, 1]} : vector<8x96xf32> to vector<8x32xf32>
    %613 = vector.extract_strided_slice %611 {offsets = [0, 32], sizes = [8, 32], strides = [1, 1]} : vector<8x96xf32> to vector<8x32xf32>
    %614 = vector.extract_strided_slice %611 {offsets = [0, 64], sizes = [8, 32], strides = [1, 1]} : vector<8x96xf32> to vector<8x32xf32>
    %615 = vector.extract_strided_slice %605 {offsets = [0, 96], sizes = [8, 32], strides = [1, 1]} : vector<8x128xf32> to vector<8x32xf32>
    %616 = math.tanh %615 : vector<8x32xf32>
    %617 = arith.mulf %613, %597 : vector<8x32xf32>
    %618 = arith.mulf %612, %616 : vector<8x32xf32>
    %619 = arith.addf %617, %618 : vector<8x32xf32>
    %620 = math.tanh %619 : vector<8x32xf32>
    %621 = arith.mulf %614, %620 : vector<8x32xf32>
    %c0_241 = arith.constant 0 : index
    %c96 = arith.constant 96 : index
    %622 = vector.load %arg19[%c0_241, %c96] : memref<8x320xf32, #tpu.memory_space<vmem>>, vector<8x32xf32>
    tpu.vector_store %arg19[%c0_241, %c96], %621 {strides = array<i32>} : memref<8x320xf32, #tpu.memory_space<vmem>>, vector<8x32xf32>,
    %c4_242 = arith.constant 4 : index
    %c0_243 = arith.constant 0 : index
    %c0_244 = arith.constant 0 : index
    %623 = vector.load %arg17[%c4_242, %c0_243, %c0_244] : memref<10x8x128xf32, #tpu.memory_space<vmem>>, vector<1x8x128xf32>
    %624 = vector.shape_cast %623 : vector<1x8x128xf32> to vector<8x128xf32>
    %625 = arith.truncf %621 : vector<8x32xf32> to vector<8x32xbf16>
    %cst_245 = arith.constant dense<0.000000e+00> : vector<8x128xf32>
    %626 = tpu.matmul %625, %530, %cst_245 {dimension_numbers = #tpu.dot_dimension_numbers<[1], [0], [0], [1], [0, 0, 1, 1], [], []>} : vector<8x32xbf16>, vector<32x128xbf16>, vector<8x128xf32> -> vector<8x128xf32>
    %627 = arith.addf %624, %626 : vector<8x128xf32>
    %628 = vector.extract_strided_slice %627 {offsets = [0, 0], sizes = [8, 96], strides = [1, 1]} : vector<8x128xf32> to vector<8x96xf32>
    %629 = arith.negf %628 : vector<8x96xf32>
    %630 = math.exp %629 : vector<8x96xf32>
    %cst_246 = arith.constant 1.000000e+00 : f32
    %631 = vector.broadcast %cst_246 : f32 to vector<8x96xf32>
    %632 = arith.addf %631, %630 : vector<8x96xf32>
    %633 = arith.divf %631, %632 : vector<8x96xf32>
    %634 = vector.extract_strided_slice %633 {offsets = [0, 0], sizes = [8, 32], strides = [1, 1]} : vector<8x96xf32> to vector<8x32xf32>
    %635 = vector.extract_strided_slice %633 {offsets = [0, 32], sizes = [8, 32], strides = [1, 1]} : vector<8x96xf32> to vector<8x32xf32>
    %636 = vector.extract_strided_slice %633 {offsets = [0, 64], sizes = [8, 32], strides = [1, 1]} : vector<8x96xf32> to vector<8x32xf32>
    %637 = vector.extract_strided_slice %627 {offsets = [0, 96], sizes = [8, 32], strides = [1, 1]} : vector<8x128xf32> to vector<8x32xf32>
    %638 = math.tanh %637 : vector<8x32xf32>
    %639 = arith.mulf %635, %619 : vector<8x32xf32>
    %640 = arith.mulf %634, %638 : vector<8x32xf32>
    %641 = arith.addf %639, %640 : vector<8x32xf32>
    %642 = math.tanh %641 : vector<8x32xf32>
    %643 = arith.mulf %636, %642 : vector<8x32xf32>
    %c0_247 = arith.constant 0 : index
    %c128 = arith.constant 128 : index
    %644 = vector.load %arg19[%c0_247, %c128] : memref<8x320xf32, #tpu.memory_space<vmem>>, vector<8x32xf32>
    tpu.vector_store %arg19[%c0_247, %c128], %643 {strides = array<i32>} : memref<8x320xf32, #tpu.memory_space<vmem>>, vector<8x32xf32>,
    %c5_248 = arith.constant 5 : index
    %c0_249 = arith.constant 0 : index
    %c0_250 = arith.constant 0 : index
    %645 = vector.load %arg17[%c5_248, %c0_249, %c0_250] : memref<10x8x128xf32, #tpu.memory_space<vmem>>, vector<1x8x128xf32>
    %646 = vector.shape_cast %645 : vector<1x8x128xf32> to vector<8x128xf32>
    %647 = arith.truncf %643 : vector<8x32xf32> to vector<8x32xbf16>
    %cst_251 = arith.constant dense<0.000000e+00> : vector<8x128xf32>
    %648 = tpu.matmul %647, %530, %cst_251 {dimension_numbers = #tpu.dot_dimension_numbers<[1], [0], [0], [1], [0, 0, 1, 1], [], []>} : vector<8x32xbf16>, vector<32x128xbf16>, vector<8x128xf32> -> vector<8x128xf32>
    %649 = arith.addf %646, %648 : vector<8x128xf32>
    %650 = vector.extract_strided_slice %649 {offsets = [0, 0], sizes = [8, 96], strides = [1, 1]} : vector<8x128xf32> to vector<8x96xf32>
    %651 = arith.negf %650 : vector<8x96xf32>
    %652 = math.exp %651 : vector<8x96xf32>
    %cst_252 = arith.constant 1.000000e+00 : f32
    %653 = vector.broadcast %cst_252 : f32 to vector<8x96xf32>
    %654 = arith.addf %653, %652 : vector<8x96xf32>
    %655 = arith.divf %653, %654 : vector<8x96xf32>
    %656 = vector.extract_strided_slice %655 {offsets = [0, 0], sizes = [8, 32], strides = [1, 1]} : vector<8x96xf32> to vector<8x32xf32>
    %657 = vector.extract_strided_slice %655 {offsets = [0, 32], sizes = [8, 32], strides = [1, 1]} : vector<8x96xf32> to vector<8x32xf32>
    %658 = vector.extract_strided_slice %655 {offsets = [0, 64], sizes = [8, 32], strides = [1, 1]} : vector<8x96xf32> to vector<8x32xf32>
    %659 = vector.extract_strided_slice %649 {offsets = [0, 96], sizes = [8, 32], strides = [1, 1]} : vector<8x128xf32> to vector<8x32xf32>
    %660 = math.tanh %659 : vector<8x32xf32>
    %661 = arith.mulf %657, %641 : vector<8x32xf32>
    %662 = arith.mulf %656, %660 : vector<8x32xf32>
    %663 = arith.addf %661, %662 : vector<8x32xf32>
    %664 = math.tanh %663 : vector<8x32xf32>
    %665 = arith.mulf %658, %664 : vector<8x32xf32>
    %c0_253 = arith.constant 0 : index
    %c160 = arith.constant 160 : index
    %666 = vector.load %arg19[%c0_253, %c160] : memref<8x320xf32, #tpu.memory_space<vmem>>, vector<8x32xf32>
    tpu.vector_store %arg19[%c0_253, %c160], %665 {strides = array<i32>} : memref<8x320xf32, #tpu.memory_space<vmem>>, vector<8x32xf32>,
    %c6_254 = arith.constant 6 : index
    %c0_255 = arith.constant 0 : index
    %c0_256 = arith.constant 0 : index
    %667 = vector.load %arg17[%c6_254, %c0_255, %c0_256] : memref<10x8x128xf32, #tpu.memory_space<vmem>>, vector<1x8x128xf32>
    %668 = vector.shape_cast %667 : vector<1x8x128xf32> to vector<8x128xf32>
    %669 = arith.truncf %665 : vector<8x32xf32> to vector<8x32xbf16>
    %cst_257 = arith.constant dense<0.000000e+00> : vector<8x128xf32>
    %670 = tpu.matmul %669, %530, %cst_257 {dimension_numbers = #tpu.dot_dimension_numbers<[1], [0], [0], [1], [0, 0, 1, 1], [], []>} : vector<8x32xbf16>, vector<32x128xbf16>, vector<8x128xf32> -> vector<8x128xf32>
    %671 = arith.addf %668, %670 : vector<8x128xf32>
    %672 = vector.extract_strided_slice %671 {offsets = [0, 0], sizes = [8, 96], strides = [1, 1]} : vector<8x128xf32> to vector<8x96xf32>
    %673 = arith.negf %672 : vector<8x96xf32>
    %674 = math.exp %673 : vector<8x96xf32>
    %cst_258 = arith.constant 1.000000e+00 : f32
    %675 = vector.broadcast %cst_258 : f32 to vector<8x96xf32>
    %676 = arith.addf %675, %674 : vector<8x96xf32>
    %677 = arith.divf %675, %676 : vector<8x96xf32>
    %678 = vector.extract_strided_slice %677 {offsets = [0, 0], sizes = [8, 32], strides = [1, 1]} : vector<8x96xf32> to vector<8x32xf32>
    %679 = vector.extract_strided_slice %677 {offsets = [0, 32], sizes = [8, 32], strides = [1, 1]} : vector<8x96xf32> to vector<8x32xf32>
    %680 = vector.extract_strided_slice %677 {offsets = [0, 64], sizes = [8, 32], strides = [1, 1]} : vector<8x96xf32> to vector<8x32xf32>
    %681 = vector.extract_strided_slice %671 {offsets = [0, 96], sizes = [8, 32], strides = [1, 1]} : vector<8x128xf32> to vector<8x32xf32>
    %682 = math.tanh %681 : vector<8x32xf32>
    %683 = arith.mulf %679, %663 : vector<8x32xf32>
    %684 = arith.mulf %678, %682 : vector<8x32xf32>
    %685 = arith.addf %683, %684 : vector<8x32xf32>
    %686 = math.tanh %685 : vector<8x32xf32>
    %687 = arith.mulf %680, %686 : vector<8x32xf32>
    %c0_259 = arith.constant 0 : index
    %c192 = arith.constant 192 : index
    %688 = vector.load %arg19[%c0_259, %c192] : memref<8x320xf32, #tpu.memory_space<vmem>>, vector<8x32xf32>
    tpu.vector_store %arg19[%c0_259, %c192], %687 {strides = array<i32>} : memref<8x320xf32, #tpu.memory_space<vmem>>, vector<8x32xf32>,
    %c7_260 = arith.constant 7 : index
    %c0_261 = arith.constant 0 : index
    %c0_262 = arith.constant 0 : index
    %689 = vector.load %arg17[%c7_260, %c0_261, %c0_262] : memref<10x8x128xf32, #tpu.memory_space<vmem>>, vector<1x8x128xf32>
    %690 = vector.shape_cast %689 : vector<1x8x128xf32> to vector<8x128xf32>
    %691 = arith.truncf %687 : vector<8x32xf32> to vector<8x32xbf16>
    %cst_263 = arith.constant dense<0.000000e+00> : vector<8x128xf32>
    %692 = tpu.matmul %691, %530, %cst_263 {dimension_numbers = #tpu.dot_dimension_numbers<[1], [0], [0], [1], [0, 0, 1, 1], [], []>} : vector<8x32xbf16>, vector<32x128xbf16>, vector<8x128xf32> -> vector<8x128xf32>
    %693 = arith.addf %690, %692 : vector<8x128xf32>
    %694 = vector.extract_strided_slice %693 {offsets = [0, 0], sizes = [8, 96], strides = [1, 1]} : vector<8x128xf32> to vector<8x96xf32>
    %695 = arith.negf %694 : vector<8x96xf32>
    %696 = math.exp %695 : vector<8x96xf32>
    %cst_264 = arith.constant 1.000000e+00 : f32
    %697 = vector.broadcast %cst_264 : f32 to vector<8x96xf32>
    %698 = arith.addf %697, %696 : vector<8x96xf32>
    %699 = arith.divf %697, %698 : vector<8x96xf32>
    %700 = vector.extract_strided_slice %699 {offsets = [0, 0], sizes = [8, 32], strides = [1, 1]} : vector<8x96xf32> to vector<8x32xf32>
    %701 = vector.extract_strided_slice %699 {offsets = [0, 32], sizes = [8, 32], strides = [1, 1]} : vector<8x96xf32> to vector<8x32xf32>
    %702 = vector.extract_strided_slice %699 {offsets = [0, 64], sizes = [8, 32], strides = [1, 1]} : vector<8x96xf32> to vector<8x32xf32>
    %703 = vector.extract_strided_slice %693 {offsets = [0, 96], sizes = [8, 32], strides = [1, 1]} : vector<8x128xf32> to vector<8x32xf32>
    %704 = math.tanh %703 : vector<8x32xf32>
    %705 = arith.mulf %701, %685 : vector<8x32xf32>
    %706 = arith.mulf %700, %704 : vector<8x32xf32>
    %707 = arith.addf %705, %706 : vector<8x32xf32>
    %708 = math.tanh %707 : vector<8x32xf32>
    %709 = arith.mulf %702, %708 : vector<8x32xf32>
    %c0_265 = arith.constant 0 : index
    %c224 = arith.constant 224 : index
    %710 = vector.load %arg19[%c0_265, %c224] : memref<8x320xf32, #tpu.memory_space<vmem>>, vector<8x32xf32>
    tpu.vector_store %arg19[%c0_265, %c224], %709 {strides = array<i32>} : memref<8x320xf32, #tpu.memory_space<vmem>>, vector<8x32xf32>,
    %c8_266 = arith.constant 8 : index
    %c0_267 = arith.constant 0 : index
    %c0_268 = arith.constant 0 : index
    %711 = vector.load %arg17[%c8_266, %c0_267, %c0_268] : memref<10x8x128xf32, #tpu.memory_space<vmem>>, vector<1x8x128xf32>
    %712 = vector.shape_cast %711 : vector<1x8x128xf32> to vector<8x128xf32>
    %713 = arith.truncf %709 : vector<8x32xf32> to vector<8x32xbf16>
    %cst_269 = arith.constant dense<0.000000e+00> : vector<8x128xf32>
    %714 = tpu.matmul %713, %530, %cst_269 {dimension_numbers = #tpu.dot_dimension_numbers<[1], [0], [0], [1], [0, 0, 1, 1], [], []>} : vector<8x32xbf16>, vector<32x128xbf16>, vector<8x128xf32> -> vector<8x128xf32>
    %715 = arith.addf %712, %714 : vector<8x128xf32>
    %716 = vector.extract_strided_slice %715 {offsets = [0, 0], sizes = [8, 96], strides = [1, 1]} : vector<8x128xf32> to vector<8x96xf32>
    %717 = arith.negf %716 : vector<8x96xf32>
    %718 = math.exp %717 : vector<8x96xf32>
    %cst_270 = arith.constant 1.000000e+00 : f32
    %719 = vector.broadcast %cst_270 : f32 to vector<8x96xf32>
    %720 = arith.addf %719, %718 : vector<8x96xf32>
    %721 = arith.divf %719, %720 : vector<8x96xf32>
    %722 = vector.extract_strided_slice %721 {offsets = [0, 0], sizes = [8, 32], strides = [1, 1]} : vector<8x96xf32> to vector<8x32xf32>
    %723 = vector.extract_strided_slice %721 {offsets = [0, 32], sizes = [8, 32], strides = [1, 1]} : vector<8x96xf32> to vector<8x32xf32>
    %724 = vector.extract_strided_slice %721 {offsets = [0, 64], sizes = [8, 32], strides = [1, 1]} : vector<8x96xf32> to vector<8x32xf32>
    %725 = vector.extract_strided_slice %715 {offsets = [0, 96], sizes = [8, 32], strides = [1, 1]} : vector<8x128xf32> to vector<8x32xf32>
    %726 = math.tanh %725 : vector<8x32xf32>
    %727 = arith.mulf %723, %707 : vector<8x32xf32>
    %728 = arith.mulf %722, %726 : vector<8x32xf32>
    %729 = arith.addf %727, %728 : vector<8x32xf32>
    %730 = math.tanh %729 : vector<8x32xf32>
    %731 = arith.mulf %724, %730 : vector<8x32xf32>
    %c0_271 = arith.constant 0 : index
    %c256 = arith.constant 256 : index
    %732 = vector.load %arg19[%c0_271, %c256] : memref<8x320xf32, #tpu.memory_space<vmem>>, vector<8x32xf32>
    tpu.vector_store %arg19[%c0_271, %c256], %731 {strides = array<i32>} : memref<8x320xf32, #tpu.memory_space<vmem>>, vector<8x32xf32>,
    %c9_272 = arith.constant 9 : index
    %c0_273 = arith.constant 0 : index
    %c0_274 = arith.constant 0 : index
    %733 = vector.load %arg17[%c9_272, %c0_273, %c0_274] : memref<10x8x128xf32, #tpu.memory_space<vmem>>, vector<1x8x128xf32>
    %734 = vector.shape_cast %733 : vector<1x8x128xf32> to vector<8x128xf32>
    %735 = arith.truncf %731 : vector<8x32xf32> to vector<8x32xbf16>
    %cst_275 = arith.constant dense<0.000000e+00> : vector<8x128xf32>
    %736 = tpu.matmul %735, %530, %cst_275 {dimension_numbers = #tpu.dot_dimension_numbers<[1], [0], [0], [1], [0, 0, 1, 1], [], []>} : vector<8x32xbf16>, vector<32x128xbf16>, vector<8x128xf32> -> vector<8x128xf32>
    %737 = arith.addf %734, %736 : vector<8x128xf32>
    %738 = vector.extract_strided_slice %737 {offsets = [0, 0], sizes = [8, 96], strides = [1, 1]} : vector<8x128xf32> to vector<8x96xf32>
    %739 = arith.negf %738 : vector<8x96xf32>
    %740 = math.exp %739 : vector<8x96xf32>
    %cst_276 = arith.constant 1.000000e+00 : f32
    %741 = vector.broadcast %cst_276 : f32 to vector<8x96xf32>
    %742 = arith.addf %741, %740 : vector<8x96xf32>
    %743 = arith.divf %741, %742 : vector<8x96xf32>
    %744 = vector.extract_strided_slice %743 {offsets = [0, 0], sizes = [8, 32], strides = [1, 1]} : vector<8x96xf32> to vector<8x32xf32>
    %745 = vector.extract_strided_slice %743 {offsets = [0, 32], sizes = [8, 32], strides = [1, 1]} : vector<8x96xf32> to vector<8x32xf32>
    %746 = vector.extract_strided_slice %743 {offsets = [0, 64], sizes = [8, 32], strides = [1, 1]} : vector<8x96xf32> to vector<8x32xf32>
    %747 = vector.extract_strided_slice %737 {offsets = [0, 96], sizes = [8, 32], strides = [1, 1]} : vector<8x128xf32> to vector<8x32xf32>
    %748 = math.tanh %747 : vector<8x32xf32>
    %749 = arith.mulf %745, %729 : vector<8x32xf32>
    %750 = arith.mulf %744, %748 : vector<8x32xf32>
    %751 = arith.addf %749, %750 : vector<8x32xf32>
    %752 = math.tanh %751 : vector<8x32xf32>
    %753 = arith.mulf %746, %752 : vector<8x32xf32>
    %c0_277 = arith.constant 0 : index
    %c288 = arith.constant 288 : index
    %754 = vector.load %arg19[%c0_277, %c288] : memref<8x320xf32, #tpu.memory_space<vmem>>, vector<8x32xf32>
    tpu.vector_store %arg19[%c0_277, %c288], %753 {strides = array<i32>} : memref<8x320xf32, #tpu.memory_space<vmem>>, vector<8x32xf32>,
    %c2_278 = arith.constant 2 : index
    %c0_279 = arith.constant 0 : index
    %c0_280 = arith.constant 0 : index
    %755 = vector.load %arg15[%c2_278, %c0_279, %c0_280] : memref<3x8x32xf32, #tpu.memory_space<vmem>>, vector<1x8x32xf32>
    %756 = vector.shape_cast %755 : vector<1x8x32xf32> to vector<8x32xf32>
    %757 = vector.shape_cast %753 : vector<8x32xf32> to vector<1x8x32xf32>
    tpu.vector_store %arg15[%c2_278, %c0_279, %c0_280], %757 {strides = array<i32>} : memref<3x8x32xf32, #tpu.memory_space<vmem>>, vector<1x8x32xf32>,
    %c2_281 = arith.constant 2 : index
    %c0_282 = arith.constant 0 : index
    %c0_283 = arith.constant 0 : index
    %758 = vector.load %arg16[%c2_281, %c0_282, %c0_283] : memref<3x8x32xf32, #tpu.memory_space<vmem>>, vector<1x8x32xf32>
    %759 = vector.shape_cast %758 : vector<1x8x32xf32> to vector<8x32xf32>
    %760 = vector.shape_cast %751 : vector<8x32xf32> to vector<1x8x32xf32>
    tpu.vector_store %arg16[%c2_281, %c0_282, %c0_283], %760 {strides = array<i32>} : memref<3x8x32xf32, #tpu.memory_space<vmem>>, vector<1x8x32xf32>,
    %c0_284 = arith.constant 0 : index
    %c0_285 = arith.constant 0 : index
    %761 = vector.load %arg19[%c0_284, %c0_285] : memref<8x320xf32, #tpu.memory_space<vmem>>, vector<8x320xf32>
    %762 = arith.truncf %761 : vector<8x320xf32> to vector<8x320xbf16>
    %c0_286 = arith.constant 0 : index
    %c0_287 = arith.constant 0 : index
    %763 = vector.load %arg12[%c0_286, %c0_287] : memref<320x128xbf16, #tpu.memory_space<vmem>>, vector<320x128xbf16>
    %cst_288 = arith.constant dense<0.000000e+00> : vector<8x128xf32>
    %764 = tpu.matmul %762, %763, %cst_288 {dimension_numbers = #tpu.dot_dimension_numbers<[1], [0], [0], [1], [0, 0, 1, 1], [], []>} : vector<8x320xbf16>, vector<320x128xbf16>, vector<8x128xf32> -> vector<8x128xf32>
    %c0_289 = arith.constant 0 : index
    %c0_290 = arith.constant 0 : index
    %765 = vector.load %arg13[%c0_289, %c0_290] : memref<1x128xf32, #tpu.memory_space<vmem>>, vector<1x128xf32>
    %766 = vector.broadcast %765 : vector<1x128xf32> to vector<8x128xf32>
    %767 = arith.addf %764, %766 : vector<8x128xf32>
    %c0_291 = arith.constant 0 : index
    %c0_292 = arith.constant 0 : index
    %768 = vector.load %arg14[%c0_291, %c0_292] : memref<8x128xf32, #tpu.memory_space<vmem>>, vector<8x128xf32>
    tpu.vector_store %arg14[%c0_291, %c0_292], %767 {strides = array<i32>} : memref<8x128xf32, #tpu.memory_space<vmem>>, vector<8x128xf32>,
    return
  }
}

</mosaic_0001>

<llo_original>
// kernel: rnnlm_forward.1
$region0: #{rnnlm_forward.1}
  #allocation0 [shape = 'u32[]', space=smem, size = 0x4, offset = 0x4, fixed_abs, tag = 'smem constant byte address 0x4 - core index']
  #allocation1 [shape = 'u32[144,128]{1,0:T(1,128)}', space=vmem, size = 0x12000, scoped, tag = 'internal scratch']
  #allocation2 [shape = 'f32[10,8,128]{2,1,0:T(8,128)}', space=vmem, size = 0xa000, scoped, tag = 'scratch operand']
  #allocation3 [shape = 'f32[10,8,32]{2,1,0:T(8,128)}', space=vmem, size = 0xa000, scoped, tag = 'scratch operand']
  #allocation4 [shape = 'f32[8,320]{1,0:T(8,128)}', space=vmem, size = 0x3000, scoped, tag = 'scratch operand']
  %s0 = inlined_call_operand.vmem [shape: bf16[80,16], index: 0, kind: input, shape index: {}]
  %s1 = inlined_call_operand.vmem [shape: bf16[16,128], index: 1, kind: input, shape index: {}]
  %s2 = inlined_call_operand.vmem [shape: bf16[32,128], index: 2, kind: input, shape index: {}]
  %s3 = inlined_call_operand.vmem [shape: f32[1,128], index: 3, kind: input, shape index: {}]
  %s4 = inlined_call_operand.vmem [shape: bf16[32,128], index: 4, kind: input, shape index: {}]
  %s5 = inlined_call_operand.vmem [shape: bf16[32,128], index: 5, kind: input, shape index: {}]
  %s6 = inlined_call_operand.vmem [shape: f32[1,128], index: 6, kind: input, shape index: {}]
  %s7 = inlined_call_operand.vmem [shape: bf16[32,128], index: 7, kind: input, shape index: {}]
  %s8 = inlined_call_operand.vmem [shape: bf16[32,128], index: 8, kind: input, shape index: {}]
  %s9 = inlined_call_operand.vmem [shape: f32[1,128], index: 9, kind: input, shape index: {}]
  %s10 = inlined_call_operand.vmem [shape: f32[3,8,32], index: 10, kind: input, shape index: {}]
  %s11 = inlined_call_operand.vmem [shape: f32[3,8,32], index: 11, kind: input, shape index: {}]
  %s12 = inlined_call_operand.vmem [shape: bf16[320,128], index: 12, kind: input, shape index: {}]
  %s13 = inlined_call_operand.vmem [shape: f32[1,128], index: 13, kind: input, shape index: {}]
  %s14 = inlined_call_operand.hbm [shape: f32[8,128], index: 14, kind: output, shape index: {0}]
  %s15 = inlined_call_operand.hbm [shape: f32[3,8,32], index: 15, kind: output, shape index: {1}]
  %s16 = inlined_call_operand.hbm [shape: f32[3,8,32], index: 16, kind: output, shape index: {2}]
  %17 = xla_tuple %s14, %s15, %s16
  %s18 = sld [smem:[#allocation0]]
  $region82: #{rnnlm_forward.1} parent=0
    _
  %s20 = ssub.s32 1, %s18
  %s21 = scalar_select 0, %s20, %s18
  $region1: #{rnnlm_forward.1} parent=0
    #allocation5 [shape = 'u8[4096]{0}', space=vmem, size = 0x1000, scoped, tag = 'output window, operand 0, single buffered']
    #allocation6 [shape = 's32[1]{0}', space=sflag, size = 0x4, scoped, tag = 'scoped memory for rnnlm_forward.1']
    #allocation7 [shape = 'u8[12288]{0}', space=vmem, size = 0x3000, scoped, tag = 'output window, operand 1, single buffered']
    #allocation8 [shape = 's32[1]{0}', space=sflag, size = 0x4, scoped, tag = 'scoped memory for rnnlm_forward.1']
    #allocation9 [shape = 'u8[12288]{0}', space=vmem, size = 0x3000, scoped, tag = 'output window, operand 2, single buffered']
    %22 = vsyncpa [#allocation6], 0
    %23 = vsyncpa [#allocation8], 0
    // Predicated region
    $region2: #{rnnlm_forward.1} parent=1 // pred_check
      _
    $region3: #{rnnlm_forward.1} parent=1 // pred_check_branch
      %25 = sbr.rel (0) target = $region5
    $region4: #{rnnlm_forward.1} parent=1 // pred_region
      _
    $region5: #{rnnlm_forward.1} parent=1 // pred_fallthru
      _
    // Predicated region
    $region6: #{rnnlm_forward.1} parent=1 // pred_check
      _
    $region7: #{rnnlm_forward.1} parent=1 // pred_check_branch
      %27 = sbr.rel (0) target = $region9
    $region8: #{rnnlm_forward.1} parent=1 // pred_region
      _
    $region9: #{rnnlm_forward.1} parent=1 // pred_fallthru
      _
    // Predicated region
    $region10: #{rnnlm_forward.1} parent=1 // pred_check
      _
    $region11: #{rnnlm_forward.1} parent=1 // pred_check_branch
      %29 = sbr.rel (0) target = $region13
    $region12: #{rnnlm_forward.1} parent=1 // pred_region
      _
    $region13: #{rnnlm_forward.1} parent=1 // pred_fallthru
      _
    // Predicated region
    $region14: #{rnnlm_forward.1} parent=1 // pred_check
      _
    $region15: #{rnnlm_forward.1} parent=1 // pred_check_branch
      %31 = sbr.rel (0) target = $region17
    $region16: #{rnnlm_forward.1} parent=1 // pred_region
      _
    $region17: #{rnnlm_forward.1} parent=1 // pred_fallthru
      _
    // Predicated region
    $region18: #{rnnlm_forward.1} parent=1 // pred_check
      _
    $region19: #{rnnlm_forward.1} parent=1 // pred_check_branch
      %33 = sbr.rel (0) target = $region21
    $region20: #{rnnlm_forward.1} parent=1 // pred_region
      _
    $region21: #{rnnlm_forward.1} parent=1 // pred_fallthru
      _
    // Predicated region
    $region22: #{rnnlm_forward.1} parent=1 // pred_check
      _
    $region23: #{rnnlm_forward.1} parent=1 // pred_check_branch
      %35 = sbr.rel (0) target = $region25
    $region24: #{rnnlm_forward.1} parent=1 // pred_region
      _
    $region25: #{rnnlm_forward.1} parent=1 // pred_fallthru
      _
    // Predicated region
    $region26: #{rnnlm_forward.1} parent=1 // pred_check
      _
    $region27: #{rnnlm_forward.1} parent=1 // pred_check_branch
      %37 = sbr.rel (0) target = $region29
    $region28: #{rnnlm_forward.1} parent=1 // pred_region
      _
    $region29: #{rnnlm_forward.1} parent=1 // pred_fallthru
      _
    // Predicated region
    $region30: #{rnnlm_forward.1} parent=1 // pred_check
      _
    $region31: #{rnnlm_forward.1} parent=1 // pred_check_branch
      %39 = sbr.rel (0) target = $region33
    $region32: #{rnnlm_forward.1} parent=1 // pred_region
      _
    $region33: #{rnnlm_forward.1} parent=1 // pred_fallthru
      _
    // Predicated region
    $region34: #{rnnlm_forward.1} parent=1 // pred_check
      _
    $region35: #{rnnlm_forward.1} parent=1 // pred_check_branch
      %41 = sbr.rel (0) target = $region37
    $region36: #{rnnlm_forward.1} parent=1 // pred_region
      _
    $region37: #{rnnlm_forward.1} parent=1 // pred_fallthru
      _
    // Predicated region
    $region38: #{rnnlm_forward.1} parent=1 // pred_check
      _
    $region39: #{rnnlm_forward.1} parent=1 // pred_check_branch
      %43 = sbr.rel (0) target = $region41
    $region40: #{rnnlm_forward.1} parent=1 // pred_region
      _
    $region41: #{rnnlm_forward.1} parent=1 // pred_fallthru
      _
    // Predicated region
    $region42: #{rnnlm_forward.1} parent=1 // pred_check
      _
    $region43: #{rnnlm_forward.1} parent=1 // pred_check_branch
      %45 = sbr.rel (0) target = $region45
    $region44: #{rnnlm_forward.1} parent=1 // pred_region
      _
    $region45: #{rnnlm_forward.1} parent=1 // pred_fallthru
      _
    // Predicated region
    $region46: #{rnnlm_forward.1} parent=1 // pred_check
      _
    $region47: #{rnnlm_forward.1} parent=1 // pred_check_branch
      %47 = sbr.rel (0) target = $region49
    $region48: #{rnnlm_forward.1} parent=1 // pred_region
      _
    $region49: #{rnnlm_forward.1} parent=1 // pred_fallthru
      _
    // Predicated region
    $region50: #{rnnlm_forward.1} parent=1 // pred_check
      _
    $region51: #{rnnlm_forward.1} parent=1 // pred_check_branch
      %49 = sbr.rel (0) target = $region53
    $region52: #{rnnlm_forward.1} parent=1 // pred_region
      _
    $region53: #{rnnlm_forward.1} parent=1 // pred_fallthru
      _
    // Predicated region
    $region54: #{rnnlm_forward.1} parent=1 // pred_check
      _
    $region55: #{rnnlm_forward.1} parent=1 // pred_check_branch
      %51 = sbr.rel (0) target = $region57
    $region56: #{rnnlm_forward.1} parent=1 // pred_region
      _
    $region57: #{rnnlm_forward.1} parent=1 // pred_fallthru
      _
    %v53 = vld [vmem:[%s0] sm:$0xf]
    %v54 = vld [vmem:[%s0 + $0x4] sm:$0xf]
    %v55 = vld [vmem:[%s0 + $0x8] sm:$0xf]
    %v56 = vld [vmem:[%s0 + $0xc] sm:$0xf]
    %v57 = vld [vmem:[%s0 + $0x10] sm:$0xf]
    %v58 = vld [vmem:[%s0 + $0x14] sm:$0xf]
    %v59 = vld [vmem:[%s0 + $0x18] sm:$0xf]
    %v60 = vld [vmem:[%s0 + $0x1c] sm:$0xf]
    %v61 = vld [vmem:[%s0 + $0x20] sm:$0xf]
    %v62 = vld [vmem:[%s0 + $0x24] sm:$0xf]
    %v63 = vld [vmem:[%s1] sm:$0xf]
    %v64 = vld [vmem:[%s1 + $0x4] sm:$0xf]
    %v65 = vld [vmem:[%s3] sm:$0x1]
    %v67 = vlaneseq
    %v68 = vshrl.u32 %v67, 7
    %v69 = vsub.s32 0, %v68
    %v70 = vrot.slane %v65, %v69
    %v82 = vunpack.c.l.b16 %v53
    %v83 = vunpack.c.l.b16 %v54
    %v84 = vunpack.c.l.b16 %v55
    %v85 = vunpack.c.l.b16 %v56
    %v86 = vunpack.c.l.b16 %v57
    %v87 = vunpack.c.l.b16 %v58
    %v88 = vunpack.c.l.b16 %v59
    %v89 = vunpack.c.l.b16 %v60
    %v90 = vunpack.c.l.b16 %v61
    %v91 = vunpack.c.l.b16 %v62
    %v92 = vpack.c.b16 %v83, %v82
    %v93 = vpack.c.b16 %v85, %v84
    %v94 = vpack.c.b16 %v87, %v86
    %v95 = vpack.c.b16 %v89, %v88
    %v96 = vpack.c.b16 %v91, %v90
    %v99 = vunpack.c.l.b16 %v63
    %v100 = vunpack.c.l.b16 %v64
    %v101 = vpack.c.b16 %v100, %v99
    %vm103 = vcmask 130048
    %v105 = vsel %vm103, %v92, 0
    %v108 = vsel %vm103, %v93, 0
    %v111 = vsel %vm103, %v94, 0
    %v114 = vsel %vm103, %v95, 0
    %v117 = vsel %vm103, %v96, 0
    %119 = vmatprep.subr.bf16.mxu0 0
    %120 = vmatpush1.bf16.msra.mxu0 0
    %121 = vmatprep.subr.bf16.mxu0 0
    %122 = vmatpush1.bf16.msra.mxu0 0
    %123 = vmatprep.subr.bf16.mxu0 0
    %124 = vmatpush1.bf16.msra.mxu0 0
    %125 = vmatprep.subr.bf16.mxu0 0
    %126 = vmatpush1.bf16.msra.mxu0 0
    %127 = vmatprep.subr.bf16.mxu0 0
    %128 = vmatpush1.bf16.msra.mxu0 0
    %129 = vmatprep.subr.bf16.mxu0 0
    %130 = vmatpush1.bf16.msra.mxu0 0
    %131 = vmatprep.subr.bf16.mxu0 0
    %132 = vmatpush1.bf16.msra.mxu0 0
    %133 = vmatprep.subr.bf16.mxu0 0
    %134 = vmatpush1.bf16.msra.mxu0 %v101
    %135 = vmatprep.subr.bf16.mxu0 0
    %136 = vmatpush2.bf16.msra.mxu0 0
    %137 = vmatprep.subr.bf16.mxu0 0
    %138 = vmatpush2.bf16.msra.mxu0 0
    %139 = vmatprep.subr.bf16.mxu0 0
    %140 = vmatpush2.bf16.msra.mxu0 0
    %141 = vmatprep.subr.bf16.mxu0 0
    %142 = vmatpush2.bf16.msra.mxu0 0
    %143 = vmatprep.subr.bf16.mxu0 0
    %144 = vmatpush2.bf16.msra.mxu0 0
    %145 = vmatprep.subr.bf16.mxu0 0
    %146 = vmatpush2.bf16.msra.mxu0 0
    %147 = vmatprep.subr.bf16.mxu0 0
    %148 = vmatpush2.bf16.msra.mxu0 0
    %149 = vmatprep.subr.bf16.mxu0 0
    %150 = vmatpush2.bf16.msra.mxu0 0
    %151 = vmatprep.mubr.bf16.mxu0 0
    %152 = vmatmul.mubr.bf16.gmra.mxu0 %v105
    %v153 = vpop.f32.mrf.mxu0
    %v154 = vadd.f32 %v70, %v153
    %v155 = vpop.f32.mrf.mxu0
    %v156 = vpop.f32.mrf.mxu0
    %v157 = vadd.f32 %v70, %v156
    %v158 = vpop.f32.mrf.mxu0
    %159 = vmatprep.mubr.bf16.mxu0 0
    %160 = vmatmul.mubr.bf16.gmra.mxu0 %v108
    %v161 = vpop.f32.mrf.mxu0
    %v162 = vadd.f32 %v70, %v161
    %v163 = vpop.f32.mrf.mxu0
    %v164 = vpop.f32.mrf.mxu0
    %v165 = vadd.f32 %v70, %v164
    %v166 = vpop.f32.mrf.mxu0
    %167 = vmatprep.mubr.bf16.mxu0 0
    %168 = vmatmul.mubr.bf16.gmra.mxu0 %v111
    %v169 = vpop.f32.mrf.mxu0
    %v170 = vadd.f32 %v70, %v169
    %v171 = vpop.f32.mrf.mxu0
    %v172 = vpop.f32.mrf.mxu0
    %v173 = vadd.f32 %v70, %v172
    %v174 = vpop.f32.mrf.mxu0
    %175 = vmatprep.mubr.bf16.mxu0 0
    %176 = vmatmul.mubr.bf16.gmra.mxu0 %v114
    %v177 = vpop.f32.mrf.mxu0
    %v178 = vadd.f32 %v70, %v177
    %v179 = vpop.f32.mrf.mxu0
    %v180 = vpop.f32.mrf.mxu0
    %v181 = vadd.f32 %v70, %v180
    %v182 = vpop.f32.mrf.mxu0
    %183 = vmatprep.mubr.bf16.mxu0 0
    %184 = vmatmul.mubr.bf16.gmra.mxu0 %v117
    %v185 = vpop.f32.mrf.mxu0
    %v186 = vadd.f32 %v70, %v185
    %v187 = vpop.f32.mrf.mxu0
    %v188 = vpop.f32.mrf.mxu0
    %v189 = vadd.f32 %v70, %v188
    %v190 = vpop.f32.mrf.mxu0
    %191 = vdwg.mxu0
    %192 = vst [vmem:[#allocation2] sm:$0xff] %v154
    %193 = vst [vmem:[#allocation2 + $0x8] sm:$0xff] %v157
    %194 = vst [vmem:[#allocation2 + $0x10] sm:$0xff] %v162
    %195 = vst [vmem:[#allocation2 + $0x18] sm:$0xff] %v165
    %196 = vst [vmem:[#allocation2 + $0x20] sm:$0xff] %v170
    %197 = vst [vmem:[#allocation2 + $0x28] sm:$0xff] %v173
    %198 = vst [vmem:[#allocation2 + $0x30] sm:$0xff] %v178
    %199 = vst [vmem:[#allocation2 + $0x38] sm:$0xff] %v181
    %200 = vst [vmem:[#allocation2 + $0x40] sm:$0xff] %v186
    %201 = vst [vmem:[#allocation2 + $0x48] sm:$0xff] %v189
    %v202 = vld [vmem:[%s2] sm:$0xf]
    %v203 = vld [vmem:[%s2 + $0x4] sm:$0xf]
    %v204 = vld [vmem:[%s2 + $0x8] sm:$0xf]
    %v205 = vld [vmem:[%s2 + $0xc] sm:$0xf]
    %v206 = vld [vmem:[%s10] sm:$0xff]
    %v207 = vld [vmem:[%s11] sm:$0xff]
    %v208 = vld [vmem:[#allocation2] sm:$0xff]
    %v209 = vpack.c.bf16 %v206, %v206
    %v214 = vunpack.c.l.b16 %v202
    %v215 = vunpack.c.l.b16 %v203
    %v216 = vunpack.c.l.b16 %v204
    %v217 = vunpack.c.l.b16 %v205
    %v218 = vpack.c.b16 %v215, %v214
    %v219 = vpack.c.b16 %v217, %v216
    %vm222 = vcmask 261120
    %v224 = vsel %vm222, %v209, 0
    %226 = vmatprep.subr.bf16.mxu0 0
    %227 = vmatpush1.bf16.msra.mxu0 0
    %228 = vmatprep.subr.bf16.mxu0 0
    %229 = vmatpush1.bf16.msra.mxu0 0
    %230 = vmatprep.subr.bf16.mxu0 0
    %231 = vmatpush1.bf16.msra.mxu0 0
    %232 = vmatprep.subr.bf16.mxu0 0
    %233 = vmatpush1.bf16.msra.mxu0 0
    %234 = vmatprep.subr.bf16.mxu0 0
    %235 = vmatpush1.bf16.msra.mxu0 0
    %236 = vmatprep.subr.bf16.mxu0 0
    %237 = vmatpush1.bf16.msra.mxu0 0
    %238 = vmatprep.subr.bf16.mxu0 0
    %239 = vmatpush1.bf16.msra.mxu0 %v219
    %240 = vmatprep.subr.bf16.mxu0 0
    %241 = vmatpush1.bf16.msra.mxu0 %v218
    %242 = vmatprep.subr.bf16.mxu0 0
    %243 = vmatpush2.bf16.msra.mxu0 0
    %244 = vmatprep.subr.bf16.mxu0 0
    %245 = vmatpush2.bf16.msra.mxu0 0
    %246 = vmatprep.subr.bf16.mxu0 0
    %247 = vmatpush2.bf16.msra.mxu0 0
    %248 = vmatprep.subr.bf16.mxu0 0
    %249 = vmatpush2.bf16.msra.mxu0 0
    %250 = vmatprep.subr.bf16.mxu0 0
    %251 = vmatpush2.bf16.msra.mxu0 0
    %252 = vmatprep.subr.bf16.mxu0 0
    %253 = vmatpush2.bf16.msra.mxu0 0
    %254 = vmatprep.subr.bf16.mxu0 0
    %255 = vmatpush2.bf16.msra.mxu0 0
    %256 = vmatprep.subr.bf16.mxu0 0
    %257 = vmatpush2.bf16.msra.mxu0 0
    %258 = vmatprep.mubr.bf16.mxu0 0
    %259 = vmatmul.mubr.bf16.gmra.mxu0 %v224
    %v260 = vpop.f32.mrf.mxu0
    %v261 = vadd.f32 0.0, %v260
    %v262 = vpop.f32.mrf.mxu0
    %v263 = vpop.f32.mrf.mxu0
    %v264 = vpop.f32.mrf.mxu0
    %265 = vdwg.mxu0
    %v266 = vadd.f32 %v208, %v261
    %v267 = vxor.u32 %v266, 2147483648
    %v268 = vmul.f32 %v267, 1.442695
    %v269 = vpow.pop %v268
    %v270 = vadd.f32 %v269, 1.0
    %v271 = vrcp.pop %v270
    %v272 = vmul.f32 1.0, %v271
    %v273 = vtanh.pop %v266
    %275 = vrot.lane.b32.xlu0 %v207, 32
    %v276 = vpop.permute.xlu0 %275
    %v278 = vmul.f32 %v272, %v276
    %280 = vrot.lane.b32.xlu0 %v273, 32
    %v281 = vpop.permute.xlu0 %280
    %v283 = vmul.f32 %v272, %v281
    %285 = vrot.lane.b32.xlu0 %v283, 32
    %v286 = vpop.permute.xlu0 %285
    %v288 = vadd.f32 %v278, %v286
    %v289 = vtanh.pop %v288
    %291 = vrot.lane.b32.xlu0 %v289, 32
    %v292 = vpop.permute.xlu0 %291
    %v294 = vmul.f32 %v272, %v292
    %296 = vrot.lane.b32.xlu0 %v294, 64
    %v297 = vpop.permute.xlu0 %296
    %299 = vst.msk [vmem:[#allocation3] sm:$0xff] %vm222, %v297
    %s300 = scalar_lea.vmem [#allocation2], 8
    %v301 = vld [vmem:[%s300] sm:$0xff]
    %v302 = vpack.c.bf16 %v294, %v294
    %304 = vrot.lane.b32.xlu0 %v302, 64
    %v305 = vpop.permute.xlu0 %304
    %v307 = vsel %vm222, %v305, 0
    %309 = vmatprep.subr.bf16.mxu0 0
    %310 = vmatpush1.bf16.msra.mxu0 0
    %311 = vmatprep.subr.bf16.mxu0 0
    %312 = vmatpush1.bf16.msra.mxu0 0
    %313 = vmatprep.subr.bf16.mxu0 0
    %314 = vmatpush1.bf16.msra.mxu0 0
    %315 = vmatprep.subr.bf16.mxu0 0
    %316 = vmatpush1.bf16.msra.mxu0 0
    %317 = vmatprep.subr.bf16.mxu0 0
    %318 = vmatpush1.bf16.msra.mxu0 0
    %319 = vmatprep.subr.bf16.mxu0 0
    %320 = vmatpush1.bf16.msra.mxu0 0
    %321 = vmatprep.subr.bf16.mxu0 0
    %322 = vmatpush1.bf16.msra.mxu0 %v219
    %323 = vmatprep.subr.bf16.mxu0 0
    %324 = vmatpush1.bf16.msra.mxu0 %v218
    %325 = vmatprep.subr.bf16.mxu0 0
    %326 = vmatpush2.bf16.msra.mxu0 0
    %327 = vmatprep.subr.bf16.mxu0 0
    %328 = vmatpush2.bf16.msra.mxu0 0
    %329 = vmatprep.subr.bf16.mxu0 0
    %330 = vmatpush2.bf16.msra.mxu0 0
    %331 = vmatprep.subr.bf16.mxu0 0
    %332 = vmatpush2.bf16.msra.mxu0 0
    %333 = vmatprep.subr.bf16.mxu0 0
    %334 = vmatpush2.bf16.msra.mxu0 0
    %335 = vmatprep.subr.bf16.mxu0 0
    %336 = vmatpush2.bf16.msra.mxu0 0
    %337 = vmatprep.subr.bf16.mxu0 0
    %338 = vmatpush2.bf16.msra.mxu0 0
    %339 = vmatprep.subr.bf16.mxu0 0
    %340 = vmatpush2.bf16.msra.mxu0 0
    %341 = vmatprep.mubr.bf16.mxu0 0
    %342 = vmatmul.mubr.bf16.gmra.mxu0 %v307
    %v343 = vpop.f32.mrf.mxu0
    %v344 = vadd.f32 0.0, %v343
    %v345 = vpop.f32.mrf.mxu0
    %v346 = vpop.f32.mrf.mxu0
    %v347 = vpop.f32.mrf.mxu0
    %348 = vdwg.mxu0
    %v349 = vadd.f32 %v301, %v344
    %v350 = vxor.u32 %v349, 2147483648
    %v351 = vmul.f32 %v350, 1.442695
    %v352 = vpow.pop %v351
    %v353 = vadd.f32 %v352, 1.0
    %v354 = vrcp.pop %v353
    %v355 = vmul.f32 1.0, %v354
    %v356 = vtanh.pop %v349
    %v357 = vmul.f32 %v355, %v288
    %359 = vrot.lane.b32.xlu0 %v356, 32
    %v360 = vpop.permute.xlu0 %359
    %v362 = vmul.f32 %v355, %v360
    %364 = vrot.lane.b32.xlu0 %v362, 32
    %v365 = vpop.permute.xlu0 %364
    %v367 = vadd.f32 %v357, %v365
    %v368 = vtanh.pop %v367
    %370 = vrot.lane.b32.xlu0 %v368, 32
    %v371 = vpop.permute.xlu0 %370
    %v373 = vmul.f32 %v355, %v371
    %375 = vrot.lane.b32.xlu0 %v373, 64
    %v376 = vpop.permute.xlu0 %375
    %s378 = scalar_lea.vmem [#allocation3], 8
    %379 = vst.msk [vmem:[%s378] sm:$0xff] %vm222, %v376
    %s380 = scalar_lea.vmem [#allocation2], 16
    %v381 = vld [vmem:[%s380] sm:$0xff]
    %v382 = vpack.c.bf16 %v373, %v373
    %384 = vrot.lane.b32.xlu0 %v382, 64
    %v385 = vpop.permute.xlu0 %384
    %v387 = vsel %vm222, %v385, 0
    %389 = vmatprep.subr.bf16.mxu0 0
    %390 = vmatpush1.bf16.msra.mxu0 0
    %391 = vmatprep.subr.bf16.mxu0 0
    %392 = vmatpush1.bf16.msra.mxu0 0
    %393 = vmatprep.subr.bf16.mxu0 0
    %394 = vmatpush1.bf16.msra.mxu0 0
    %395 = vmatprep.subr.bf16.mxu0 0
    %396 = vmatpush1.bf16.msra.mxu0 0
    %397 = vmatprep.subr.bf16.mxu0 0
    %398 = vmatpush1.bf16.msra.mxu0 0
    %399 = vmatprep.subr.bf16.mxu0 0
    %400 = vmatpush1.bf16.msra.mxu0 0
    %401 = vmatprep.subr.bf16.mxu0 0
    %402 = vmatpush1.bf16.msra.mxu0 %v219
    %403 = vmatprep.subr.bf16.mxu0 0
    %404 = vmatpush1.bf16.msra.mxu0 %v218
    %405 = vmatprep.subr.bf16.mxu0 0
    %406 = vmatpush2.bf16.msra.mxu0 0
    %407 = vmatprep.subr.bf16.mxu0 0
    %408 = vmatpush2.bf16.msra.mxu0 0
    %409 = vmatprep.subr.bf16.mxu0 0
    %410 = vmatpush2.bf16.msra.mxu0 0
    %411 = vmatprep.subr.bf16.mxu0 0
    %412 = vmatpush2.bf16.msra.mxu0 0
    %413 = vmatprep.subr.bf16.mxu0 0
    %414 = vmatpush2.bf16.msra.mxu0 0
    %415 = vmatprep.subr.bf16.mxu0 0
    %416 = vmatpush2.bf16.msra.mxu0 0
    %417 = vmatprep.subr.bf16.mxu0 0
    %418 = vmatpush2.bf16.msra.mxu0 0
    %419 = vmatprep.subr.bf16.mxu0 0
    %420 = vmatpush2.bf16.msra.mxu0 0
    %421 = vmatprep.mubr.bf16.mxu0 0
    %422 = vmatmul.mubr.bf16.gmra.mxu0 %v387
    %v423 = vpop.f32.mrf.mxu0
    %v424 = vadd.f32 0.0, %v423
    %v425 = vpop.f32.mrf.mxu0
    %v426 = vpop.f32.mrf.mxu0
    %v427 = vpop.f32.mrf.mxu0
    %428 = vdwg.mxu0
    %v429 = vadd.f32 %v381, %v424
    %v430 = vxor.u32 %v429, 2147483648
    %v431 = vmul.f32 %v430, 1.442695
    %v432 = vpow.pop %v431
    %v433 = vadd.f32 %v432, 1.0
    %v434 = vrcp.pop %v433
    %v435 = vmul.f32 1.0, %v434
    %v436 = vtanh.pop %v429
    %v437 = vmul.f32 %v435, %v367
    %439 = vrot.lane.b32.xlu0 %v436, 32
    %v440 = vpop.permute.xlu0 %439
    %v442 = vmul.f32 %v435, %v440
    %444 = vrot.lane.b32.xlu0 %v442, 32
    %v445 = vpop.permute.xlu0 %444
    %v447 = vadd.f32 %v437, %v445
    %v448 = vtanh.pop %v447
    %450 = vrot.lane.b32.xlu0 %v448, 32
    %v451 = vpop.permute.xlu0 %450
    %v453 = vmul.f32 %v435, %v451
    %455 = vrot.lane.b32.xlu0 %v453, 64
    %v456 = vpop.permute.xlu0 %455
    %s458 = scalar_lea.vmem [#allocation3], 16
    %459 = vst.msk [vmem:[%s458] sm:$0xff] %vm222, %v456
    %s460 = scalar_lea.vmem [#allocation2], 24
    %v461 = vld [vmem:[%s460] sm:$0xff]
    %v462 = vpack.c.bf16 %v453, %v453
    %464 = vrot.lane.b32.xlu0 %v462, 64
    %v465 = vpop.permute.xlu0 %464
    %v467 = vsel %vm222, %v465, 0
    %469 = vmatprep.subr.bf16.mxu0 0
    %470 = vmatpush1.bf16.msra.mxu0 0
    %471 = vmatprep.subr.bf16.mxu0 0
    %472 = vmatpush1.bf16.msra.mxu0 0
    %473 = vmatprep.subr.bf16.mxu0 0
    %474 = vmatpush1.bf16.msra.mxu0 0
    %475 = vmatprep.subr.bf16.mxu0 0
    %476 = vmatpush1.bf16.msra.mxu0 0
    %477 = vmatprep.subr.bf16.mxu0 0
    %478 = vmatpush1.bf16.msra.mxu0 0
    %479 = vmatprep.subr.bf16.mxu0 0
    %480 = vmatpush1.bf16.msra.mxu0 0
    %481 = vmatprep.subr.bf16.mxu0 0
    %482 = vmatpush1.bf16.msra.mxu0 %v219
    %483 = vmatprep.subr.bf16.mxu0 0
    %484 = vmatpush1.bf16.msra.mxu0 %v218
    %485 = vmatprep.subr.bf16.mxu0 0
    %486 = vmatpush2.bf16.msra.mxu0 0
    %487 = vmatprep.subr.bf16.mxu0 0
    %488 = vmatpush2.bf16.msra.mxu0 0
    %489 = vmatprep.subr.bf16.mxu0 0
    %490 = vmatpush2.bf16.msra.mxu0 0
    %491 = vmatprep.subr.bf16.mxu0 0
    %492 = vmatpush2.bf16.msra.mxu0 0
    %493 = vmatprep.subr.bf16.mxu0 0
    %494 = vmatpush2.bf16.msra.mxu0 0
    %495 = vmatprep.subr.bf16.mxu0 0
    %496 = vmatpush2.bf16.msra.mxu0 0
    %497 = vmatprep.subr.bf16.mxu0 0
    %498 = vmatpush2.bf16.msra.mxu0 0
    %499 = vmatprep.subr.bf16.mxu0 0
    %500 = vmatpush2.bf16.msra.mxu0 0
    %501 = vmatprep.mubr.bf16.mxu0 0
    %502 = vmatmul.mubr.bf16.gmra.mxu0 %v467
    %v503 = vpop.f32.mrf.mxu0
    %v504 = vadd.f32 0.0, %v503
    %v505 = vpop.f32.mrf.mxu0
    %v506 = vpop.f32.mrf.mxu0
    %v507 = vpop.f32.mrf.mxu0
    %508 = vdwg.mxu0
    %v509 = vadd.f32 %v461, %v504
    %v510 = vxor.u32 %v509, 2147483648
    %v511 = vmul.f32 %v510, 1.442695
    %v512 = vpow.pop %v511
    %v513 = vadd.f32 %v512, 1.0
    %v514 = vrcp.pop %v513
    %v515 = vmul.f32 1.0, %v514
    %v516 = vtanh.pop %v509
    %v517 = vmul.f32 %v515, %v447
    %519 = vrot.lane.b32.xlu0 %v516, 32
    %v520 = vpop.permute.xlu0 %519
    %v522 = vmul.f32 %v515, %v520
    %524 = vrot.lane.b32.xlu0 %v522, 32
    %v525 = vpop.permute.xlu0 %524
    %v527 = vadd.f32 %v517, %v525
    %v528 = vtanh.pop %v527
    %530 = vrot.lane.b32.xlu0 %v528, 32
    %v531 = vpop.permute.xlu0 %530
    %v533 = vmul.f32 %v515, %v531
    %535 = vrot.lane.b32.xlu0 %v533, 64
    %v536 = vpop.permute.xlu0 %535
    %s538 = scalar_lea.vmem [#allocation3], 24
    %539 = vst.msk [vmem:[%s538] sm:$0xff] %vm222, %v536
    %s540 = scalar_lea.vmem [#allocation2], 32
    %v541 = vld [vmem:[%s540] sm:$0xff]
    %v542 = vpack.c.bf16 %v533, %v533
    %544 = vrot.lane.b32.xlu0 %v542, 64
    %v545 = vpop.permute.xlu0 %544
    %v547 = vsel %vm222, %v545, 0
    %549 = vmatprep.subr.bf16.mxu0 0
    %550 = vmatpush1.bf16.msra.mxu0 0
    %551 = vmatprep.subr.bf16.mxu0 0
    %552 = vmatpush1.bf16.msra.mxu0 0
    %553 = vmatprep.subr.bf16.mxu0 0
    %554 = vmatpush1.bf16.msra.mxu0 0
    %555 = vmatprep.subr.bf16.mxu0 0
    %556 = vmatpush1.bf16.msra.mxu0 0
    %557 = vmatprep.subr.bf16.mxu0 0
    %558 = vmatpush1.bf16.msra.mxu0 0
    %559 = vmatprep.subr.bf16.mxu0 0
    %560 = vmatpush1.bf16.msra.mxu0 0
    %561 = vmatprep.subr.bf16.mxu0 0
    %562 = vmatpush1.bf16.msra.mxu0 %v219
    %563 = vmatprep.subr.bf16.mxu0 0
    %564 = vmatpush1.bf16.msra.mxu0 %v218
    %565 = vmatprep.subr.bf16.mxu0 0
    %566 = vmatpush2.bf16.msra.mxu0 0
    %567 = vmatprep.subr.bf16.mxu0 0
    %568 = vmatpush2.bf16.msra.mxu0 0
    %569 = vmatprep.subr.bf16.mxu0 0
    %570 = vmatpush2.bf16.msra.mxu0 0
    %571 = vmatprep.subr.bf16.mxu0 0
    %572 = vmatpush2.bf16.msra.mxu0 0
    %573 = vmatprep.subr.bf16.mxu0 0
    %574 = vmatpush2.bf16.msra.mxu0 0
    %575 = vmatprep.subr.bf16.mxu0 0
    %576 = vmatpush2.bf16.msra.mxu0 0
    %577 = vmatprep.subr.bf16.mxu0 0
    %578 = vmatpush2.bf16.msra.mxu0 0
    %579 = vmatprep.subr.bf16.mxu0 0
    %580 = vmatpush2.bf16.msra.mxu0 0
    %581 = vmatprep.mubr.bf16.mxu0 0
    %582 = vmatmul.mubr.bf16.gmra.mxu0 %v547
    %v583 = vpop.f32.mrf.mxu0
    %v584 = vadd.f32 0.0, %v583
    %v585 = vpop.f32.mrf.mxu0
    %v586 = vpop.f32.mrf.mxu0
    %v587 = vpop.f32.mrf.mxu0
    %588 = vdwg.mxu0
    %v589 = vadd.f32 %v541, %v584
    %v590 = vxor.u32 %v589, 2147483648
    %v591 = vmul.f32 %v590, 1.442695
    %v592 = vpow.pop %v591
    %v593 = vadd.f32 %v592, 1.0
    %v594 = vrcp.pop %v593
    %v595 = vmul.f32 1.0, %v594
    %v596 = vtanh.pop %v589
    %v597 = vmul.f32 %v595, %v527
    %599 = vrot.lane.b32.xlu0 %v596, 32
    %v600 = vpop.permute.xlu0 %599
    %v602 = vmul.f32 %v595, %v600
    %604 = vrot.lane.b32.xlu0 %v602, 32
    %v605 = vpop.permute.xlu0 %604
    %v607 = vadd.f32 %v597, %v605
    %v608 = vtanh.pop %v607
    %610 = vrot.lane.b32.xlu0 %v608, 32
    %v611 = vpop.permute.xlu0 %610
    %v613 = vmul.f32 %v595, %v611
    %615 = vrot.lane.b32.xlu0 %v613, 64
    %v616 = vpop.permute.xlu0 %615
    %s618 = scalar_lea.vmem [#allocation3], 32
    %619 = vst.msk [vmem:[%s618] sm:$0xff] %vm222, %v616
    %s620 = scalar_lea.vmem [#allocation2], 40
    %v621 = vld [vmem:[%s620] sm:$0xff]
    %v622 = vpack.c.bf16 %v613, %v613
    %624 = vrot.lane.b32.xlu0 %v622, 64
    %v625 = vpop.permute.xlu0 %624
    %v627 = vsel %vm222, %v625, 0
    %629 = vmatprep.subr.bf16.mxu0 0
    %630 = vmatpush1.bf16.msra.mxu0 0
    %631 = vmatprep.subr.bf16.mxu0 0
    %632 = vmatpush1.bf16.msra.mxu0 0
    %633 = vmatprep.subr.bf16.mxu0 0
    %634 = vmatpush1.bf16.msra.mxu0 0
    %635 = vmatprep.subr.bf16.mxu0 0
    %636 = vmatpush1.bf16.msra.mxu0 0
    %637 = vmatprep.subr.bf16.mxu0 0
    %638 = vmatpush1.bf16.msra.mxu0 0
    %639 = vmatprep.subr.bf16.mxu0 0
    %640 = vmatpush1.bf16.msra.mxu0 0
    %641 = vmatprep.subr.bf16.mxu0 0
    %642 = vmatpush1.bf16.msra.mxu0 %v219
    %643 = vmatprep.subr.bf16.mxu0 0
    %644 = vmatpush1.bf16.msra.mxu0 %v218
    %645 = vmatprep.subr.bf16.mxu0 0
    %646 = vmatpush2.bf16.msra.mxu0 0
    %647 = vmatprep.subr.bf16.mxu0 0
    %648 = vmatpush2.bf16.msra.mxu0 0
    %649 = vmatprep.subr.bf16.mxu0 0
    %650 = vmatpush2.bf16.msra.mxu0 0
    %651 = vmatprep.subr.bf16.mxu0 0
    %652 = vmatpush2.bf16.msra.mxu0 0
    %653 = vmatprep.subr.bf16.mxu0 0
    %654 = vmatpush2.bf16.msra.mxu0 0
    %655 = vmatprep.subr.bf16.mxu0 0
    %656 = vmatpush2.bf16.msra.mxu0 0
    %657 = vmatprep.subr.bf16.mxu0 0
    %658 = vmatpush2.bf16.msra.mxu0 0
    %659 = vmatprep.subr.bf16.mxu0 0
    %660 = vmatpush2.bf16.msra.mxu0 0
    %661 = vmatprep.mubr.bf16.mxu0 0
    %662 = vmatmul.mubr.bf16.gmra.mxu0 %v627
    %v663 = vpop.f32.mrf.mxu0
    %v664 = vadd.f32 0.0, %v663
    %v665 = vpop.f32.mrf.mxu0
    %v666 = vpop.f32.mrf.mxu0
    %v667 = vpop.f32.mrf.mxu0
    %668 = vdwg.mxu0
    %v669 = vadd.f32 %v621, %v664
    %v670 = vxor.u32 %v669, 2147483648
    %v671 = vmul.f32 %v670, 1.442695
    %v672 = vpow.pop %v671
    %v673 = vadd.f32 %v672, 1.0
    %v674 = vrcp.pop %v673
    %v675 = vmul.f32 1.0, %v674
    %v676 = vtanh.pop %v669
    %v677 = vmul.f32 %v675, %v607
    %679 = vrot.lane.b32.xlu0 %v676, 32
    %v680 = vpop.permute.xlu0 %679
    %v682 = vmul.f32 %v675, %v680
    %684 = vrot.lane.b32.xlu0 %v682, 32
    %v685 = vpop.permute.xlu0 %684
    %v687 = vadd.f32 %v677, %v685
    %v688 = vtanh.pop %v687
    %690 = vrot.lane.b32.xlu0 %v688, 32
    %v691 = vpop.permute.xlu0 %690
    %v693 = vmul.f32 %v675, %v691
    %695 = vrot.lane.b32.xlu0 %v693, 64
    %v696 = vpop.permute.xlu0 %695
    %s698 = scalar_lea.vmem [#allocation3], 40
    %699 = vst.msk [vmem:[%s698] sm:$0xff] %vm222, %v696
    %s700 = scalar_lea.vmem [#allocation2], 48
    %v701 = vld [vmem:[%s700] sm:$0xff]
    %v702 = vpack.c.bf16 %v693, %v693
    %704 = vrot.lane.b32.xlu0 %v702, 64
    %v705 = vpop.permute.xlu0 %704
    %v707 = vsel %vm222, %v705, 0
    %709 = vmatprep.subr.bf16.mxu0 0
    %710 = vmatpush1.bf16.msra.mxu0 0
    %711 = vmatprep.subr.bf16.mxu0 0
    %712 = vmatpush1.bf16.msra.mxu0 0
    %713 = vmatprep.subr.bf16.mxu0 0
    %714 = vmatpush1.bf16.msra.mxu0 0
    %715 = vmatprep.subr.bf16.mxu0 0
    %716 = vmatpush1.bf16.msra.mxu0 0
    %717 = vmatprep.subr.bf16.mxu0 0
    %718 = vmatpush1.bf16.msra.mxu0 0
    %719 = vmatprep.subr.bf16.mxu0 0
    %720 = vmatpush1.bf16.msra.mxu0 0
    %721 = vmatprep.subr.bf16.mxu0 0
    %722 = vmatpush1.bf16.msra.mxu0 %v219
    %723 = vmatprep.subr.bf16.mxu0 0
    %724 = vmatpush1.bf16.msra.mxu0 %v218
    %725 = vmatprep.subr.bf16.mxu0 0
    %726 = vmatpush2.bf16.msra.mxu0 0
    %727 = vmatprep.subr.bf16.mxu0 0
    %728 = vmatpush2.bf16.msra.mxu0 0
    %729 = vmatprep.subr.bf16.mxu0 0
    %730 = vmatpush2.bf16.msra.mxu0 0
    %731 = vmatprep.subr.bf16.mxu0 0
    %732 = vmatpush2.bf16.msra.mxu0 0
    %733 = vmatprep.subr.bf16.mxu0 0
    %734 = vmatpush2.bf16.msra.mxu0 0
    %735 = vmatprep.subr.bf16.mxu0 0
    %736 = vmatpush2.bf16.msra.mxu0 0
    %737 = vmatprep.subr.bf16.mxu0 0
    %738 = vmatpush2.bf16.msra.mxu0 0
    %739 = vmatprep.subr.bf16.mxu0 0
    %740 = vmatpush2.bf16.msra.mxu0 0
    %741 = vmatprep.mubr.bf16.mxu0 0
    %742 = vmatmul.mubr.bf16.gmra.mxu0 %v707
    %v743 = vpop.f32.mrf.mxu0
    %v744 = vadd.f32 0.0, %v743
    %v745 = vpop.f32.mrf.mxu0
    %v746 = vpop.f32.mrf.mxu0
    %v747 = vpop.f32.mrf.mxu0
    %748 = vdwg.mxu0
    %v749 = vadd.f32 %v701, %v744
    %v750 = vxor.u32 %v749, 2147483648
    %v751 = vmul.f32 %v750, 1.442695
    %v752 = vpow.pop %v751
    %v753 = vadd.f32 %v752, 1.0
    %v754 = vrcp.pop %v753
    %v755 = vmul.f32 1.0, %v754
    %v756 = vtanh.pop %v749
    %v757 = vmul.f32 %v755, %v687
    %759 = vrot.lane.b32.xlu0 %v756, 32
    %v760 = vpop.permute.xlu0 %759
    %v762 = vmul.f32 %v755, %v760
    %764 = vrot.lane.b32.xlu0 %v762, 32
    %v765 = vpop.permute.xlu0 %764
    %v767 = vadd.f32 %v757, %v765
    %v768 = vtanh.pop %v767
    %770 = vrot.lane.b32.xlu0 %v768, 32
    %v771 = vpop.permute.xlu0 %770
    %v773 = vmul.f32 %v755, %v771
    %775 = vrot.lane.b32.xlu0 %v773, 64
    %v776 = vpop.permute.xlu0 %775
    %s778 = scalar_lea.vmem [#allocation3], 48
    %779 = vst.msk [vmem:[%s778] sm:$0xff] %vm222, %v776
    %s780 = scalar_lea.vmem [#allocation2], 56
    %v781 = vld [vmem:[%s780] sm:$0xff]
    %v782 = vpack.c.bf16 %v773, %v773
    %784 = vrot.lane.b32.xlu0 %v782, 64
    %v785 = vpop.permute.xlu0 %784
    %v787 = vsel %vm222, %v785, 0
    %789 = vmatprep.subr.bf16.mxu0 0
    %790 = vmatpush1.bf16.msra.mxu0 0
    %791 = vmatprep.subr.bf16.mxu0 0
    %792 = vmatpush1.bf16.msra.mxu0 0
    %793 = vmatprep.subr.bf16.mxu0 0
    %794 = vmatpush1.bf16.msra.mxu0 0
    %795 = vmatprep.subr.bf16.mxu0 0
    %796 = vmatpush1.bf16.msra.mxu0 0
    %797 = vmatprep.subr.bf16.mxu0 0
    %798 = vmatpush1.bf16.msra.mxu0 0
    %799 = vmatprep.subr.bf16.mxu0 0
    %800 = vmatpush1.bf16.msra.mxu0 0
    %801 = vmatprep.subr.bf16.mxu0 0
    %802 = vmatpush1.bf16.msra.mxu0 %v219
    %803 = vmatprep.subr.bf16.mxu0 0
    %804 = vmatpush1.bf16.msra.mxu0 %v218
    %805 = vmatprep.subr.bf16.mxu0 0
    %806 = vmatpush2.bf16.msra.mxu0 0
    %807 = vmatprep.subr.bf16.mxu0 0
    %808 = vmatpush2.bf16.msra.mxu0 0
    %809 = vmatprep.subr.bf16.mxu0 0
    %810 = vmatpush2.bf16.msra.mxu0 0
    %811 = vmatprep.subr.bf16.mxu0 0
    %812 = vmatpush2.bf16.msra.mxu0 0
    %813 = vmatprep.subr.bf16.mxu0 0
    %814 = vmatpush2.bf16.msra.mxu0 0
    %815 = vmatprep.subr.bf16.mxu0 0
    %816 = vmatpush2.bf16.msra.mxu0 0
    %817 = vmatprep.subr.bf16.mxu0 0
    %818 = vmatpush2.bf16.msra.mxu0 0
    %819 = vmatprep.subr.bf16.mxu0 0
    %820 = vmatpush2.bf16.msra.mxu0 0
    %821 = vmatprep.mubr.bf16.mxu0 0
    %822 = vmatmul.mubr.bf16.gmra.mxu0 %v787
    %v823 = vpop.f32.mrf.mxu0
    %v824 = vadd.f32 0.0, %v823
    %v825 = vpop.f32.mrf.mxu0
    %v826 = vpop.f32.mrf.mxu0
    %v827 = vpop.f32.mrf.mxu0
    %828 = vdwg.mxu0
    %v829 = vadd.f32 %v781, %v824
    %v830 = vxor.u32 %v829, 2147483648
    %v831 = vmul.f32 %v830, 1.442695
    %v832 = vpow.pop %v831
    %v833 = vadd.f32 %v832, 1.0
    %v834 = vrcp.pop %v833
    %v835 = vmul.f32 1.0, %v834
    %v836 = vtanh.pop %v829
    %v837 = vmul.f32 %v835, %v767
    %839 = vrot.lane.b32.xlu0 %v836, 32
    %v840 = vpop.permute.xlu0 %839
    %v842 = vmul.f32 %v835, %v840
    %844 = vrot.lane.b32.xlu0 %v842, 32
    %v845 = vpop.permute.xlu0 %844
    %v847 = vadd.f32 %v837, %v845
    %v848 = vtanh.pop %v847
    %850 = vrot.lane.b32.xlu0 %v848, 32
    %v851 = vpop.permute.xlu0 %850
    %v853 = vmul.f32 %v835, %v851
    %855 = vrot.lane.b32.xlu0 %v853, 64
    %v856 = vpop.permute.xlu0 %855
    %s858 = scalar_lea.vmem [#allocation3], 56
    %859 = vst.msk [vmem:[%s858] sm:$0xff] %vm222, %v856
    %s860 = scalar_lea.vmem [#allocation2], 64
    %v861 = vld [vmem:[%s860] sm:$0xff]
    %v862 = vpack.c.bf16 %v853, %v853
    %864 = vrot.lane.b32.xlu0 %v862, 64
    %v865 = vpop.permute.xlu0 %864
    %v867 = vsel %vm222, %v865, 0
    %869 = vmatprep.subr.bf16.mxu0 0
    %870 = vmatpush1.bf16.msra.mxu0 0
    %871 = vmatprep.subr.bf16.mxu0 0
    %872 = vmatpush1.bf16.msra.mxu0 0
    %873 = vmatprep.subr.bf16.mxu0 0
    %874 = vmatpush1.bf16.msra.mxu0 0
    %875 = vmatprep.subr.bf16.mxu0 0
    %876 = vmatpush1.bf16.msra.mxu0 0
    %877 = vmatprep.subr.bf16.mxu0 0
    %878 = vmatpush1.bf16.msra.mxu0 0
    %879 = vmatprep.subr.bf16.mxu0 0
    %880 = vmatpush1.bf16.msra.mxu0 0
    %881 = vmatprep.subr.bf16.mxu0 0
    %882 = vmatpush1.bf16.msra.mxu0 %v219
    %883 = vmatprep.subr.bf16.mxu0 0
    %884 = vmatpush1.bf16.msra.mxu0 %v218
    %885 = vmatprep.subr.bf16.mxu0 0
    %886 = vmatpush2.bf16.msra.mxu0 0
    %887 = vmatprep.subr.bf16.mxu0 0
    %888 = vmatpush2.bf16.msra.mxu0 0
    %889 = vmatprep.subr.bf16.mxu0 0
    %890 = vmatpush2.bf16.msra.mxu0 0
    %891 = vmatprep.subr.bf16.mxu0 0
    %892 = vmatpush2.bf16.msra.mxu0 0
    %893 = vmatprep.subr.bf16.mxu0 0
    %894 = vmatpush2.bf16.msra.mxu0 0
    %895 = vmatprep.subr.bf16.mxu0 0
    %896 = vmatpush2.bf16.msra.mxu0 0
    %897 = vmatprep.subr.bf16.mxu0 0
    %898 = vmatpush2.bf16.msra.mxu0 0
    %899 = vmatprep.subr.bf16.mxu0 0
    %900 = vmatpush2.bf16.msra.mxu0 0
    %901 = vmatprep.mubr.bf16.mxu0 0
    %902 = vmatmul.mubr.bf16.gmra.mxu0 %v867
    %v903 = vpop.f32.mrf.mxu0
    %v904 = vadd.f32 0.0, %v903
    %v905 = vpop.f32.mrf.mxu0
    %v906 = vpop.f32.mrf.mxu0
    %v907 = vpop.f32.mrf.mxu0
    %908 = vdwg.mxu0
    %v909 = vadd.f32 %v861, %v904
    %v910 = vxor.u32 %v909, 2147483648
    %v911 = vmul.f32 %v910, 1.442695
    %v912 = vpow.pop %v911
    %v913 = vadd.f32 %v912, 1.0
    %v914 = vrcp.pop %v913
    %v915 = vmul.f32 1.0, %v914
    %v916 = vtanh.pop %v909
    %v917 = vmul.f32 %v915, %v847
    %919 = vrot.lane.b32.xlu0 %v916, 32
    %v920 = vpop.permute.xlu0 %919
    %v922 = vmul.f32 %v915, %v920
    %924 = vrot.lane.b32.xlu0 %v922, 32
    %v925 = vpop.permute.xlu0 %924
    %v927 = vadd.f32 %v917, %v925
    %v928 = vtanh.pop %v927
    %930 = vrot.lane.b32.xlu0 %v928, 32
    %v931 = vpop.permute.xlu0 %930
    %v933 = vmul.f32 %v915, %v931
    %935 = vrot.lane.b32.xlu0 %v933, 64
    %v936 = vpop.permute.xlu0 %935
    %s938 = scalar_lea.vmem [#allocation3], 64
    %939 = vst.msk [vmem:[%s938] sm:$0xff] %vm222, %v936
    %s940 = scalar_lea.vmem [#allocation2], 72
    %v941 = vld [vmem:[%s940] sm:$0xff]
    %v942 = vpack.c.bf16 %v933, %v933
    %944 = vrot.lane.b32.xlu0 %v942, 64
    %v945 = vpop.permute.xlu0 %944
    %v947 = vsel %vm222, %v945, 0
    %949 = vmatprep.subr.bf16.mxu0 0
    %950 = vmatpush1.bf16.msra.mxu0 0
    %951 = vmatprep.subr.bf16.mxu0 0
    %952 = vmatpush1.bf16.msra.mxu0 0
    %953 = vmatprep.subr.bf16.mxu0 0
    %954 = vmatpush1.bf16.msra.mxu0 0
    %955 = vmatprep.subr.bf16.mxu0 0
    %956 = vmatpush1.bf16.msra.mxu0 0
    %957 = vmatprep.subr.bf16.mxu0 0
    %958 = vmatpush1.bf16.msra.mxu0 0
    %959 = vmatprep.subr.bf16.mxu0 0
    %960 = vmatpush1.bf16.msra.mxu0 0
    %961 = vmatprep.subr.bf16.mxu0 0
    %962 = vmatpush1.bf16.msra.mxu0 %v219
    %963 = vmatprep.subr.bf16.mxu0 0
    %964 = vmatpush1.bf16.msra.mxu0 %v218
    %965 = vmatprep.subr.bf16.mxu0 0
    %966 = vmatpush2.bf16.msra.mxu0 0
    %967 = vmatprep.subr.bf16.mxu0 0
    %968 = vmatpush2.bf16.msra.mxu0 0
    %969 = vmatprep.subr.bf16.mxu0 0
    %970 = vmatpush2.bf16.msra.mxu0 0
    %971 = vmatprep.subr.bf16.mxu0 0
    %972 = vmatpush2.bf16.msra.mxu0 0
    %973 = vmatprep.subr.bf16.mxu0 0
    %974 = vmatpush2.bf16.msra.mxu0 0
    %975 = vmatprep.subr.bf16.mxu0 0
    %976 = vmatpush2.bf16.msra.mxu0 0
    %977 = vmatprep.subr.bf16.mxu0 0
    %978 = vmatpush2.bf16.msra.mxu0 0
    %979 = vmatprep.subr.bf16.mxu0 0
    %980 = vmatpush2.bf16.msra.mxu0 0
    %981 = vmatprep.mubr.bf16.mxu0 0
    %982 = vmatmul.mubr.bf16.gmra.mxu0 %v947
    %v983 = vpop.f32.mrf.mxu0
    %v984 = vadd.f32 0.0, %v983
    %v985 = vpop.f32.mrf.mxu0
    %v986 = vpop.f32.mrf.mxu0
    %v987 = vpop.f32.mrf.mxu0
    %988 = vdwg.mxu0
    %v989 = vadd.f32 %v941, %v984
    %v990 = vxor.u32 %v989, 2147483648
    %v991 = vmul.f32 %v990, 1.442695
    %v992 = vpow.pop %v991
    %v993 = vadd.f32 %v992, 1.0
    %v994 = vrcp.pop %v993
    %v995 = vmul.f32 1.0, %v994
    %v996 = vtanh.pop %v989
    %v997 = vmul.f32 %v995, %v927
    %999 = vrot.lane.b32.xlu0 %v996, 32
    %v1000 = vpop.permute.xlu0 %999
    %v1002 = vmul.f32 %v995, %v1000
    %1004 = vrot.lane.b32.xlu0 %v1002, 32
    %v1005 = vpop.permute.xlu0 %1004
    %v1007 = vadd.f32 %v997, %v1005
    %v1008 = vtanh.pop %v1007
    %1010 = vrot.lane.b32.xlu0 %v1008, 32
    %v1011 = vpop.permute.xlu0 %1010
    %v1013 = vmul.f32 %v995, %v1011
    %1015 = vrot.lane.b32.xlu0 %v1013, 64
    %v1016 = vpop.permute.xlu0 %1015
    %s1018 = scalar_lea.vmem [#allocation3], 72
    %1019 = vst.msk [vmem:[%s1018] sm:$0xff] %vm222, %v1016
    %1020 = vst.msk [vmem:[#allocation7] sm:$0xff] %vm222, %v1016
    %1022 = vrot.lane.b32.xlu0 %v1007, 96
    %v1023 = vpop.permute.xlu0 %1022
    %1025 = vst.msk [vmem:[#allocation9] sm:$0xff] %vm222, %v1023
    %v1026 = vld [vmem:[#allocation3] sm:$0xff]
    %v1027 = vld [vmem:[#allocation3 + $0x8] sm:$0xff]
    %v1028 = vld [vmem:[#allocation3 + $0x10] sm:$0xff]
    %v1029 = vld [vmem:[#allocation3 + $0x18] sm:$0xff]
    %v1030 = vld [vmem:[#allocation3 + $0x20] sm:$0xff]
    %v1031 = vld [vmem:[#allocation3 + $0x28] sm:$0xff]
    %v1032 = vld [vmem:[#allocation3 + $0x30] sm:$0xff]
    %v1033 = vld [vmem:[#allocation3 + $0x38] sm:$0xff]
    %v1034 = vld [vmem:[#allocation3 + $0x40] sm:$0xff]
    %v1035 = vld [vmem:[#allocation3 + $0x48] sm:$0xff]
    %v1036 = vpack.c.bf16 %v1027, %v1026
    %v1037 = vpack.c.bf16 %v1029, %v1028
    %v1038 = vpack.c.bf16 %v1031, %v1030
    %v1039 = vpack.c.bf16 %v1033, %v1032
    %v1040 = vpack.c.bf16 %v1035, %v1034
    %v1041 = vld [vmem:[%s4] sm:$0xf]
    %v1042 = vld [vmem:[%s4 + $0x4] sm:$0xf]
    %v1043 = vld [vmem:[%s4 + $0x8] sm:$0xf]
    %v1044 = vld [vmem:[%s4 + $0xc] sm:$0xf]
    %v1045 = vld [vmem:[%s6] sm:$0x1]
    %v1047 = vlaneseq
    %v1048 = vshrl.u32 %v1047, 7
    %v1049 = vsub.s32 0, %v1048
    %v1050 = vrot.slane %v1045, %v1049
    %v1056 = vunpack.c.l.b16 %v1041
    %v1057 = vunpack.c.l.b16 %v1042
    %v1058 = vunpack.c.l.b16 %v1043
    %v1059 = vunpack.c.l.b16 %v1044
    %v1060 = vpack.c.b16 %v1057, %v1056
    %v1061 = vpack.c.b16 %v1059, %v1058
    %v1065 = vsel %vm222, %v1036, 0
    %v1068 = vsel %vm222, %v1037, 0
    %v1071 = vsel %vm222, %v1038, 0
    %v1074 = vsel %vm222, %v1039, 0
    %v1077 = vsel %vm222, %v1040, 0
    %1079 = vmatprep.subr.bf16.mxu0 0
    %1080 = vmatpush1.bf16.msra.mxu0 0
    %1081 = vmatprep.subr.bf16.mxu0 0
    %1082 = vmatpush1.bf16.msra.mxu0 0
    %1083 = vmatprep.subr.bf16.mxu0 0
    %1084 = vmatpush1.bf16.msra.mxu0 0
    %1085 = vmatprep.subr.bf16.mxu0 0
    %1086 = vmatpush1.bf16.msra.mxu0 0
    %1087 = vmatprep.subr.bf16.mxu0 0
    %1088 = vmatpush1.bf16.msra.mxu0 0
    %1089 = vmatprep.subr.bf16.mxu0 0
    %1090 = vmatpush1.bf16.msra.mxu0 0
    %1091 = vmatprep.subr.bf16.mxu0 0
    %1092 = vmatpush1.bf16.msra.mxu0 %v1061
    %1093 = vmatprep.subr.bf16.mxu0 0
    %1094 = vmatpush1.bf16.msra.mxu0 %v1060
    %1095 = vmatprep.subr.bf16.mxu0 0
    %1096 = vmatpush2.bf16.msra.mxu0 0
    %1097 = vmatprep.subr.bf16.mxu0 0
    %1098 = vmatpush2.bf16.msra.mxu0 0
    %1099 = vmatprep.subr.bf16.mxu0 0
    %1100 = vmatpush2.bf16.msra.mxu0 0
    %1101 = vmatprep.subr.bf16.mxu0 0
    %1102 = vmatpush2.bf16.msra.mxu0 0
    %1103 = vmatprep.subr.bf16.mxu0 0
    %1104 = vmatpush2.bf16.msra.mxu0 0
    %1105 = vmatprep.subr.bf16.mxu0 0
    %1106 = vmatpush2.bf16.msra.mxu0 0
    %1107 = vmatprep.subr.bf16.mxu0 0
    %1108 = vmatpush2.bf16.msra.mxu0 0
    %1109 = vmatprep.subr.bf16.mxu0 0
    %1110 = vmatpush2.bf16.msra.mxu0 0
    %1111 = vmatprep.mubr.bf16.mxu0 0
    %1112 = vmatmul.mubr.bf16.gmra.mxu0 %v1065
    %v1113 = vpop.f32.mrf.mxu0
    %v1114 = vadd.f32 %v1050, %v1113
    %v1115 = vpop.f32.mrf.mxu0
    %v1116 = vpop.f32.mrf.mxu0
    %v1117 = vadd.f32 %v1050, %v1116
    %v1118 = vpop.f32.mrf.mxu0
    %1119 = vmatprep.mubr.bf16.mxu0 0
    %1120 = vmatmul.mubr.bf16.gmra.mxu0 %v1068
    %v1121 = vpop.f32.mrf.mxu0
    %v1122 = vadd.f32 %v1050, %v1121
    %v1123 = vpop.f32.mrf.mxu0
    %v1124 = vpop.f32.mrf.mxu0
    %v1125 = vadd.f32 %v1050, %v1124
    %v1126 = vpop.f32.mrf.mxu0
    %1127 = vmatprep.mubr.bf16.mxu0 0
    %1128 = vmatmul.mubr.bf16.gmra.mxu0 %v1071
    %v1129 = vpop.f32.mrf.mxu0
    %v1130 = vadd.f32 %v1050, %v1129
    %v1131 = vpop.f32.mrf.mxu0
    %v1132 = vpop.f32.mrf.mxu0
    %v1133 = vadd.f32 %v1050, %v1132
    %v1134 = vpop.f32.mrf.mxu0
    %1135 = vmatprep.mubr.bf16.mxu0 0
    %1136 = vmatmul.mubr.bf16.gmra.mxu0 %v1074
    %v1137 = vpop.f32.mrf.mxu0
    %v1138 = vadd.f32 %v1050, %v1137
    %v1139 = vpop.f32.mrf.mxu0
    %v1140 = vpop.f32.mrf.mxu0
    %v1141 = vadd.f32 %v1050, %v1140
    %v1142 = vpop.f32.mrf.mxu0
    %1143 = vmatprep.mubr.bf16.mxu0 0
    %1144 = vmatmul.mubr.bf16.gmra.mxu0 %v1077
    %v1145 = vpop.f32.mrf.mxu0
    %v1146 = vadd.f32 %v1050, %v1145
    %v1147 = vpop.f32.mrf.mxu0
    %v1148 = vpop.f32.mrf.mxu0
    %v1149 = vadd.f32 %v1050, %v1148
    %v1150 = vpop.f32.mrf.mxu0
    %1151 = vdwg.mxu0
    %1152 = vst [vmem:[#allocation2] sm:$0xff] %v1114
    %1153 = vst [vmem:[#allocation2 + $0x8] sm:$0xff] %v1117
    %1154 = vst [vmem:[#allocation2 + $0x10] sm:$0xff] %v1122
    %1155 = vst [vmem:[#allocation2 + $0x18] sm:$0xff] %v1125
    %1156 = vst [vmem:[#allocation2 + $0x20] sm:$0xff] %v1130
    %1157 = vst [vmem:[#allocation2 + $0x28] sm:$0xff] %v1133
    %1158 = vst [vmem:[#allocation2 + $0x30] sm:$0xff] %v1138
    %1159 = vst [vmem:[#allocation2 + $0x38] sm:$0xff] %v1141
    %1160 = vst [vmem:[#allocation2 + $0x40] sm:$0xff] %v1146
    %1161 = vst [vmem:[#allocation2 + $0x48] sm:$0xff] %v1149
    %v1162 = vld [vmem:[%s5] sm:$0xf]
    %v1163 = vld [vmem:[%s5 + $0x4] sm:$0xf]
    %v1164 = vld [vmem:[%s5 + $0x8] sm:$0xf]
    %v1165 = vld [vmem:[%s5 + $0xc] sm:$0xf]
    %s1166 = scalar_lea.vmem %s10, 8
    %v1167 = vld [vmem:[%s1166] sm:$0xff]
    %s1168 = scalar_lea.vmem %s11, 8
    %v1169 = vld [vmem:[%s1168] sm:$0xff]
    %v1170 = vld [vmem:[#allocation2] sm:$0xff]
    %v1171 = vpack.c.bf16 %v1167, %v1167
    %v1176 = vunpack.c.l.b16 %v1162
    %v1177 = vunpack.c.l.b16 %v1163
    %v1178 = vunpack.c.l.b16 %v1164
    %v1179 = vunpack.c.l.b16 %v1165
    %v1180 = vpack.c.b16 %v1177, %v1176
    %v1181 = vpack.c.b16 %v1179, %v1178
    %v1185 = vsel %vm222, %v1171, 0
    %1187 = vmatprep.subr.bf16.mxu0 0
    %1188 = vmatpush1.bf16.msra.mxu0 0
    %1189 = vmatprep.subr.bf16.mxu0 0
    %1190 = vmatpush1.bf16.msra.mxu0 0
    %1191 = vmatprep.subr.bf16.mxu0 0
    %1192 = vmatpush1.bf16.msra.mxu0 0
    %1193 = vmatprep.subr.bf16.mxu0 0
    %1194 = vmatpush1.bf16.msra.mxu0 0
    %1195 = vmatprep.subr.bf16.mxu0 0
    %1196 = vmatpush1.bf16.msra.mxu0 0
    %1197 = vmatprep.subr.bf16.mxu0 0
    %1198 = vmatpush1.bf16.msra.mxu0 0
    %1199 = vmatprep.subr.bf16.mxu0 0
    %1200 = vmatpush1.bf16.msra.mxu0 %v1181
    %1201 = vmatprep.subr.bf16.mxu0 0
    %1202 = vmatpush1.bf16.msra.mxu0 %v1180
    %1203 = vmatprep.subr.bf16.mxu0 0
    %1204 = vmatpush2.bf16.msra.mxu0 0
    %1205 = vmatprep.subr.bf16.mxu0 0
    %1206 = vmatpush2.bf16.msra.mxu0 0
    %1207 = vmatprep.subr.bf16.mxu0 0
    %1208 = vmatpush2.bf16.msra.mxu0 0
    %1209 = vmatprep.subr.bf16.mxu0 0
    %1210 = vmatpush2.bf16.msra.mxu0 0
    %1211 = vmatprep.subr.bf16.mxu0 0
    %1212 = vmatpush2.bf16.msra.mxu0 0
    %1213 = vmatprep.subr.bf16.mxu0 0
    %1214 = vmatpush2.bf16.msra.mxu0 0
    %1215 = vmatprep.subr.bf16.mxu0 0
    %1216 = vmatpush2.bf16.msra.mxu0 0
    %1217 = vmatprep.subr.bf16.mxu0 0
    %1218 = vmatpush2.bf16.msra.mxu0 0
    %1219 = vmatprep.mubr.bf16.mxu0 0
    %1220 = vmatmul.mubr.bf16.gmra.mxu0 %v1185
    %v1221 = vpop.f32.mrf.mxu0
    %v1222 = vadd.f32 0.0, %v1221
    %v1223 = vpop.f32.mrf.mxu0
    %v1224 = vpop.f32.mrf.mxu0
    %v1225 = vpop.f32.mrf.mxu0
    %1226 = vdwg.mxu0
    %v1227 = vadd.f32 %v1170, %v1222
    %v1228 = vxor.u32 %v1227, 2147483648
    %v1229 = vmul.f32 %v1228, 1.442695
    %v1230 = vpow.pop %v1229
    %v1231 = vadd.f32 %v1230, 1.0
    %v1232 = vrcp.pop %v1231
    %v1233 = vmul.f32 1.0, %v1232
    %v1234 = vtanh.pop %v1227
    %1236 = vrot.lane.b32.xlu0 %v1169, 32
    %v1237 = vpop.permute.xlu0 %1236
    %v1239 = vmul.f32 %v1233, %v1237
    %1241 = vrot.lane.b32.xlu0 %v1234, 32
    %v1242 = vpop.permute.xlu0 %1241
    %v1244 = vmul.f32 %v1233, %v1242
    %1246 = vrot.lane.b32.xlu0 %v1244, 32
    %v1247 = vpop.permute.xlu0 %1246
    %v1249 = vadd.f32 %v1239, %v1247
    %v1250 = vtanh.pop %v1249
    %1252 = vrot.lane.b32.xlu0 %v1250, 32
    %v1253 = vpop.permute.xlu0 %1252
    %v1255 = vmul.f32 %v1233, %v1253
    %1257 = vrot.lane.b32.xlu0 %v1255, 64
    %v1258 = vpop.permute.xlu0 %1257
    %1260 = vst.msk [vmem:[#allocation3] sm:$0xff] %vm222, %v1258
    %v1261 = vld [vmem:[%s300] sm:$0xff]
    %v1262 = vpack.c.bf16 %v1255, %v1255
    %1264 = vrot.lane.b32.xlu0 %v1262, 64
    %v1265 = vpop.permute.xlu0 %1264
    %v1267 = vsel %vm222, %v1265, 0
    %1269 = vmatprep.subr.bf16.mxu0 0
    %1270 = vmatpush1.bf16.msra.mxu0 0
    %1271 = vmatprep.subr.bf16.mxu0 0
    %1272 = vmatpush1.bf16.msra.mxu0 0
    %1273 = vmatprep.subr.bf16.mxu0 0
    %1274 = vmatpush1.bf16.msra.mxu0 0
    %1275 = vmatprep.subr.bf16.mxu0 0
    %1276 = vmatpush1.bf16.msra.mxu0 0
    %1277 = vmatprep.subr.bf16.mxu0 0
    %1278 = vmatpush1.bf16.msra.mxu0 0
    %1279 = vmatprep.subr.bf16.mxu0 0
    %1280 = vmatpush1.bf16.msra.mxu0 0
    %1281 = vmatprep.subr.bf16.mxu0 0
    %1282 = vmatpush1.bf16.msra.mxu0 %v1181
    %1283 = vmatprep.subr.bf16.mxu0 0
    %1284 = vmatpush1.bf16.msra.mxu0 %v1180
    %1285 = vmatprep.subr.bf16.mxu0 0
    %1286 = vmatpush2.bf16.msra.mxu0 0
    %1287 = vmatprep.subr.bf16.mxu0 0
    %1288 = vmatpush2.bf16.msra.mxu0 0
    %1289 = vmatprep.subr.bf16.mxu0 0
    %1290 = vmatpush2.bf16.msra.mxu0 0
    %1291 = vmatprep.subr.bf16.mxu0 0
    %1292 = vmatpush2.bf16.msra.mxu0 0
    %1293 = vmatprep.subr.bf16.mxu0 0
    %1294 = vmatpush2.bf16.msra.mxu0 0
    %1295 = vmatprep.subr.bf16.mxu0 0
    %1296 = vmatpush2.bf16.msra.mxu0 0
    %1297 = vmatprep.subr.bf16.mxu0 0
    %1298 = vmatpush2.bf16.msra.mxu0 0
    %1299 = vmatprep.subr.bf16.mxu0 0
    %1300 = vmatpush2.bf16.msra.mxu0 0
    %1301 = vmatprep.mubr.bf16.mxu0 0
    %1302 = vmatmul.mubr.bf16.gmra.mxu0 %v1267
    %v1303 = vpop.f32.mrf.mxu0
    %v1304 = vadd.f32 0.0, %v1303
    %v1305 = vpop.f32.mrf.mxu0
    %v1306 = vpop.f32.mrf.mxu0
    %v1307 = vpop.f32.mrf.mxu0
    %1308 = vdwg.mxu0
    %v1309 = vadd.f32 %v1261, %v1304
    %v1310 = vxor.u32 %v1309, 2147483648
    %v1311 = vmul.f32 %v1310, 1.442695
    %v1312 = vpow.pop %v1311
    %v1313 = vadd.f32 %v1312, 1.0
    %v1314 = vrcp.pop %v1313
    %v1315 = vmul.f32 1.0, %v1314
    %v1316 = vtanh.pop %v1309
    %v1317 = vmul.f32 %v1315, %v1249
    %1319 = vrot.lane.b32.xlu0 %v1316, 32
    %v1320 = vpop.permute.xlu0 %1319
    %v1322 = vmul.f32 %v1315, %v1320
    %1324 = vrot.lane.b32.xlu0 %v1322, 32
    %v1325 = vpop.permute.xlu0 %1324
    %v1327 = vadd.f32 %v1317, %v1325
    %v1328 = vtanh.pop %v1327
    %1330 = vrot.lane.b32.xlu0 %v1328, 32
    %v1331 = vpop.permute.xlu0 %1330
    %v1333 = vmul.f32 %v1315, %v1331
    %1335 = vrot.lane.b32.xlu0 %v1333, 64
    %v1336 = vpop.permute.xlu0 %1335
    %1338 = vst.msk [vmem:[%s378] sm:$0xff] %vm222, %v1336
    %v1339 = vld [vmem:[%s380] sm:$0xff]
    %v1340 = vpack.c.bf16 %v1333, %v1333
    %1342 = vrot.lane.b32.xlu0 %v1340, 64
    %v1343 = vpop.permute.xlu0 %1342
    %v1345 = vsel %vm222, %v1343, 0
    %1347 = vmatprep.subr.bf16.mxu0 0
    %1348 = vmatpush1.bf16.msra.mxu0 0
    %1349 = vmatprep.subr.bf16.mxu0 0
    %1350 = vmatpush1.bf16.msra.mxu0 0
    %1351 = vmatprep.subr.bf16.mxu0 0
    %1352 = vmatpush1.bf16.msra.mxu0 0
    %1353 = vmatprep.subr.bf16.mxu0 0
    %1354 = vmatpush1.bf16.msra.mxu0 0
    %1355 = vmatprep.subr.bf16.mxu0 0
    %1356 = vmatpush1.bf16.msra.mxu0 0
    %1357 = vmatprep.subr.bf16.mxu0 0
    %1358 = vmatpush1.bf16.msra.mxu0 0
    %1359 = vmatprep.subr.bf16.mxu0 0
    %1360 = vmatpush1.bf16.msra.mxu0 %v1181
    %1361 = vmatprep.subr.bf16.mxu0 0
    %1362 = vmatpush1.bf16.msra.mxu0 %v1180
    %1363 = vmatprep.subr.bf16.mxu0 0
    %1364 = vmatpush2.bf16.msra.mxu0 0
    %1365 = vmatprep.subr.bf16.mxu0 0
    %1366 = vmatpush2.bf16.msra.mxu0 0
    %1367 = vmatprep.subr.bf16.mxu0 0
    %1368 = vmatpush2.bf16.msra.mxu0 0
    %1369 = vmatprep.subr.bf16.mxu0 0
    %1370 = vmatpush2.bf16.msra.mxu0 0
    %1371 = vmatprep.subr.bf16.mxu0 0
    %1372 = vmatpush2.bf16.msra.mxu0 0
    %1373 = vmatprep.subr.bf16.mxu0 0
    %1374 = vmatpush2.bf16.msra.mxu0 0
    %1375 = vmatprep.subr.bf16.mxu0 0
    %1376 = vmatpush2.bf16.msra.mxu0 0
    %1377 = vmatprep.subr.bf16.mxu0 0
    %1378 = vmatpush2.bf16.msra.mxu0 0
    %1379 = vmatprep.mubr.bf16.mxu0 0
    %1380 = vmatmul.mubr.bf16.gmra.mxu0 %v1345
    %v1381 = vpop.f32.mrf.mxu0
    %v1382 = vadd.f32 0.0, %v1381
    %v1383 = vpop.f32.mrf.mxu0
    %v1384 = vpop.f32.mrf.mxu0
    %v1385 = vpop.f32.mrf.mxu0
    %1386 = vdwg.mxu0
    %v1387 = vadd.f32 %v1339, %v1382
    %v1388 = vxor.u32 %v1387, 2147483648
    %v1389 = vmul.f32 %v1388, 1.442695
    %v1390 = vpow.pop %v1389
    %v1391 = vadd.f32 %v1390, 1.0
    %v1392 = vrcp.pop %v1391
    %v1393 = vmul.f32 1.0, %v1392
    %v1394 = vtanh.pop %v1387
    %v1395 = vmul.f32 %v1393, %v1327
    %1397 = vrot.lane.b32.xlu0 %v1394, 32
    %v1398 = vpop.permute.xlu0 %1397
    %v1400 = vmul.f32 %v1393, %v1398
    %1402 = vrot.lane.b32.xlu0 %v1400, 32
    %v1403 = vpop.permute.xlu0 %1402
    %v1405 = vadd.f32 %v1395, %v1403
    %v1406 = vtanh.pop %v1405
    %1408 = vrot.lane.b32.xlu0 %v1406, 32
    %v1409 = vpop.permute.xlu0 %1408
    %v1411 = vmul.f32 %v1393, %v1409
    %1413 = vrot.lane.b32.xlu0 %v1411, 64
    %v1414 = vpop.permute.xlu0 %1413
    %1416 = vst.msk [vmem:[%s458] sm:$0xff] %vm222, %v1414
    %v1417 = vld [vmem:[%s460] sm:$0xff]
    %v1418 = vpack.c.bf16 %v1411, %v1411
    %1420 = vrot.lane.b32.xlu0 %v1418, 64
    %v1421 = vpop.permute.xlu0 %1420
    %v1423 = vsel %vm222, %v1421, 0
    %1425 = vmatprep.subr.bf16.mxu0 0
    %1426 = vmatpush1.bf16.msra.mxu0 0
    %1427 = vmatprep.subr.bf16.mxu0 0
    %1428 = vmatpush1.bf16.msra.mxu0 0
    %1429 = vmatprep.subr.bf16.mxu0 0
    %1430 = vmatpush1.bf16.msra.mxu0 0
    %1431 = vmatprep.subr.bf16.mxu0 0
    %1432 = vmatpush1.bf16.msra.mxu0 0
    %1433 = vmatprep.subr.bf16.mxu0 0
    %1434 = vmatpush1.bf16.msra.mxu0 0
    %1435 = vmatprep.subr.bf16.mxu0 0
    %1436 = vmatpush1.bf16.msra.mxu0 0
    %1437 = vmatprep.subr.bf16.mxu0 0
    %1438 = vmatpush1.bf16.msra.mxu0 %v1181
    %1439 = vmatprep.subr.bf16.mxu0 0
    %1440 = vmatpush1.bf16.msra.mxu0 %v1180
    %1441 = vmatprep.subr.bf16.mxu0 0
    %1442 = vmatpush2.bf16.msra.mxu0 0
    %1443 = vmatprep.subr.bf16.mxu0 0
    %1444 = vmatpush2.bf16.msra.mxu0 0
    %1445 = vmatprep.subr.bf16.mxu0 0
    %1446 = vmatpush2.bf16.msra.mxu0 0
    %1447 = vmatprep.subr.bf16.mxu0 0
    %1448 = vmatpush2.bf16.msra.mxu0 0
    %1449 = vmatprep.subr.bf16.mxu0 0
    %1450 = vmatpush2.bf16.msra.mxu0 0
    %1451 = vmatprep.subr.bf16.mxu0 0
    %1452 = vmatpush2.bf16.msra.mxu0 0
    %1453 = vmatprep.subr.bf16.mxu0 0
    %1454 = vmatpush2.bf16.msra.mxu0 0
    %1455 = vmatprep.subr.bf16.mxu0 0
    %1456 = vmatpush2.bf16.msra.mxu0 0
    %1457 = vmatprep.mubr.bf16.mxu0 0
    %1458 = vmatmul.mubr.bf16.gmra.mxu0 %v1423
    %v1459 = vpop.f32.mrf.mxu0
    %v1460 = vadd.f32 0.0, %v1459
    %v1461 = vpop.f32.mrf.mxu0
    %v1462 = vpop.f32.mrf.mxu0
    %v1463 = vpop.f32.mrf.mxu0
    %1464 = vdwg.mxu0
    %v1465 = vadd.f32 %v1417, %v1460
    %v1466 = vxor.u32 %v1465, 2147483648
    %v1467 = vmul.f32 %v1466, 1.442695
    %v1468 = vpow.pop %v1467
    %v1469 = vadd.f32 %v1468, 1.0
    %v1470 = vrcp.pop %v1469
    %v1471 = vmul.f32 1.0, %v1470
    %v1472 = vtanh.pop %v1465
    %v1473 = vmul.f32 %v1471, %v1405
    %1475 = vrot.lane.b32.xlu0 %v1472, 32
    %v1476 = vpop.permute.xlu0 %1475
    %v1478 = vmul.f32 %v1471, %v1476
    %1480 = vrot.lane.b32.xlu0 %v1478, 32
    %v1481 = vpop.permute.xlu0 %1480
    %v1483 = vadd.f32 %v1473, %v1481
    %v1484 = vtanh.pop %v1483
    %1486 = vrot.lane.b32.xlu0 %v1484, 32
    %v1487 = vpop.permute.xlu0 %1486
    %v1489 = vmul.f32 %v1471, %v1487
    %1491 = vrot.lane.b32.xlu0 %v1489, 64
    %v1492 = vpop.permute.xlu0 %1491
    %1494 = vst.msk [vmem:[%s538] sm:$0xff] %vm222, %v1492
    %v1495 = vld [vmem:[%s540] sm:$0xff]
    %v1496 = vpack.c.bf16 %v1489, %v1489
    %1498 = vrot.lane.b32.xlu0 %v1496, 64
    %v1499 = vpop.permute.xlu0 %1498
    %v1501 = vsel %vm222, %v1499, 0
    %1503 = vmatprep.subr.bf16.mxu0 0
    %1504 = vmatpush1.bf16.msra.mxu0 0
    %1505 = vmatprep.subr.bf16.mxu0 0
    %1506 = vmatpush1.bf16.msra.mxu0 0
    %1507 = vmatprep.subr.bf16.mxu0 0
    %1508 = vmatpush1.bf16.msra.mxu0 0
    %1509 = vmatprep.subr.bf16.mxu0 0
    %1510 = vmatpush1.bf16.msra.mxu0 0
    %1511 = vmatprep.subr.bf16.mxu0 0
    %1512 = vmatpush1.bf16.msra.mxu0 0
    %1513 = vmatprep.subr.bf16.mxu0 0
    %1514 = vmatpush1.bf16.msra.mxu0 0
    %1515 = vmatprep.subr.bf16.mxu0 0
    %1516 = vmatpush1.bf16.msra.mxu0 %v1181
    %1517 = vmatprep.subr.bf16.mxu0 0
    %1518 = vmatpush1.bf16.msra.mxu0 %v1180
    %1519 = vmatprep.subr.bf16.mxu0 0
    %1520 = vmatpush2.bf16.msra.mxu0 0
    %1521 = vmatprep.subr.bf16.mxu0 0
    %1522 = vmatpush2.bf16.msra.mxu0 0
    %1523 = vmatprep.subr.bf16.mxu0 0
    %1524 = vmatpush2.bf16.msra.mxu0 0
    %1525 = vmatprep.subr.bf16.mxu0 0
    %1526 = vmatpush2.bf16.msra.mxu0 0
    %1527 = vmatprep.subr.bf16.mxu0 0
    %1528 = vmatpush2.bf16.msra.mxu0 0
    %1529 = vmatprep.subr.bf16.mxu0 0
    %1530 = vmatpush2.bf16.msra.mxu0 0
    %1531 = vmatprep.subr.bf16.mxu0 0
    %1532 = vmatpush2.bf16.msra.mxu0 0
    %1533 = vmatprep.subr.bf16.mxu0 0
    %1534 = vmatpush2.bf16.msra.mxu0 0
    %1535 = vmatprep.mubr.bf16.mxu0 0
    %1536 = vmatmul.mubr.bf16.gmra.mxu0 %v1501
    %v1537 = vpop.f32.mrf.mxu0
    %v1538 = vadd.f32 0.0, %v1537
    %v1539 = vpop.f32.mrf.mxu0
    %v1540 = vpop.f32.mrf.mxu0
    %v1541 = vpop.f32.mrf.mxu0
    %1542 = vdwg.mxu0
    %v1543 = vadd.f32 %v1495, %v1538
    %v1544 = vxor.u32 %v1543, 2147483648
    %v1545 = vmul.f32 %v1544, 1.442695
    %v1546 = vpow.pop %v1545
    %v1547 = vadd.f32 %v1546, 1.0
    %v1548 = vrcp.pop %v1547
    %v1549 = vmul.f32 1.0, %v1548
    %v1550 = vtanh.pop %v1543
    %v1551 = vmul.f32 %v1549, %v1483
    %1553 = vrot.lane.b32.xlu0 %v1550, 32
    %v1554 = vpop.permute.xlu0 %1553
    %v1556 = vmul.f32 %v1549, %v1554
    %1558 = vrot.lane.b32.xlu0 %v1556, 32
    %v1559 = vpop.permute.xlu0 %1558
    %v1561 = vadd.f32 %v1551, %v1559
    %v1562 = vtanh.pop %v1561
    %1564 = vrot.lane.b32.xlu0 %v1562, 32
    %v1565 = vpop.permute.xlu0 %1564
    %v1567 = vmul.f32 %v1549, %v1565
    %1569 = vrot.lane.b32.xlu0 %v1567, 64
    %v1570 = vpop.permute.xlu0 %1569
    %1572 = vst.msk [vmem:[%s618] sm:$0xff] %vm222, %v1570
    %v1573 = vld [vmem:[%s620] sm:$0xff]
    %v1574 = vpack.c.bf16 %v1567, %v1567
    %1576 = vrot.lane.b32.xlu0 %v1574, 64
    %v1577 = vpop.permute.xlu0 %1576
    %v1579 = vsel %vm222, %v1577, 0
    %1581 = vmatprep.subr.bf16.mxu0 0
    %1582 = vmatpush1.bf16.msra.mxu0 0
    %1583 = vmatprep.subr.bf16.mxu0 0
    %1584 = vmatpush1.bf16.msra.mxu0 0
    %1585 = vmatprep.subr.bf16.mxu0 0
    %1586 = vmatpush1.bf16.msra.mxu0 0
    %1587 = vmatprep.subr.bf16.mxu0 0
    %1588 = vmatpush1.bf16.msra.mxu0 0
    %1589 = vmatprep.subr.bf16.mxu0 0
    %1590 = vmatpush1.bf16.msra.mxu0 0
    %1591 = vmatprep.subr.bf16.mxu0 0
    %1592 = vmatpush1.bf16.msra.mxu0 0
    %1593 = vmatprep.subr.bf16.mxu0 0
    %1594 = vmatpush1.bf16.msra.mxu0 %v1181
    %1595 = vmatprep.subr.bf16.mxu0 0
    %1596 = vmatpush1.bf16.msra.mxu0 %v1180
    %1597 = vmatprep.subr.bf16.mxu0 0
    %1598 = vmatpush2.bf16.msra.mxu0 0
    %1599 = vmatprep.subr.bf16.mxu0 0
    %1600 = vmatpush2.bf16.msra.mxu0 0
    %1601 = vmatprep.subr.bf16.mxu0 0
    %1602 = vmatpush2.bf16.msra.mxu0 0
    %1603 = vmatprep.subr.bf16.mxu0 0
    %1604 = vmatpush2.bf16.msra.mxu0 0
    %1605 = vmatprep.subr.bf16.mxu0 0
    %1606 = vmatpush2.bf16.msra.mxu0 0
    %1607 = vmatprep.subr.bf16.mxu0 0
    %1608 = vmatpush2.bf16.msra.mxu0 0
    %1609 = vmatprep.subr.bf16.mxu0 0
    %1610 = vmatpush2.bf16.msra.mxu0 0
    %1611 = vmatprep.subr.bf16.mxu0 0
    %1612 = vmatpush2.bf16.msra.mxu0 0
    %1613 = vmatprep.mubr.bf16.mxu0 0
    %1614 = vmatmul.mubr.bf16.gmra.mxu0 %v1579
    %v1615 = vpop.f32.mrf.mxu0
    %v1616 = vadd.f32 0.0, %v1615
    %v1617 = vpop.f32.mrf.mxu0
    %v1618 = vpop.f32.mrf.mxu0
    %v1619 = vpop.f32.mrf.mxu0
    %1620 = vdwg.mxu0
    %v1621 = vadd.f32 %v1573, %v1616
    %v1622 = vxor.u32 %v1621, 2147483648
    %v1623 = vmul.f32 %v1622, 1.442695
    %v1624 = vpow.pop %v1623
    %v1625 = vadd.f32 %v1624, 1.0
    %v1626 = vrcp.pop %v1625
    %v1627 = vmul.f32 1.0, %v1626
    %v1628 = vtanh.pop %v1621
    %v1629 = vmul.f32 %v1627, %v1561
    %1631 = vrot.lane.b32.xlu0 %v1628, 32
    %v1632 = vpop.permute.xlu0 %1631
    %v1634 = vmul.f32 %v1627, %v1632
    %1636 = vrot.lane.b32.xlu0 %v1634, 32
    %v1637 = vpop.permute.xlu0 %1636
    %v1639 = vadd.f32 %v1629, %v1637
    %v1640 = vtanh.pop %v1639
    %1642 = vrot.lane.b32.xlu0 %v1640, 32
    %v1643 = vpop.permute.xlu0 %1642
    %v1645 = vmul.f32 %v1627, %v1643
    %1647 = vrot.lane.b32.xlu0 %v1645, 64
    %v1648 = vpop.permute.xlu0 %1647
    %1650 = vst.msk [vmem:[%s698] sm:$0xff] %vm222, %v1648
    %v1651 = vld [vmem:[%s700] sm:$0xff]
    %v1652 = vpack.c.bf16 %v1645, %v1645
    %1654 = vrot.lane.b32.xlu0 %v1652, 64
    %v1655 = vpop.permute.xlu0 %1654
    %v1657 = vsel %vm222, %v1655, 0
    %1659 = vmatprep.subr.bf16.mxu0 0
    %1660 = vmatpush1.bf16.msra.mxu0 0
    %1661 = vmatprep.subr.bf16.mxu0 0
    %1662 = vmatpush1.bf16.msra.mxu0 0
    %1663 = vmatprep.subr.bf16.mxu0 0
    %1664 = vmatpush1.bf16.msra.mxu0 0
    %1665 = vmatprep.subr.bf16.mxu0 0
    %1666 = vmatpush1.bf16.msra.mxu0 0
    %1667 = vmatprep.subr.bf16.mxu0 0
    %1668 = vmatpush1.bf16.msra.mxu0 0
    %1669 = vmatprep.subr.bf16.mxu0 0
    %1670 = vmatpush1.bf16.msra.mxu0 0
    %1671 = vmatprep.subr.bf16.mxu0 0
    %1672 = vmatpush1.bf16.msra.mxu0 %v1181
    %1673 = vmatprep.subr.bf16.mxu0 0
    %1674 = vmatpush1.bf16.msra.mxu0 %v1180
    %1675 = vmatprep.subr.bf16.mxu0 0
    %1676 = vmatpush2.bf16.msra.mxu0 0
    %1677 = vmatprep.subr.bf16.mxu0 0
    %1678 = vmatpush2.bf16.msra.mxu0 0
    %1679 = vmatprep.subr.bf16.mxu0 0
    %1680 = vmatpush2.bf16.msra.mxu0 0
    %1681 = vmatprep.subr.bf16.mxu0 0
    %1682 = vmatpush2.bf16.msra.mxu0 0
    %1683 = vmatprep.subr.bf16.mxu0 0
    %1684 = vmatpush2.bf16.msra.mxu0 0
    %1685 = vmatprep.subr.bf16.mxu0 0
    %1686 = vmatpush2.bf16.msra.mxu0 0
    %1687 = vmatprep.subr.bf16.mxu0 0
    %1688 = vmatpush2.bf16.msra.mxu0 0
    %1689 = vmatprep.subr.bf16.mxu0 0
    %1690 = vmatpush2.bf16.msra.mxu0 0
    %1691 = vmatprep.mubr.bf16.mxu0 0
    %1692 = vmatmul.mubr.bf16.gmra.mxu0 %v1657
    %v1693 = vpop.f32.mrf.mxu0
    %v1694 = vadd.f32 0.0, %v1693
    %v1695 = vpop.f32.mrf.mxu0
    %v1696 = vpop.f32.mrf.mxu0
    %v1697 = vpop.f32.mrf.mxu0
    %1698 = vdwg.mxu0
    %v1699 = vadd.f32 %v1651, %v1694
    %v1700 = vxor.u32 %v1699, 2147483648
    %v1701 = vmul.f32 %v1700, 1.442695
    %v1702 = vpow.pop %v1701
    %v1703 = vadd.f32 %v1702, 1.0
    %v1704 = vrcp.pop %v1703
    %v1705 = vmul.f32 1.0, %v1704
    %v1706 = vtanh.pop %v1699
    %v1707 = vmul.f32 %v1705, %v1639
    %1709 = vrot.lane.b32.xlu0 %v1706, 32
    %v1710 = vpop.permute.xlu0 %1709
    %v1712 = vmul.f32 %v1705, %v1710
    %1714 = vrot.lane.b32.xlu0 %v1712, 32
    %v1715 = vpop.permute.xlu0 %1714
    %v1717 = vadd.f32 %v1707, %v1715
    %v1718 = vtanh.pop %v1717
    %1720 = vrot.lane.b32.xlu0 %v1718, 32
    %v1721 = vpop.permute.xlu0 %1720
    %v1723 = vmul.f32 %v1705, %v1721
    %1725 = vrot.lane.b32.xlu0 %v1723, 64
    %v1726 = vpop.permute.xlu0 %1725
    %1728 = vst.msk [vmem:[%s778] sm:$0xff] %vm222, %v1726
    %v1729 = vld [vmem:[%s780] sm:$0xff]
    %v1730 = vpack.c.bf16 %v1723, %v1723
    %1732 = vrot.lane.b32.xlu0 %v1730, 64
    %v1733 = vpop.permute.xlu0 %1732
    %v1735 = vsel %vm222, %v1733, 0
    %1737 = vmatprep.subr.bf16.mxu0 0
    %1738 = vmatpush1.bf16.msra.mxu0 0
    %1739 = vmatprep.subr.bf16.mxu0 0
    %1740 = vmatpush1.bf16.msra.mxu0 0
    %1741 = vmatprep.subr.bf16.mxu0 0
    %1742 = vmatpush1.bf16.msra.mxu0 0
    %1743 = vmatprep.subr.bf16.mxu0 0
    %1744 = vmatpush1.bf16.msra.mxu0 0
    %1745 = vmatprep.subr.bf16.mxu0 0
    %1746 = vmatpush1.bf16.msra.mxu0 0
    %1747 = vmatprep.subr.bf16.mxu0 0
    %1748 = vmatpush1.bf16.msra.mxu0 0
    %1749 = vmatprep.subr.bf16.mxu0 0
    %1750 = vmatpush1.bf16.msra.mxu0 %v1181
    %1751 = vmatprep.subr.bf16.mxu0 0
    %1752 = vmatpush1.bf16.msra.mxu0 %v1180
    %1753 = vmatprep.subr.bf16.mxu0 0
    %1754 = vmatpush2.bf16.msra.mxu0 0
    %1755 = vmatprep.subr.bf16.mxu0 0
    %1756 = vmatpush2.bf16.msra.mxu0 0
    %1757 = vmatprep.subr.bf16.mxu0 0
    %1758 = vmatpush2.bf16.msra.mxu0 0
    %1759 = vmatprep.subr.bf16.mxu0 0
    %1760 = vmatpush2.bf16.msra.mxu0 0
    %1761 = vmatprep.subr.bf16.mxu0 0
    %1762 = vmatpush2.bf16.msra.mxu0 0
    %1763 = vmatprep.subr.bf16.mxu0 0
    %1764 = vmatpush2.bf16.msra.mxu0 0
    %1765 = vmatprep.subr.bf16.mxu0 0
    %1766 = vmatpush2.bf16.msra.mxu0 0
    %1767 = vmatprep.subr.bf16.mxu0 0
    %1768 = vmatpush2.bf16.msra.mxu0 0
    %1769 = vmatprep.mubr.bf16.mxu0 0
    %1770 = vmatmul.mubr.bf16.gmra.mxu0 %v1735
    %v1771 = vpop.f32.mrf.mxu0
    %v1772 = vadd.f32 0.0, %v1771
    %v1773 = vpop.f32.mrf.mxu0
    %v1774 = vpop.f32.mrf.mxu0
    %v1775 = vpop.f32.mrf.mxu0
    %1776 = vdwg.mxu0
    %v1777 = vadd.f32 %v1729, %v1772
    %v1778 = vxor.u32 %v1777, 2147483648
    %v1779 = vmul.f32 %v1778, 1.442695
    %v1780 = vpow.pop %v1779
    %v1781 = vadd.f32 %v1780, 1.0
    %v1782 = vrcp.pop %v1781
    %v1783 = vmul.f32 1.0, %v1782
    %v1784 = vtanh.pop %v1777
    %v1785 = vmul.f32 %v1783, %v1717
    %1787 = vrot.lane.b32.xlu0 %v1784, 32
    %v1788 = vpop.permute.xlu0 %1787
    %v1790 = vmul.f32 %v1783, %v1788
    %1792 = vrot.lane.b32.xlu0 %v1790, 32
    %v1793 = vpop.permute.xlu0 %1792
    %v1795 = vadd.f32 %v1785, %v1793
    %v1796 = vtanh.pop %v1795
    %1798 = vrot.lane.b32.xlu0 %v1796, 32
    %v1799 = vpop.permute.xlu0 %1798
    %v1801 = vmul.f32 %v1783, %v1799
    %1803 = vrot.lane.b32.xlu0 %v1801, 64
    %v1804 = vpop.permute.xlu0 %1803
    %1806 = vst.msk [vmem:[%s858] sm:$0xff] %vm222, %v1804
    %v1807 = vld [vmem:[%s860] sm:$0xff]
    %v1808 = vpack.c.bf16 %v1801, %v1801
    %1810 = vrot.lane.b32.xlu0 %v1808, 64
    %v1811 = vpop.permute.xlu0 %1810
    %v1813 = vsel %vm222, %v1811, 0
    %1815 = vmatprep.subr.bf16.mxu0 0
    %1816 = vmatpush1.bf16.msra.mxu0 0
    %1817 = vmatprep.subr.bf16.mxu0 0
    %1818 = vmatpush1.bf16.msra.mxu0 0
    %1819 = vmatprep.subr.bf16.mxu0 0
    %1820 = vmatpush1.bf16.msra.mxu0 0
    %1821 = vmatprep.subr.bf16.mxu0 0
    %1822 = vmatpush1.bf16.msra.mxu0 0
    %1823 = vmatprep.subr.bf16.mxu0 0
    %1824 = vmatpush1.bf16.msra.mxu0 0
    %1825 = vmatprep.subr.bf16.mxu0 0
    %1826 = vmatpush1.bf16.msra.mxu0 0
    %1827 = vmatprep.subr.bf16.mxu0 0
    %1828 = vmatpush1.bf16.msra.mxu0 %v1181
    %1829 = vmatprep.subr.bf16.mxu0 0
    %1830 = vmatpush1.bf16.msra.mxu0 %v1180
    %1831 = vmatprep.subr.bf16.mxu0 0
    %1832 = vmatpush2.bf16.msra.mxu0 0
    %1833 = vmatprep.subr.bf16.mxu0 0
    %1834 = vmatpush2.bf16.msra.mxu0 0
    %1835 = vmatprep.subr.bf16.mxu0 0
    %1836 = vmatpush2.bf16.msra.mxu0 0
    %1837 = vmatprep.subr.bf16.mxu0 0
    %1838 = vmatpush2.bf16.msra.mxu0 0
    %1839 = vmatprep.subr.bf16.mxu0 0
    %1840 = vmatpush2.bf16.msra.mxu0 0
    %1841 = vmatprep.subr.bf16.mxu0 0
    %1842 = vmatpush2.bf16.msra.mxu0 0
    %1843 = vmatprep.subr.bf16.mxu0 0
    %1844 = vmatpush2.bf16.msra.mxu0 0
    %1845 = vmatprep.subr.bf16.mxu0 0
    %1846 = vmatpush2.bf16.msra.mxu0 0
    %1847 = vmatprep.mubr.bf16.mxu0 0
    %1848 = vmatmul.mubr.bf16.gmra.mxu0 %v1813
    %v1849 = vpop.f32.mrf.mxu0
    %v1850 = vadd.f32 0.0, %v1849
    %v1851 = vpop.f32.mrf.mxu0
    %v1852 = vpop.f32.mrf.mxu0
    %v1853 = vpop.f32.mrf.mxu0
    %1854 = vdwg.mxu0
    %v1855 = vadd.f32 %v1807, %v1850
    %v1856 = vxor.u32 %v1855, 2147483648
    %v1857 = vmul.f32 %v1856, 1.442695
    %v1858 = vpow.pop %v1857
    %v1859 = vadd.f32 %v1858, 1.0
    %v1860 = vrcp.pop %v1859
    %v1861 = vmul.f32 1.0, %v1860
    %v1862 = vtanh.pop %v1855
    %v1863 = vmul.f32 %v1861, %v1795
    %1865 = vrot.lane.b32.xlu0 %v1862, 32
    %v1866 = vpop.permute.xlu0 %1865
    %v1868 = vmul.f32 %v1861, %v1866
    %1870 = vrot.lane.b32.xlu0 %v1868, 32
    %v1871 = vpop.permute.xlu0 %1870
    %v1873 = vadd.f32 %v1863, %v1871
    %v1874 = vtanh.pop %v1873
    %1876 = vrot.lane.b32.xlu0 %v1874, 32
    %v1877 = vpop.permute.xlu0 %1876
    %v1879 = vmul.f32 %v1861, %v1877
    %1881 = vrot.lane.b32.xlu0 %v1879, 64
    %v1882 = vpop.permute.xlu0 %1881
    %1884 = vst.msk [vmem:[%s938] sm:$0xff] %vm222, %v1882
    %v1885 = vld [vmem:[%s940] sm:$0xff]
    %v1886 = vpack.c.bf16 %v1879, %v1879
    %1888 = vrot.lane.b32.xlu0 %v1886, 64
    %v1889 = vpop.permute.xlu0 %1888
    %v1891 = vsel %vm222, %v1889, 0
    %1893 = vmatprep.subr.bf16.mxu0 0
    %1894 = vmatpush1.bf16.msra.mxu0 0
    %1895 = vmatprep.subr.bf16.mxu0 0
    %1896 = vmatpush1.bf16.msra.mxu0 0
    %1897 = vmatprep.subr.bf16.mxu0 0
    %1898 = vmatpush1.bf16.msra.mxu0 0
    %1899 = vmatprep.subr.bf16.mxu0 0
    %1900 = vmatpush1.bf16.msra.mxu0 0
    %1901 = vmatprep.subr.bf16.mxu0 0
    %1902 = vmatpush1.bf16.msra.mxu0 0
    %1903 = vmatprep.subr.bf16.mxu0 0
    %1904 = vmatpush1.bf16.msra.mxu0 0
    %1905 = vmatprep.subr.bf16.mxu0 0
    %1906 = vmatpush1.bf16.msra.mxu0 %v1181
    %1907 = vmatprep.subr.bf16.mxu0 0
    %1908 = vmatpush1.bf16.msra.mxu0 %v1180
    %1909 = vmatprep.subr.bf16.mxu0 0
    %1910 = vmatpush2.bf16.msra.mxu0 0
    %1911 = vmatprep.subr.bf16.mxu0 0
    %1912 = vmatpush2.bf16.msra.mxu0 0
    %1913 = vmatprep.subr.bf16.mxu0 0
    %1914 = vmatpush2.bf16.msra.mxu0 0
    %1915 = vmatprep.subr.bf16.mxu0 0
    %1916 = vmatpush2.bf16.msra.mxu0 0
    %1917 = vmatprep.subr.bf16.mxu0 0
    %1918 = vmatpush2.bf16.msra.mxu0 0
    %1919 = vmatprep.subr.bf16.mxu0 0
    %1920 = vmatpush2.bf16.msra.mxu0 0
    %1921 = vmatprep.subr.bf16.mxu0 0
    %1922 = vmatpush2.bf16.msra.mxu0 0
    %1923 = vmatprep.subr.bf16.mxu0 0
    %1924 = vmatpush2.bf16.msra.mxu0 0
    %1925 = vmatprep.mubr.bf16.mxu0 0
    %1926 = vmatmul.mubr.bf16.gmra.mxu0 %v1891
    %v1927 = vpop.f32.mrf.mxu0
    %v1928 = vadd.f32 0.0, %v1927
    %v1929 = vpop.f32.mrf.mxu0
    %v1930 = vpop.f32.mrf.mxu0
    %v1931 = vpop.f32.mrf.mxu0
    %1932 = vdwg.mxu0
    %v1933 = vadd.f32 %v1885, %v1928
    %v1934 = vxor.u32 %v1933, 2147483648
    %v1935 = vmul.f32 %v1934, 1.442695
    %v1936 = vpow.pop %v1935
    %v1937 = vadd.f32 %v1936, 1.0
    %v1938 = vrcp.pop %v1937
    %v1939 = vmul.f32 1.0, %v1938
    %v1940 = vtanh.pop %v1933
    %v1941 = vmul.f32 %v1939, %v1873
    %1943 = vrot.lane.b32.xlu0 %v1940, 32
    %v1944 = vpop.permute.xlu0 %1943
    %v1946 = vmul.f32 %v1939, %v1944
    %1948 = vrot.lane.b32.xlu0 %v1946, 32
    %v1949 = vpop.permute.xlu0 %1948
    %v1951 = vadd.f32 %v1941, %v1949
    %v1952 = vtanh.pop %v1951
    %1954 = vrot.lane.b32.xlu0 %v1952, 32
    %v1955 = vpop.permute.xlu0 %1954
    %v1957 = vmul.f32 %v1939, %v1955
    %1959 = vrot.lane.b32.xlu0 %v1957, 64
    %v1960 = vpop.permute.xlu0 %1959
    %1962 = vst.msk [vmem:[%s1018] sm:$0xff] %vm222, %v1960
    %s1963 = scalar_lea.vmem [#allocation7], 8
    %1964 = vst.msk [vmem:[%s1963] sm:$0xff] %vm222, %v1960
    %1966 = vrot.lane.b32.xlu0 %v1951, 96
    %v1967 = vpop.permute.xlu0 %1966
    %s1969 = scalar_lea.vmem [#allocation9], 8
    %1970 = vst.msk [vmem:[%s1969] sm:$0xff] %vm222, %v1967
    %v1971 = vld [vmem:[#allocation3] sm:$0xff]
    %v1972 = vld [vmem:[#allocation3 + $0x8] sm:$0xff]
    %v1973 = vld [vmem:[#allocation3 + $0x10] sm:$0xff]
    %v1974 = vld [vmem:[#allocation3 + $0x18] sm:$0xff]
    %v1975 = vld [vmem:[#allocation3 + $0x20] sm:$0xff]
    %v1976 = vld [vmem:[#allocation3 + $0x28] sm:$0xff]
    %v1977 = vld [vmem:[#allocation3 + $0x30] sm:$0xff]
    %v1978 = vld [vmem:[#allocation3 + $0x38] sm:$0xff]
    %v1979 = vld [vmem:[#allocation3 + $0x40] sm:$0xff]
    %v1980 = vld [vmem:[#allocation3 + $0x48] sm:$0xff]
    %v1981 = vpack.c.bf16 %v1972, %v1971
    %v1982 = vpack.c.bf16 %v1974, %v1973
    %v1983 = vpack.c.bf16 %v1976, %v1975
    %v1984 = vpack.c.bf16 %v1978, %v1977
    %v1985 = vpack.c.bf16 %v1980, %v1979
    %v1986 = vld [vmem:[%s7] sm:$0xf]
    %v1987 = vld [vmem:[%s7 + $0x4] sm:$0xf]
    %v1988 = vld [vmem:[%s7 + $0x8] sm:$0xf]
    %v1989 = vld [vmem:[%s7 + $0xc] sm:$0xf]
    %v1990 = vld [vmem:[%s9] sm:$0x1]
    %v1992 = vlaneseq
    %v1993 = vshrl.u32 %v1992, 7
    %v1994 = vsub.s32 0, %v1993
    %v1995 = vrot.slane %v1990, %v1994
    %v2001 = vunpack.c.l.b16 %v1986
    %v2002 = vunpack.c.l.b16 %v1987
    %v2003 = vunpack.c.l.b16 %v1988
    %v2004 = vunpack.c.l.b16 %v1989
    %v2005 = vpack.c.b16 %v2002, %v2001
    %v2006 = vpack.c.b16 %v2004, %v2003
    %v2010 = vsel %vm222, %v1981, 0
    %v2013 = vsel %vm222, %v1982, 0
    %v2016 = vsel %vm222, %v1983, 0
    %v2019 = vsel %vm222, %v1984, 0
    %v2022 = vsel %vm222, %v1985, 0
    %2024 = vmatprep.subr.bf16.mxu0 0
    %2025 = vmatpush1.bf16.msra.mxu0 0
    %2026 = vmatprep.subr.bf16.mxu0 0
    %2027 = vmatpush1.bf16.msra.mxu0 0
    %2028 = vmatprep.subr.bf16.mxu0 0
    %2029 = vmatpush1.bf16.msra.mxu0 0
    %2030 = vmatprep.subr.bf16.mxu0 0
    %2031 = vmatpush1.bf16.msra.mxu0 0
    %2032 = vmatprep.subr.bf16.mxu0 0
    %2033 = vmatpush1.bf16.msra.mxu0 0
    %2034 = vmatprep.subr.bf16.mxu0 0
    %2035 = vmatpush1.bf16.msra.mxu0 0
    %2036 = vmatprep.subr.bf16.mxu0 0
    %2037 = vmatpush1.bf16.msra.mxu0 %v2006
    %2038 = vmatprep.subr.bf16.mxu0 0
    %2039 = vmatpush1.bf16.msra.mxu0 %v2005
    %2040 = vmatprep.subr.bf16.mxu0 0
    %2041 = vmatpush2.bf16.msra.mxu0 0
    %2042 = vmatprep.subr.bf16.mxu0 0
    %2043 = vmatpush2.bf16.msra.mxu0 0
    %2044 = vmatprep.subr.bf16.mxu0 0
    %2045 = vmatpush2.bf16.msra.mxu0 0
    %2046 = vmatprep.subr.bf16.mxu0 0
    %2047 = vmatpush2.bf16.msra.mxu0 0
    %2048 = vmatprep.subr.bf16.mxu0 0
    %2049 = vmatpush2.bf16.msra.mxu0 0
    %2050 = vmatprep.subr.bf16.mxu0 0
    %2051 = vmatpush2.bf16.msra.mxu0 0
    %2052 = vmatprep.subr.bf16.mxu0 0
    %2053 = vmatpush2.bf16.msra.mxu0 0
    %2054 = vmatprep.subr.bf16.mxu0 0
    %2055 = vmatpush2.bf16.msra.mxu0 0
    %2056 = vmatprep.mubr.bf16.mxu0 0
    %2057 = vmatmul.mubr.bf16.gmra.mxu0 %v2010
    %v2058 = vpop.f32.mrf.mxu0
    %v2059 = vadd.f32 %v1995, %v2058
    %v2060 = vpop.f32.mrf.mxu0
    %v2061 = vpop.f32.mrf.mxu0
    %v2062 = vadd.f32 %v1995, %v2061
    %v2063 = vpop.f32.mrf.mxu0
    %2064 = vmatprep.mubr.bf16.mxu0 0
    %2065 = vmatmul.mubr.bf16.gmra.mxu0 %v2013
    %v2066 = vpop.f32.mrf.mxu0
    %v2067 = vadd.f32 %v1995, %v2066
    %v2068 = vpop.f32.mrf.mxu0
    %v2069 = vpop.f32.mrf.mxu0
    %v2070 = vadd.f32 %v1995, %v2069
    %v2071 = vpop.f32.mrf.mxu0
    %2072 = vmatprep.mubr.bf16.mxu0 0
    %2073 = vmatmul.mubr.bf16.gmra.mxu0 %v2016
    %v2074 = vpop.f32.mrf.mxu0
    %v2075 = vadd.f32 %v1995, %v2074
    %v2076 = vpop.f32.mrf.mxu0
    %v2077 = vpop.f32.mrf.mxu0
    %v2078 = vadd.f32 %v1995, %v2077
    %v2079 = vpop.f32.mrf.mxu0
    %2080 = vmatprep.mubr.bf16.mxu0 0
    %2081 = vmatmul.mubr.bf16.gmra.mxu0 %v2019
    %v2082 = vpop.f32.mrf.mxu0
    %v2083 = vadd.f32 %v1995, %v2082
    %v2084 = vpop.f32.mrf.mxu0
    %v2085 = vpop.f32.mrf.mxu0
    %v2086 = vadd.f32 %v1995, %v2085
    %v2087 = vpop.f32.mrf.mxu0
    %2088 = vmatprep.mubr.bf16.mxu0 0
    %2089 = vmatmul.mubr.bf16.gmra.mxu0 %v2022
    %v2090 = vpop.f32.mrf.mxu0
    %v2091 = vadd.f32 %v1995, %v2090
    %v2092 = vpop.f32.mrf.mxu0
    %v2093 = vpop.f32.mrf.mxu0
    %v2094 = vadd.f32 %v1995, %v2093
    %v2095 = vpop.f32.mrf.mxu0
    %2096 = vdwg.mxu0
    %2097 = vst [vmem:[#allocation2] sm:$0xff] %v2059
    %2098 = vst [vmem:[#allocation2 + $0x8] sm:$0xff] %v2062
    %2099 = vst [vmem:[#allocation2 + $0x10] sm:$0xff] %v2067
    %2100 = vst [vmem:[#allocation2 + $0x18] sm:$0xff] %v2070
    %2101 = vst [vmem:[#allocation2 + $0x20] sm:$0xff] %v2075
    %2102 = vst [vmem:[#allocation2 + $0x28] sm:$0xff] %v2078
    %2103 = vst [vmem:[#allocation2 + $0x30] sm:$0xff] %v2083
    %2104 = vst [vmem:[#allocation2 + $0x38] sm:$0xff] %v2086
    %2105 = vst [vmem:[#allocation2 + $0x40] sm:$0xff] %v2091
    %2106 = vst [vmem:[#allocation2 + $0x48] sm:$0xff] %v2094
    %v2107 = vld [vmem:[%s8] sm:$0xf]
    %v2108 = vld [vmem:[%s8 + $0x4] sm:$0xf]
    %v2109 = vld [vmem:[%s8 + $0x8] sm:$0xf]
    %v2110 = vld [vmem:[%s8 + $0xc] sm:$0xf]
    %s2111 = scalar_lea.vmem %s10, 16
    %v2112 = vld [vmem:[%s2111] sm:$0xff]
    %s2113 = scalar_lea.vmem %s11, 16
    %v2114 = vld [vmem:[%s2113] sm:$0xff]
    %v2115 = vld [vmem:[#allocation2] sm:$0xff]
    %v2116 = vpack.c.bf16 %v2112, %v2112
    %v2121 = vunpack.c.l.b16 %v2107
    %v2122 = vunpack.c.l.b16 %v2108
    %v2123 = vunpack.c.l.b16 %v2109
    %v2124 = vunpack.c.l.b16 %v2110
    %v2125 = vpack.c.b16 %v2122, %v2121
    %v2126 = vpack.c.b16 %v2124, %v2123
    %v2130 = vsel %vm222, %v2116, 0
    %2132 = vmatprep.subr.bf16.mxu0 0
    %2133 = vmatpush1.bf16.msra.mxu0 0
    %2134 = vmatprep.subr.bf16.mxu0 0
    %2135 = vmatpush1.bf16.msra.mxu0 0
    %2136 = vmatprep.subr.bf16.mxu0 0
    %2137 = vmatpush1.bf16.msra.mxu0 0
    %2138 = vmatprep.subr.bf16.mxu0 0
    %2139 = vmatpush1.bf16.msra.mxu0 0
    %2140 = vmatprep.subr.bf16.mxu0 0
    %2141 = vmatpush1.bf16.msra.mxu0 0
    %2142 = vmatprep.subr.bf16.mxu0 0
    %2143 = vmatpush1.bf16.msra.mxu0 0
    %2144 = vmatprep.subr.bf16.mxu0 0
    %2145 = vmatpush1.bf16.msra.mxu0 %v2126
    %2146 = vmatprep.subr.bf16.mxu0 0
    %2147 = vmatpush1.bf16.msra.mxu0 %v2125
    %2148 = vmatprep.subr.bf16.mxu0 0
    %2149 = vmatpush2.bf16.msra.mxu0 0
    %2150 = vmatprep.subr.bf16.mxu0 0
    %2151 = vmatpush2.bf16.msra.mxu0 0
    %2152 = vmatprep.subr.bf16.mxu0 0
    %2153 = vmatpush2.bf16.msra.mxu0 0
    %2154 = vmatprep.subr.bf16.mxu0 0
    %2155 = vmatpush2.bf16.msra.mxu0 0
    %2156 = vmatprep.subr.bf16.mxu0 0
    %2157 = vmatpush2.bf16.msra.mxu0 0
    %2158 = vmatprep.subr.bf16.mxu0 0
    %2159 = vmatpush2.bf16.msra.mxu0 0
    %2160 = vmatprep.subr.bf16.mxu0 0
    %2161 = vmatpush2.bf16.msra.mxu0 0
    %2162 = vmatprep.subr.bf16.mxu0 0
    %2163 = vmatpush2.bf16.msra.mxu0 0
    %2164 = vmatprep.mubr.bf16.mxu0 0
    %2165 = vmatmul.mubr.bf16.gmra.mxu0 %v2130
    %v2166 = vpop.f32.mrf.mxu0
    %v2167 = vadd.f32 0.0, %v2166
    %v2168 = vpop.f32.mrf.mxu0
    %v2169 = vpop.f32.mrf.mxu0
    %v2170 = vpop.f32.mrf.mxu0
    %2171 = vdwg.mxu0
    %v2172 = vadd.f32 %v2115, %v2167
    %v2173 = vxor.u32 %v2172, 2147483648
    %v2174 = vmul.f32 %v2173, 1.442695
    %v2175 = vpow.pop %v2174
    %v2176 = vadd.f32 %v2175, 1.0
    %v2177 = vrcp.pop %v2176
    %v2178 = vmul.f32 1.0, %v2177
    %v2179 = vtanh.pop %v2172
    %2181 = vrot.lane.b32.xlu0 %v2114, 32
    %v2182 = vpop.permute.xlu0 %2181
    %v2184 = vmul.f32 %v2178, %v2182
    %2186 = vrot.lane.b32.xlu0 %v2179, 32
    %v2187 = vpop.permute.xlu0 %2186
    %v2189 = vmul.f32 %v2178, %v2187
    %2191 = vrot.lane.b32.xlu0 %v2189, 32
    %v2192 = vpop.permute.xlu0 %2191
    %v2194 = vadd.f32 %v2184, %v2192
    %v2195 = vtanh.pop %v2194
    %2197 = vrot.lane.b32.xlu0 %v2195, 32
    %v2198 = vpop.permute.xlu0 %2197
    %v2200 = vmul.f32 %v2178, %v2198
    %2202 = vrot.lane.b32.xlu0 %v2200, 64
    %v2203 = vpop.permute.xlu0 %2202
    %2205 = vst.msk [vmem:[#allocation4] sm:$0xff] %vm222, %v2203
    %v2206 = vld [vmem:[%s300] sm:$0xff]
    %v2207 = vpack.c.bf16 %v2200, %v2200
    %2209 = vrot.lane.b32.xlu0 %v2207, 64
    %v2210 = vpop.permute.xlu0 %2209
    %v2212 = vsel %vm222, %v2210, 0
    %2214 = vmatprep.subr.bf16.mxu0 0
    %2215 = vmatpush1.bf16.msra.mxu0 0
    %2216 = vmatprep.subr.bf16.mxu0 0
    %2217 = vmatpush1.bf16.msra.mxu0 0
    %2218 = vmatprep.subr.bf16.mxu0 0
    %2219 = vmatpush1.bf16.msra.mxu0 0
    %2220 = vmatprep.subr.bf16.mxu0 0
    %2221 = vmatpush1.bf16.msra.mxu0 0
    %2222 = vmatprep.subr.bf16.mxu0 0
    %2223 = vmatpush1.bf16.msra.mxu0 0
    %2224 = vmatprep.subr.bf16.mxu0 0
    %2225 = vmatpush1.bf16.msra.mxu0 0
    %2226 = vmatprep.subr.bf16.mxu0 0
    %2227 = vmatpush1.bf16.msra.mxu0 %v2126
    %2228 = vmatprep.subr.bf16.mxu0 0
    %2229 = vmatpush1.bf16.msra.mxu0 %v2125
    %2230 = vmatprep.subr.bf16.mxu0 0
    %2231 = vmatpush2.bf16.msra.mxu0 0
    %2232 = vmatprep.subr.bf16.mxu0 0
    %2233 = vmatpush2.bf16.msra.mxu0 0
    %2234 = vmatprep.subr.bf16.mxu0 0
    %2235 = vmatpush2.bf16.msra.mxu0 0
    %2236 = vmatprep.subr.bf16.mxu0 0
    %2237 = vmatpush2.bf16.msra.mxu0 0
    %2238 = vmatprep.subr.bf16.mxu0 0
    %2239 = vmatpush2.bf16.msra.mxu0 0
    %2240 = vmatprep.subr.bf16.mxu0 0
    %2241 = vmatpush2.bf16.msra.mxu0 0
    %2242 = vmatprep.subr.bf16.mxu0 0
    %2243 = vmatpush2.bf16.msra.mxu0 0
    %2244 = vmatprep.subr.bf16.mxu0 0
    %2245 = vmatpush2.bf16.msra.mxu0 0
    %2246 = vmatprep.mubr.bf16.mxu0 0
    %2247 = vmatmul.mubr.bf16.gmra.mxu0 %v2212
    %v2248 = vpop.f32.mrf.mxu0
    %v2249 = vadd.f32 0.0, %v2248
    %v2250 = vpop.f32.mrf.mxu0
    %v2251 = vpop.f32.mrf.mxu0
    %v2252 = vpop.f32.mrf.mxu0
    %2253 = vdwg.mxu0
    %v2254 = vadd.f32 %v2206, %v2249
    %v2255 = vxor.u32 %v2254, 2147483648
    %v2256 = vmul.f32 %v2255, 1.442695
    %v2257 = vpow.pop %v2256
    %v2258 = vadd.f32 %v2257, 1.0
    %v2259 = vrcp.pop %v2258
    %v2260 = vmul.f32 1.0, %v2259
    %v2261 = vtanh.pop %v2254
    %v2262 = vmul.f32 %v2260, %v2194
    %2264 = vrot.lane.b32.xlu0 %v2261, 32
    %v2265 = vpop.permute.xlu0 %2264
    %v2267 = vmul.f32 %v2260, %v2265
    %2269 = vrot.lane.b32.xlu0 %v2267, 32
    %v2270 = vpop.permute.xlu0 %2269
    %v2272 = vadd.f32 %v2262, %v2270
    %v2273 = vtanh.pop %v2272
    %2275 = vrot.lane.b32.xlu0 %v2273, 32
    %v2276 = vpop.permute.xlu0 %2275
    %v2278 = vmul.f32 %v2260, %v2276
    %2280 = vrot.lane.b32.xlu0 %v2278, 96
    %v2281 = vpop.permute.xlu0 %2280
    %vm2283 = vcmask 523520
    %2284 = vst.msk [vmem:[#allocation4] sm:$0xff] %vm2283, %v2281
    %v2285 = vld [vmem:[%s380] sm:$0xff]
    %v2286 = vpack.c.bf16 %v2278, %v2278
    %2288 = vrot.lane.b32.xlu0 %v2286, 64
    %v2289 = vpop.permute.xlu0 %2288
    %v2291 = vsel %vm222, %v2289, 0
    %2293 = vmatprep.subr.bf16.mxu0 0
    %2294 = vmatpush1.bf16.msra.mxu0 0
    %2295 = vmatprep.subr.bf16.mxu0 0
    %2296 = vmatpush1.bf16.msra.mxu0 0
    %2297 = vmatprep.subr.bf16.mxu0 0
    %2298 = vmatpush1.bf16.msra.mxu0 0
    %2299 = vmatprep.subr.bf16.mxu0 0
    %2300 = vmatpush1.bf16.msra.mxu0 0
    %2301 = vmatprep.subr.bf16.mxu0 0
    %2302 = vmatpush1.bf16.msra.mxu0 0
    %2303 = vmatprep.subr.bf16.mxu0 0
    %2304 = vmatpush1.bf16.msra.mxu0 0
    %2305 = vmatprep.subr.bf16.mxu0 0
    %2306 = vmatpush1.bf16.msra.mxu0 %v2126
    %2307 = vmatprep.subr.bf16.mxu0 0
    %2308 = vmatpush1.bf16.msra.mxu0 %v2125
    %2309 = vmatprep.subr.bf16.mxu0 0
    %2310 = vmatpush2.bf16.msra.mxu0 0
    %2311 = vmatprep.subr.bf16.mxu0 0
    %2312 = vmatpush2.bf16.msra.mxu0 0
    %2313 = vmatprep.subr.bf16.mxu0 0
    %2314 = vmatpush2.bf16.msra.mxu0 0
    %2315 = vmatprep.subr.bf16.mxu0 0
    %2316 = vmatpush2.bf16.msra.mxu0 0
    %2317 = vmatprep.subr.bf16.mxu0 0
    %2318 = vmatpush2.bf16.msra.mxu0 0
    %2319 = vmatprep.subr.bf16.mxu0 0
    %2320 = vmatpush2.bf16.msra.mxu0 0
    %2321 = vmatprep.subr.bf16.mxu0 0
    %2322 = vmatpush2.bf16.msra.mxu0 0
    %2323 = vmatprep.subr.bf16.mxu0 0
    %2324 = vmatpush2.bf16.msra.mxu0 0
    %2325 = vmatprep.mubr.bf16.mxu0 0
    %2326 = vmatmul.mubr.bf16.gmra.mxu0 %v2291
    %v2327 = vpop.f32.mrf.mxu0
    %v2328 = vadd.f32 0.0, %v2327
    %v2329 = vpop.f32.mrf.mxu0
    %v2330 = vpop.f32.mrf.mxu0
    %v2331 = vpop.f32.mrf.mxu0
    %2332 = vdwg.mxu0
    %v2333 = vadd.f32 %v2285, %v2328
    %v2334 = vxor.u32 %v2333, 2147483648
    %v2335 = vmul.f32 %v2334, 1.442695
    %v2336 = vpow.pop %v2335
    %v2337 = vadd.f32 %v2336, 1.0
    %v2338 = vrcp.pop %v2337
    %v2339 = vmul.f32 1.0, %v2338
    %v2340 = vtanh.pop %v2333
    %v2341 = vmul.f32 %v2339, %v2272
    %2343 = vrot.lane.b32.xlu0 %v2340, 32
    %v2344 = vpop.permute.xlu0 %2343
    %v2346 = vmul.f32 %v2339, %v2344
    %2348 = vrot.lane.b32.xlu0 %v2346, 32
    %v2349 = vpop.permute.xlu0 %2348
    %v2351 = vadd.f32 %v2341, %v2349
    %v2352 = vtanh.pop %v2351
    %2354 = vrot.lane.b32.xlu0 %v2352, 32
    %v2355 = vpop.permute.xlu0 %2354
    %v2357 = vmul.f32 %v2339, %v2355
    %vm2358 = vcmask 785920
    %2359 = vst.msk [vmem:[#allocation4] sm:$0xff] %vm2358, %v2357
    %v2360 = vld [vmem:[%s460] sm:$0xff]
    %v2361 = vpack.c.bf16 %v2357, %v2357
    %2363 = vrot.lane.b32.xlu0 %v2361, 64
    %v2364 = vpop.permute.xlu0 %2363
    %v2366 = vsel %vm222, %v2364, 0
    %2368 = vmatprep.subr.bf16.mxu0 0
    %2369 = vmatpush1.bf16.msra.mxu0 0
    %2370 = vmatprep.subr.bf16.mxu0 0
    %2371 = vmatpush1.bf16.msra.mxu0 0
    %2372 = vmatprep.subr.bf16.mxu0 0
    %2373 = vmatpush1.bf16.msra.mxu0 0
    %2374 = vmatprep.subr.bf16.mxu0 0
    %2375 = vmatpush1.bf16.msra.mxu0 0
    %2376 = vmatprep.subr.bf16.mxu0 0
    %2377 = vmatpush1.bf16.msra.mxu0 0
    %2378 = vmatprep.subr.bf16.mxu0 0
    %2379 = vmatpush1.bf16.msra.mxu0 0
    %2380 = vmatprep.subr.bf16.mxu0 0
    %2381 = vmatpush1.bf16.msra.mxu0 %v2126
    %2382 = vmatprep.subr.bf16.mxu0 0
    %2383 = vmatpush1.bf16.msra.mxu0 %v2125
    %2384 = vmatprep.subr.bf16.mxu0 0
    %2385 = vmatpush2.bf16.msra.mxu0 0
    %2386 = vmatprep.subr.bf16.mxu0 0
    %2387 = vmatpush2.bf16.msra.mxu0 0
    %2388 = vmatprep.subr.bf16.mxu0 0
    %2389 = vmatpush2.bf16.msra.mxu0 0
    %2390 = vmatprep.subr.bf16.mxu0 0
    %2391 = vmatpush2.bf16.msra.mxu0 0
    %2392 = vmatprep.subr.bf16.mxu0 0
    %2393 = vmatpush2.bf16.msra.mxu0 0
    %2394 = vmatprep.subr.bf16.mxu0 0
    %2395 = vmatpush2.bf16.msra.mxu0 0
    %2396 = vmatprep.subr.bf16.mxu0 0
    %2397 = vmatpush2.bf16.msra.mxu0 0
    %2398 = vmatprep.subr.bf16.mxu0 0
    %2399 = vmatpush2.bf16.msra.mxu0 0
    %2400 = vmatprep.mubr.bf16.mxu0 0
    %2401 = vmatmul.mubr.bf16.gmra.mxu0 %v2366
    %v2402 = vpop.f32.mrf.mxu0
    %v2403 = vadd.f32 0.0, %v2402
    %v2404 = vpop.f32.mrf.mxu0
    %v2405 = vpop.f32.mrf.mxu0
    %v2406 = vpop.f32.mrf.mxu0
    %2407 = vdwg.mxu0
    %v2408 = vadd.f32 %v2360, %v2403
    %v2409 = vxor.u32 %v2408, 2147483648
    %v2410 = vmul.f32 %v2409, 1.442695
    %v2411 = vpow.pop %v2410
    %v2412 = vadd.f32 %v2411, 1.0
    %v2413 = vrcp.pop %v2412
    %v2414 = vmul.f32 1.0, %v2413
    %v2415 = vtanh.pop %v2408
    %v2416 = vmul.f32 %v2414, %v2351
    %2418 = vrot.lane.b32.xlu0 %v2415, 32
    %v2419 = vpop.permute.xlu0 %2418
    %v2421 = vmul.f32 %v2414, %v2419
    %2423 = vrot.lane.b32.xlu0 %v2421, 32
    %v2424 = vpop.permute.xlu0 %2423
    %v2426 = vadd.f32 %v2416, %v2424
    %v2427 = vtanh.pop %v2426
    %2429 = vrot.lane.b32.xlu0 %v2427, 32
    %v2430 = vpop.permute.xlu0 %2429
    %v2432 = vmul.f32 %v2414, %v2430
    %2434 = vrot.lane.b32.xlu0 %v2432, 32
    %v2435 = vpop.permute.xlu0 %2434
    %vm2437 = vcmask 1048320
    %2438 = vst.msk [vmem:[#allocation4] sm:$0xff] %vm2437, %v2435
    %v2439 = vld [vmem:[%s540] sm:$0xff]
    %v2440 = vpack.c.bf16 %v2432, %v2432
    %2442 = vrot.lane.b32.xlu0 %v2440, 64
    %v2443 = vpop.permute.xlu0 %2442
    %v2445 = vsel %vm222, %v2443, 0
    %2447 = vmatprep.subr.bf16.mxu0 0
    %2448 = vmatpush1.bf16.msra.mxu0 0
    %2449 = vmatprep.subr.bf16.mxu0 0
    %2450 = vmatpush1.bf16.msra.mxu0 0
    %2451 = vmatprep.subr.bf16.mxu0 0
    %2452 = vmatpush1.bf16.msra.mxu0 0
    %2453 = vmatprep.subr.bf16.mxu0 0
    %2454 = vmatpush1.bf16.msra.mxu0 0
    %2455 = vmatprep.subr.bf16.mxu0 0
    %2456 = vmatpush1.bf16.msra.mxu0 0
    %2457 = vmatprep.subr.bf16.mxu0 0
    %2458 = vmatpush1.bf16.msra.mxu0 0
    %2459 = vmatprep.subr.bf16.mxu0 0
    %2460 = vmatpush1.bf16.msra.mxu0 %v2126
    %2461 = vmatprep.subr.bf16.mxu0 0
    %2462 = vmatpush1.bf16.msra.mxu0 %v2125
    %2463 = vmatprep.subr.bf16.mxu0 0
    %2464 = vmatpush2.bf16.msra.mxu0 0
    %2465 = vmatprep.subr.bf16.mxu0 0
    %2466 = vmatpush2.bf16.msra.mxu0 0
    %2467 = vmatprep.subr.bf16.mxu0 0
    %2468 = vmatpush2.bf16.msra.mxu0 0
    %2469 = vmatprep.subr.bf16.mxu0 0
    %2470 = vmatpush2.bf16.msra.mxu0 0
    %2471 = vmatprep.subr.bf16.mxu0 0
    %2472 = vmatpush2.bf16.msra.mxu0 0
    %2473 = vmatprep.subr.bf16.mxu0 0
    %2474 = vmatpush2.bf16.msra.mxu0 0
    %2475 = vmatprep.subr.bf16.mxu0 0
    %2476 = vmatpush2.bf16.msra.mxu0 0
    %2477 = vmatprep.subr.bf16.mxu0 0
    %2478 = vmatpush2.bf16.msra.mxu0 0
    %2479 = vmatprep.mubr.bf16.mxu0 0
    %2480 = vmatmul.mubr.bf16.gmra.mxu0 %v2445
    %v2481 = vpop.f32.mrf.mxu0
    %v2482 = vadd.f32 0.0, %v2481
    %v2483 = vpop.f32.mrf.mxu0
    %v2484 = vpop.f32.mrf.mxu0
    %v2485 = vpop.f32.mrf.mxu0
    %2486 = vdwg.mxu0
    %v2487 = vadd.f32 %v2439, %v2482
    %v2488 = vxor.u32 %v2487, 2147483648
    %v2489 = vmul.f32 %v2488, 1.442695
    %v2490 = vpow.pop %v2489
    %v2491 = vadd.f32 %v2490, 1.0
    %v2492 = vrcp.pop %v2491
    %v2493 = vmul.f32 1.0, %v2492
    %v2494 = vtanh.pop %v2487
    %v2495 = vmul.f32 %v2493, %v2426
    %2497 = vrot.lane.b32.xlu0 %v2494, 32
    %v2498 = vpop.permute.xlu0 %2497
    %v2500 = vmul.f32 %v2493, %v2498
    %2502 = vrot.lane.b32.xlu0 %v2500, 32
    %v2503 = vpop.permute.xlu0 %2502
    %v2505 = vadd.f32 %v2495, %v2503
    %v2506 = vtanh.pop %v2505
    %2508 = vrot.lane.b32.xlu0 %v2506, 32
    %v2509 = vpop.permute.xlu0 %2508
    %v2511 = vmul.f32 %v2493, %v2509
    %2513 = vrot.lane.b32.xlu0 %v2511, 64
    %v2514 = vpop.permute.xlu0 %2513
    %2516 = vst.msk [vmem:[#allocation4 + $0x8] sm:$0xff] %vm222, %v2514
    %v2517 = vld [vmem:[%s620] sm:$0xff]
    %v2518 = vpack.c.bf16 %v2511, %v2511
    %2520 = vrot.lane.b32.xlu0 %v2518, 64
    %v2521 = vpop.permute.xlu0 %2520
    %v2523 = vsel %vm222, %v2521, 0
    %2525 = vmatprep.subr.bf16.mxu0 0
    %2526 = vmatpush1.bf16.msra.mxu0 0
    %2527 = vmatprep.subr.bf16.mxu0 0
    %2528 = vmatpush1.bf16.msra.mxu0 0
    %2529 = vmatprep.subr.bf16.mxu0 0
    %2530 = vmatpush1.bf16.msra.mxu0 0
    %2531 = vmatprep.subr.bf16.mxu0 0
    %2532 = vmatpush1.bf16.msra.mxu0 0
    %2533 = vmatprep.subr.bf16.mxu0 0
    %2534 = vmatpush1.bf16.msra.mxu0 0
    %2535 = vmatprep.subr.bf16.mxu0 0
    %2536 = vmatpush1.bf16.msra.mxu0 0
    %2537 = vmatprep.subr.bf16.mxu0 0
    %2538 = vmatpush1.bf16.msra.mxu0 %v2126
    %2539 = vmatprep.subr.bf16.mxu0 0
    %2540 = vmatpush1.bf16.msra.mxu0 %v2125
    %2541 = vmatprep.subr.bf16.mxu0 0
    %2542 = vmatpush2.bf16.msra.mxu0 0
    %2543 = vmatprep.subr.bf16.mxu0 0
    %2544 = vmatpush2.bf16.msra.mxu0 0
    %2545 = vmatprep.subr.bf16.mxu0 0
    %2546 = vmatpush2.bf16.msra.mxu0 0
    %2547 = vmatprep.subr.bf16.mxu0 0
    %2548 = vmatpush2.bf16.msra.mxu0 0
    %2549 = vmatprep.subr.bf16.mxu0 0
    %2550 = vmatpush2.bf16.msra.mxu0 0
    %2551 = vmatprep.subr.bf16.mxu0 0
    %2552 = vmatpush2.bf16.msra.mxu0 0
    %2553 = vmatprep.subr.bf16.mxu0 0
    %2554 = vmatpush2.bf16.msra.mxu0 0
    %2555 = vmatprep.subr.bf16.mxu0 0
    %2556 = vmatpush2.bf16.msra.mxu0 0
    %2557 = vmatprep.mubr.bf16.mxu0 0
    %2558 = vmatmul.mubr.bf16.gmra.mxu0 %v2523
    %v2559 = vpop.f32.mrf.mxu0
    %v2560 = vadd.f32 0.0, %v2559
    %v2561 = vpop.f32.mrf.mxu0
    %v2562 = vpop.f32.mrf.mxu0
    %v2563 = vpop.f32.mrf.mxu0
    %2564 = vdwg.mxu0
    %v2565 = vadd.f32 %v2517, %v2560
    %v2566 = vxor.u32 %v2565, 2147483648
    %v2567 = vmul.f32 %v2566, 1.442695
    %v2568 = vpow.pop %v2567
    %v2569 = vadd.f32 %v2568, 1.0
    %v2570 = vrcp.pop %v2569
    %v2571 = vmul.f32 1.0, %v2570
    %v2572 = vtanh.pop %v2565
    %v2573 = vmul.f32 %v2571, %v2505
    %2575 = vrot.lane.b32.xlu0 %v2572, 32
    %v2576 = vpop.permute.xlu0 %2575
    %v2578 = vmul.f32 %v2571, %v2576
    %2580 = vrot.lane.b32.xlu0 %v2578, 32
    %v2581 = vpop.permute.xlu0 %2580
    %v2583 = vadd.f32 %v2573, %v2581
    %v2584 = vtanh.pop %v2583
    %2586 = vrot.lane.b32.xlu0 %v2584, 32
    %v2587 = vpop.permute.xlu0 %2586
    %v2589 = vmul.f32 %v2571, %v2587
    %2591 = vrot.lane.b32.xlu0 %v2589, 96
    %v2592 = vpop.permute.xlu0 %2591
    %2594 = vst.msk [vmem:[#allocation4 + $0x8] sm:$0xff] %vm2283, %v2592
    %v2595 = vld [vmem:[%s700] sm:$0xff]
    %v2596 = vpack.c.bf16 %v2589, %v2589
    %2598 = vrot.lane.b32.xlu0 %v2596, 64
    %v2599 = vpop.permute.xlu0 %2598
    %v2601 = vsel %vm222, %v2599, 0
    %2603 = vmatprep.subr.bf16.mxu0 0
    %2604 = vmatpush1.bf16.msra.mxu0 0
    %2605 = vmatprep.subr.bf16.mxu0 0
    %2606 = vmatpush1.bf16.msra.mxu0 0
    %2607 = vmatprep.subr.bf16.mxu0 0
    %2608 = vmatpush1.bf16.msra.mxu0 0
    %2609 = vmatprep.subr.bf16.mxu0 0
    %2610 = vmatpush1.bf16.msra.mxu0 0
    %2611 = vmatprep.subr.bf16.mxu0 0
    %2612 = vmatpush1.bf16.msra.mxu0 0
    %2613 = vmatprep.subr.bf16.mxu0 0
    %2614 = vmatpush1.bf16.msra.mxu0 0
    %2615 = vmatprep.subr.bf16.mxu0 0
    %2616 = vmatpush1.bf16.msra.mxu0 %v2126
    %2617 = vmatprep.subr.bf16.mxu0 0
    %2618 = vmatpush1.bf16.msra.mxu0 %v2125
    %2619 = vmatprep.subr.bf16.mxu0 0
    %2620 = vmatpush2.bf16.msra.mxu0 0
    %2621 = vmatprep.subr.bf16.mxu0 0
    %2622 = vmatpush2.bf16.msra.mxu0 0
    %2623 = vmatprep.subr.bf16.mxu0 0
    %2624 = vmatpush2.bf16.msra.mxu0 0
    %2625 = vmatprep.subr.bf16.mxu0 0
    %2626 = vmatpush2.bf16.msra.mxu0 0
    %2627 = vmatprep.subr.bf16.mxu0 0
    %2628 = vmatpush2.bf16.msra.mxu0 0
    %2629 = vmatprep.subr.bf16.mxu0 0
    %2630 = vmatpush2.bf16.msra.mxu0 0
    %2631 = vmatprep.subr.bf16.mxu0 0
    %2632 = vmatpush2.bf16.msra.mxu0 0
    %2633 = vmatprep.subr.bf16.mxu0 0
    %2634 = vmatpush2.bf16.msra.mxu0 0
    %2635 = vmatprep.mubr.bf16.mxu0 0
    %2636 = vmatmul.mubr.bf16.gmra.mxu0 %v2601
    %v2637 = vpop.f32.mrf.mxu0
    %v2638 = vadd.f32 0.0, %v2637
    %v2639 = vpop.f32.mrf.mxu0
    %v2640 = vpop.f32.mrf.mxu0
    %v2641 = vpop.f32.mrf.mxu0
    %2642 = vdwg.mxu0
    %v2643 = vadd.f32 %v2595, %v2638
    %v2644 = vxor.u32 %v2643, 2147483648
    %v2645 = vmul.f32 %v2644, 1.442695
    %v2646 = vpow.pop %v2645
    %v2647 = vadd.f32 %v2646, 1.0
    %v2648 = vrcp.pop %v2647
    %v2649 = vmul.f32 1.0, %v2648
    %v2650 = vtanh.pop %v2643
    %v2651 = vmul.f32 %v2649, %v2583
    %2653 = vrot.lane.b32.xlu0 %v2650, 32
    %v2654 = vpop.permute.xlu0 %2653
    %v2656 = vmul.f32 %v2649, %v2654
    %2658 = vrot.lane.b32.xlu0 %v2656, 32
    %v2659 = vpop.permute.xlu0 %2658
    %v2661 = vadd.f32 %v2651, %v2659
    %v2662 = vtanh.pop %v2661
    %2664 = vrot.lane.b32.xlu0 %v2662, 32
    %v2665 = vpop.permute.xlu0 %2664
    %v2667 = vmul.f32 %v2649, %v2665
    %2668 = vst.msk [vmem:[#allocation4 + $0x8] sm:$0xff] %vm2358, %v2667
    %v2669 = vld [vmem:[%s780] sm:$0xff]
    %v2670 = vpack.c.bf16 %v2667, %v2667
    %2672 = vrot.lane.b32.xlu0 %v2670, 64
    %v2673 = vpop.permute.xlu0 %2672
    %v2675 = vsel %vm222, %v2673, 0
    %2677 = vmatprep.subr.bf16.mxu0 0
    %2678 = vmatpush1.bf16.msra.mxu0 0
    %2679 = vmatprep.subr.bf16.mxu0 0
    %2680 = vmatpush1.bf16.msra.mxu0 0
    %2681 = vmatprep.subr.bf16.mxu0 0
    %2682 = vmatpush1.bf16.msra.mxu0 0
    %2683 = vmatprep.subr.bf16.mxu0 0
    %2684 = vmatpush1.bf16.msra.mxu0 0
    %2685 = vmatprep.subr.bf16.mxu0 0
    %2686 = vmatpush1.bf16.msra.mxu0 0
    %2687 = vmatprep.subr.bf16.mxu0 0
    %2688 = vmatpush1.bf16.msra.mxu0 0
    %2689 = vmatprep.subr.bf16.mxu0 0
    %2690 = vmatpush1.bf16.msra.mxu0 %v2126
    %2691 = vmatprep.subr.bf16.mxu0 0
    %2692 = vmatpush1.bf16.msra.mxu0 %v2125
    %2693 = vmatprep.subr.bf16.mxu0 0
    %2694 = vmatpush2.bf16.msra.mxu0 0
    %2695 = vmatprep.subr.bf16.mxu0 0
    %2696 = vmatpush2.bf16.msra.mxu0 0
    %2697 = vmatprep.subr.bf16.mxu0 0
    %2698 = vmatpush2.bf16.msra.mxu0 0
    %2699 = vmatprep.subr.bf16.mxu0 0
    %2700 = vmatpush2.bf16.msra.mxu0 0
    %2701 = vmatprep.subr.bf16.mxu0 0
    %2702 = vmatpush2.bf16.msra.mxu0 0
    %2703 = vmatprep.subr.bf16.mxu0 0
    %2704 = vmatpush2.bf16.msra.mxu0 0
    %2705 = vmatprep.subr.bf16.mxu0 0
    %2706 = vmatpush2.bf16.msra.mxu0 0
    %2707 = vmatprep.subr.bf16.mxu0 0
    %2708 = vmatpush2.bf16.msra.mxu0 0
    %2709 = vmatprep.mubr.bf16.mxu0 0
    %2710 = vmatmul.mubr.bf16.gmra.mxu0 %v2675
    %v2711 = vpop.f32.mrf.mxu0
    %v2712 = vadd.f32 0.0, %v2711
    %v2713 = vpop.f32.mrf.mxu0
    %v2714 = vpop.f32.mrf.mxu0
    %v2715 = vpop.f32.mrf.mxu0
    %2716 = vdwg.mxu0
    %v2717 = vadd.f32 %v2669, %v2712
    %v2718 = vxor.u32 %v2717, 2147483648
    %v2719 = vmul.f32 %v2718, 1.442695
    %v2720 = vpow.pop %v2719
    %v2721 = vadd.f32 %v2720, 1.0
    %v2722 = vrcp.pop %v2721
    %v2723 = vmul.f32 1.0, %v2722
    %v2724 = vtanh.pop %v2717
    %v2725 = vmul.f32 %v2723, %v2661
    %2727 = vrot.lane.b32.xlu0 %v2724, 32
    %v2728 = vpop.permute.xlu0 %2727
    %v2730 = vmul.f32 %v2723, %v2728
    %2732 = vrot.lane.b32.xlu0 %v2730, 32
    %v2733 = vpop.permute.xlu0 %2732
    %v2735 = vadd.f32 %v2725, %v2733
    %v2736 = vtanh.pop %v2735
    %2738 = vrot.lane.b32.xlu0 %v2736, 32
    %v2739 = vpop.permute.xlu0 %2738
    %v2741 = vmul.f32 %v2723, %v2739
    %2743 = vrot.lane.b32.xlu0 %v2741, 32
    %v2744 = vpop.permute.xlu0 %2743
    %2746 = vst.msk [vmem:[#allocation4 + $0x8] sm:$0xff] %vm2437, %v2744
    %v2747 = vld [vmem:[%s860] sm:$0xff]
    %v2748 = vpack.c.bf16 %v2741, %v2741
    %2750 = vrot.lane.b32.xlu0 %v2748, 64
    %v2751 = vpop.permute.xlu0 %2750
    %v2753 = vsel %vm222, %v2751, 0
    %2755 = vmatprep.subr.bf16.mxu0 0
    %2756 = vmatpush1.bf16.msra.mxu0 0
    %2757 = vmatprep.subr.bf16.mxu0 0
    %2758 = vmatpush1.bf16.msra.mxu0 0
    %2759 = vmatprep.subr.bf16.mxu0 0
    %2760 = vmatpush1.bf16.msra.mxu0 0
    %2761 = vmatprep.subr.bf16.mxu0 0
    %2762 = vmatpush1.bf16.msra.mxu0 0
    %2763 = vmatprep.subr.bf16.mxu0 0
    %2764 = vmatpush1.bf16.msra.mxu0 0
    %2765 = vmatprep.subr.bf16.mxu0 0
    %2766 = vmatpush1.bf16.msra.mxu0 0
    %2767 = vmatprep.subr.bf16.mxu0 0
    %2768 = vmatpush1.bf16.msra.mxu0 %v2126
    %2769 = vmatprep.subr.bf16.mxu0 0
    %2770 = vmatpush1.bf16.msra.mxu0 %v2125
    %2771 = vmatprep.subr.bf16.mxu0 0
    %2772 = vmatpush2.bf16.msra.mxu0 0
    %2773 = vmatprep.subr.bf16.mxu0 0
    %2774 = vmatpush2.bf16.msra.mxu0 0
    %2775 = vmatprep.subr.bf16.mxu0 0
    %2776 = vmatpush2.bf16.msra.mxu0 0
    %2777 = vmatprep.subr.bf16.mxu0 0
    %2778 = vmatpush2.bf16.msra.mxu0 0
    %2779 = vmatprep.subr.bf16.mxu0 0
    %2780 = vmatpush2.bf16.msra.mxu0 0
    %2781 = vmatprep.subr.bf16.mxu0 0
    %2782 = vmatpush2.bf16.msra.mxu0 0
    %2783 = vmatprep.subr.bf16.mxu0 0
    %2784 = vmatpush2.bf16.msra.mxu0 0
    %2785 = vmatprep.subr.bf16.mxu0 0
    %2786 = vmatpush2.bf16.msra.mxu0 0
    %2787 = vmatprep.mubr.bf16.mxu0 0
    %2788 = vmatmul.mubr.bf16.gmra.mxu0 %v2753
    %v2789 = vpop.f32.mrf.mxu0
    %v2790 = vadd.f32 0.0, %v2789
    %v2791 = vpop.f32.mrf.mxu0
    %v2792 = vpop.f32.mrf.mxu0
    %v2793 = vpop.f32.mrf.mxu0
    %2794 = vdwg.mxu0
    %v2795 = vadd.f32 %v2747, %v2790
    %v2796 = vxor.u32 %v2795, 2147483648
    %v2797 = vmul.f32 %v2796, 1.442695
    %v2798 = vpow.pop %v2797
    %v2799 = vadd.f32 %v2798, 1.0
    %v2800 = vrcp.pop %v2799
    %v2801 = vmul.f32 1.0, %v2800
    %v2802 = vtanh.pop %v2795
    %v2803 = vmul.f32 %v2801, %v2735
    %2805 = vrot.lane.b32.xlu0 %v2802, 32
    %v2806 = vpop.permute.xlu0 %2805
    %v2808 = vmul.f32 %v2801, %v2806
    %2810 = vrot.lane.b32.xlu0 %v2808, 32
    %v2811 = vpop.permute.xlu0 %2810
    %v2813 = vadd.f32 %v2803, %v2811
    %v2814 = vtanh.pop %v2813
    %2816 = vrot.lane.b32.xlu0 %v2814, 32
    %v2817 = vpop.permute.xlu0 %2816
    %v2819 = vmul.f32 %v2801, %v2817
    %2821 = vrot.lane.b32.xlu0 %v2819, 64
    %v2822 = vpop.permute.xlu0 %2821
    %2824 = vst.msk [vmem:[#allocation4 + $0x10] sm:$0xff] %vm222, %v2822
    %v2825 = vld [vmem:[%s940] sm:$0xff]
    %v2826 = vpack.c.bf16 %v2819, %v2819
    %2828 = vrot.lane.b32.xlu0 %v2826, 64
    %v2829 = vpop.permute.xlu0 %2828
    %v2831 = vsel %vm222, %v2829, 0
    %2833 = vmatprep.subr.bf16.mxu0 0
    %2834 = vmatpush1.bf16.msra.mxu0 0
    %2835 = vmatprep.subr.bf16.mxu0 0
    %2836 = vmatpush1.bf16.msra.mxu0 0
    %2837 = vmatprep.subr.bf16.mxu0 0
    %2838 = vmatpush1.bf16.msra.mxu0 0
    %2839 = vmatprep.subr.bf16.mxu0 0
    %2840 = vmatpush1.bf16.msra.mxu0 0
    %2841 = vmatprep.subr.bf16.mxu0 0
    %2842 = vmatpush1.bf16.msra.mxu0 0
    %2843 = vmatprep.subr.bf16.mxu0 0
    %2844 = vmatpush1.bf16.msra.mxu0 0
    %2845 = vmatprep.subr.bf16.mxu0 0
    %2846 = vmatpush1.bf16.msra.mxu0 %v2126
    %2847 = vmatprep.subr.bf16.mxu0 0
    %2848 = vmatpush1.bf16.msra.mxu0 %v2125
    %2849 = vmatprep.subr.bf16.mxu0 0
    %2850 = vmatpush2.bf16.msra.mxu0 0
    %2851 = vmatprep.subr.bf16.mxu0 0
    %2852 = vmatpush2.bf16.msra.mxu0 0
    %2853 = vmatprep.subr.bf16.mxu0 0
    %2854 = vmatpush2.bf16.msra.mxu0 0
    %2855 = vmatprep.subr.bf16.mxu0 0
    %2856 = vmatpush2.bf16.msra.mxu0 0
    %2857 = vmatprep.subr.bf16.mxu0 0
    %2858 = vmatpush2.bf16.msra.mxu0 0
    %2859 = vmatprep.subr.bf16.mxu0 0
    %2860 = vmatpush2.bf16.msra.mxu0 0
    %2861 = vmatprep.subr.bf16.mxu0 0
    %2862 = vmatpush2.bf16.msra.mxu0 0
    %2863 = vmatprep.subr.bf16.mxu0 0
    %2864 = vmatpush2.bf16.msra.mxu0 0
    %2865 = vmatprep.mubr.bf16.mxu0 0
    %2866 = vmatmul.mubr.bf16.gmra.mxu0 %v2831
    %v2867 = vpop.f32.mrf.mxu0
    %v2868 = vadd.f32 0.0, %v2867
    %v2869 = vpop.f32.mrf.mxu0
    %v2870 = vpop.f32.mrf.mxu0
    %v2871 = vpop.f32.mrf.mxu0
    %2872 = vdwg.mxu0
    %v2873 = vadd.f32 %v2825, %v2868
    %v2874 = vxor.u32 %v2873, 2147483648
    %v2875 = vmul.f32 %v2874, 1.442695
    %v2876 = vpow.pop %v2875
    %v2877 = vadd.f32 %v2876, 1.0
    %v2878 = vrcp.pop %v2877
    %v2879 = vmul.f32 1.0, %v2878
    %v2880 = vtanh.pop %v2873
    %v2881 = vmul.f32 %v2879, %v2813
    %2883 = vrot.lane.b32.xlu0 %v2880, 32
    %v2884 = vpop.permute.xlu0 %2883
    %v2886 = vmul.f32 %v2879, %v2884
    %2888 = vrot.lane.b32.xlu0 %v2886, 32
    %v2889 = vpop.permute.xlu0 %2888
    %v2891 = vadd.f32 %v2881, %v2889
    %v2892 = vtanh.pop %v2891
    %2894 = vrot.lane.b32.xlu0 %v2892, 32
    %v2895 = vpop.permute.xlu0 %2894
    %v2897 = vmul.f32 %v2879, %v2895
    %2899 = vrot.lane.b32.xlu0 %v2897, 96
    %v2900 = vpop.permute.xlu0 %2899
    %2902 = vst.msk [vmem:[#allocation4 + $0x10] sm:$0xff] %vm2283, %v2900
    %2903 = vrot.lane.b32.xlu0 %v2897, 64
    %v2904 = vpop.permute.xlu0 %2903
    %s2906 = scalar_lea.vmem [#allocation7], 16
    %2907 = vst.msk [vmem:[%s2906] sm:$0xff] %vm222, %v2904
    %2909 = vrot.lane.b32.xlu0 %v2891, 96
    %v2910 = vpop.permute.xlu0 %2909
    %s2912 = scalar_lea.vmem [#allocation9], 16
    %2913 = vst.msk [vmem:[%s2912] sm:$0xff] %vm222, %v2910
    %v2914 = vld [vmem:[#allocation4] sm:$0xff]
    %v2915 = vld [vmem:[#allocation4 + $0x8] sm:$0xff]
    %v2916 = vld [vmem:[#allocation4 + $0x10] sm:$0xff]
    %v2917 = vpack.c.bf16 %v2914, %v2914
    %v2918 = vpack.c.bf16 %v2915, %v2915
    %v2919 = vpack.c.bf16 %v2916, %v2916
    %v2920 = vld [vmem:[%s12] sm:$0xf]
    %v2921 = vld [vmem:[%s12 + $0x4] sm:$0xf]
    %v2922 = vld [vmem:[%s12 + $0x8] sm:$0xf]
    %v2923 = vld [vmem:[%s12 + $0xc] sm:$0xf]
    %v2924 = vld [vmem:[%s12 + $0x10] sm:$0xf]
    %v2925 = vld [vmem:[%s12 + $0x14] sm:$0xf]
    %v2926 = vld [vmem:[%s12 + $0x18] sm:$0xf]
    %v2927 = vld [vmem:[%s12 + $0x1c] sm:$0xf]
    %v2928 = vld [vmem:[%s12 + $0x20] sm:$0xf]
    %v2929 = vld [vmem:[%s12 + $0x24] sm:$0xf]
    %v2930 = vld [vmem:[%s12 + $0x28] sm:$0xf]
    %v2931 = vld [vmem:[%s12 + $0x2c] sm:$0xf]
    %v2932 = vld [vmem:[%s12 + $0x30] sm:$0xf]
    %v2933 = vld [vmem:[%s12 + $0x34] sm:$0xf]
    %v2934 = vld [vmem:[%s12 + $0x38] sm:$0xf]
    %v2935 = vld [vmem:[%s12 + $0x3c] sm:$0xf]
    %v2936 = vld [vmem:[%s12 + $0x40] sm:$0xf]
    %v2937 = vld [vmem:[%s12 + $0x44] sm:$0xf]
    %v2938 = vld [vmem:[%s12 + $0x48] sm:$0xf]
    %v2939 = vld [vmem:[%s12 + $0x4c] sm:$0xf]
    %v2940 = vld [vmem:[%s12 + $0x50] sm:$0xf]
    %v2941 = vld [vmem:[%s12 + $0x54] sm:$0xf]
    %v2942 = vld [vmem:[%s12 + $0x58] sm:$0xf]
    %v2943 = vld [vmem:[%s12 + $0x5c] sm:$0xf]
    %v2944 = vld [vmem:[%s12 + $0x60] sm:$0xf]
    %v2945 = vld [vmem:[%s12 + $0x64] sm:$0xf]
    %v2946 = vld [vmem:[%s12 + $0x68] sm:$0xf]
    %v2947 = vld [vmem:[%s12 + $0x6c] sm:$0xf]
    %v2948 = vld [vmem:[%s12 + $0x70] sm:$0xf]
    %v2949 = vld [vmem:[%s12 + $0x74] sm:$0xf]
    %v2950 = vld [vmem:[%s12 + $0x78] sm:$0xf]
    %v2951 = vld [vmem:[%s12 + $0x7c] sm:$0xf]
    %v2952 = vld [vmem:[%s12 + $0x80] sm:$0xf]
    %v2953 = vld [vmem:[%s12 + $0x84] sm:$0xf]
    %v2954 = vld [vmem:[%s12 + $0x88] sm:$0xf]
    %v2955 = vld [vmem:[%s12 + $0x8c] sm:$0xf]
    %v2956 = vld [vmem:[%s12 + $0x90] sm:$0xf]
    %v2957 = vld [vmem:[%s12 + $0x94] sm:$0xf]
    %v2958 = vld [vmem:[%s12 + $0x98] sm:$0xf]
    %v2959 = vld [vmem:[%s12 + $0x9c] sm:$0xf]
    %v2960 = vld [vmem:[%s13] sm:$0x1]
    %v2962 = vlaneseq
    %v2963 = vshrl.u32 %v2962, 7
    %v2964 = vsub.s32 0, %v2963
    %v2965 = vrot.slane %v2960, %v2964
    %v3007 = vunpack.c.l.b16 %v2920
    %v3008 = vunpack.c.l.b16 %v2921
    %v3009 = vunpack.c.l.b16 %v2922
    %v3010 = vunpack.c.l.b16 %v2923
    %v3011 = vunpack.c.l.b16 %v2924
    %v3012 = vunpack.c.l.b16 %v2925
    %v3013 = vunpack.c.l.b16 %v2926
    %v3014 = vunpack.c.l.b16 %v2927
    %v3015 = vunpack.c.l.b16 %v2928
    %v3016 = vunpack.c.l.b16 %v2929
    %v3017 = vunpack.c.l.b16 %v2930
    %v3018 = vunpack.c.l.b16 %v2931
    %v3019 = vunpack.c.l.b16 %v2932
    %v3020 = vunpack.c.l.b16 %v2933
    %v3021 = vunpack.c.l.b16 %v2934
    %v3022 = vunpack.c.l.b16 %v2935
    %v3023 = vunpack.c.l.b16 %v2936
    %v3024 = vunpack.c.l.b16 %v2937
    %v3025 = vunpack.c.l.b16 %v2938
    %v3026 = vunpack.c.l.b16 %v2939
    %v3027 = vunpack.c.l.b16 %v2940
    %v3028 = vunpack.c.l.b16 %v2941
    %v3029 = vunpack.c.l.b16 %v2942
    %v3030 = vunpack.c.l.b16 %v2943
    %v3031 = vunpack.c.l.b16 %v2944
    %v3032 = vunpack.c.l.b16 %v2945
    %v3033 = vunpack.c.l.b16 %v2946
    %v3034 = vunpack.c.l.b16 %v2947
    %v3035 = vunpack.c.l.b16 %v2948
    %v3036 = vunpack.c.l.b16 %v2949
    %v3037 = vunpack.c.l.b16 %v2950
    %v3038 = vunpack.c.l.b16 %v2951
    %v3039 = vunpack.c.l.b16 %v2952
    %v3040 = vunpack.c.l.b16 %v2953
    %v3041 = vunpack.c.l.b16 %v2954
    %v3042 = vunpack.c.l.b16 %v2955
    %v3043 = vunpack.c.l.b16 %v2956
    %v3044 = vunpack.c.l.b16 %v2957
    %v3045 = vunpack.c.l.b16 %v2958
    %v3046 = vunpack.c.l.b16 %v2959
    %v3047 = vpack.c.b16 %v3008, %v3007
    %v3048 = vpack.c.b16 %v3010, %v3009
    %v3049 = vpack.c.b16 %v3012, %v3011
    %v3050 = vpack.c.b16 %v3014, %v3013
    %v3051 = vpack.c.b16 %v3016, %v3015
    %v3052 = vpack.c.b16 %v3018, %v3017
    %v3053 = vpack.c.b16 %v3020, %v3019
    %v3054 = vpack.c.b16 %v3022, %v3021
    %v3055 = vpack.c.b16 %v3024, %v3023
    %v3056 = vpack.c.b16 %v3026, %v3025
    %v3057 = vpack.c.b16 %v3028, %v3027
    %v3058 = vpack.c.b16 %v3030, %v3029
    %v3059 = vpack.c.b16 %v3032, %v3031
    %v3060 = vpack.c.b16 %v3034, %v3033
    %v3061 = vpack.c.b16 %v3036, %v3035
    %v3062 = vpack.c.b16 %v3038, %v3037
    %v3063 = vpack.c.b16 %v3040, %v3039
    %v3064 = vpack.c.b16 %v3042, %v3041
    %v3065 = vpack.c.b16 %v3044, %v3043
    %v3066 = vpack.c.b16 %v3046, %v3045
    %vm3087 = vcmask 523264
    %v3089 = vsel %vm3087, %v2919, 0
    %3091 = vmatprep.subr.bf16.mxu0 0
    %3092 = vmatpush1.bf16.msra.mxu0 %v3054
    %3093 = vmatprep.subr.bf16.mxu0 0
    %3094 = vmatpush1.bf16.msra.mxu0 %v3053
    %3095 = vmatprep.subr.bf16.mxu0 0
    %3096 = vmatpush1.bf16.msra.mxu0 %v3052
    %3097 = vmatprep.subr.bf16.mxu0 0
    %3098 = vmatpush1.bf16.msra.mxu0 %v3051
    %3099 = vmatprep.subr.bf16.mxu0 0
    %3100 = vmatpush1.bf16.msra.mxu0 %v3050
    %3101 = vmatprep.subr.bf16.mxu0 0
    %3102 = vmatpush1.bf16.msra.mxu0 %v3049
    %3103 = vmatprep.subr.bf16.mxu0 0
    %3104 = vmatpush1.bf16.msra.mxu0 %v3048
    %3105 = vmatprep.subr.bf16.mxu0 0
    %3106 = vmatpush1.bf16.msra.mxu0 %v3047
    %3107 = vmatprep.subr.bf16.mxu0 0
    %3108 = vmatpush2.bf16.msra.mxu0 %v3062
    %3109 = vmatprep.subr.bf16.mxu0 0
    %3110 = vmatpush2.bf16.msra.mxu0 %v3061
    %3111 = vmatprep.subr.bf16.mxu0 0
    %3112 = vmatpush2.bf16.msra.mxu0 %v3060
    %3113 = vmatprep.subr.bf16.mxu0 0
    %3114 = vmatpush2.bf16.msra.mxu0 %v3059
    %3115 = vmatprep.subr.bf16.mxu0 0
    %3116 = vmatpush2.bf16.msra.mxu0 %v3058
    %3117 = vmatprep.subr.bf16.mxu0 0
    %3118 = vmatpush2.bf16.msra.mxu0 %v3057
    %3119 = vmatprep.subr.bf16.mxu0 0
    %3120 = vmatpush2.bf16.msra.mxu0 %v3056
    %3121 = vmatprep.subr.bf16.mxu0 0
    %3122 = vmatpush2.bf16.msra.mxu0 %v3055
    %3123 = vmatprep.mubr.bf16.mxu0 %v2918
    %3124 = vmatmul.mubr.bf16.gmra.mxu0 %v2917
    %v3125 = vpop.f32.mrf.mxu0
    %v3126 = vadd.f32 %v2965, %v3125
    %v3127 = vpop.f32.mrf.mxu0
    %v3128 = vpop.f32.mrf.mxu0
    %v3129 = vpop.f32.mrf.mxu0
    %3130 = vdwg.mxu0
    %3131 = vmatprep.subr.bf16.mxu0 0
    %3132 = vmatpush1.bf16.msra.mxu0 0
    %3133 = vmatprep.subr.bf16.mxu0 0
    %3134 = vmatpush1.bf16.msra.mxu0 0
    %3135 = vmatprep.subr.bf16.mxu0 0
    %3136 = vmatpush1.bf16.msra.mxu0 0
    %3137 = vmatprep.subr.bf16.mxu0 0
    %3138 = vmatpush1.bf16.msra.mxu0 0
    %3139 = vmatprep.subr.bf16.mxu0 0
    %3140 = vmatpush1.bf16.msra.mxu0 %v3066
    %3141 = vmatprep.subr.bf16.mxu0 0
    %3142 = vmatpush1.bf16.msra.mxu0 %v3065
    %3143 = vmatprep.subr.bf16.mxu0 0
    %3144 = vmatpush1.bf16.msra.mxu0 %v3064
    %3145 = vmatprep.subr.bf16.mxu0 0
    %3146 = vmatpush1.bf16.msra.mxu0 %v3063
    %3147 = vmatprep.subr.bf16.mxu0 0
    %3148 = vmatpush2.bf16.msra.mxu0 0
    %3149 = vmatprep.subr.bf16.mxu0 0
    %3150 = vmatpush2.bf16.msra.mxu0 0
    %3151 = vmatprep.subr.bf16.mxu0 0
    %3152 = vmatpush2.bf16.msra.mxu0 0
    %3153 = vmatprep.subr.bf16.mxu0 0
    %3154 = vmatpush2.bf16.msra.mxu0 0
    %3155 = vmatprep.subr.bf16.mxu0 0
    %3156 = vmatpush2.bf16.msra.mxu0 0
    %3157 = vmatprep.subr.bf16.mxu0 0
    %3158 = vmatpush2.bf16.msra.mxu0 0
    %3159 = vmatprep.subr.bf16.mxu0 0
    %3160 = vmatpush2.bf16.msra.mxu0 0
    %3161 = vmatprep.subr.bf16.mxu0 0
    %3162 = vmatpush2.bf16.msra.mxu0 0
    %3163 = vmatprep.mubr.bf16.mxu0 0
    %3164 = vmatmul.mubr.bf16.gmra.mxu0 %v3089
    %v3165 = vpop.f32.mrf.mxu0
    %v3166 = vadd.f32 %v3126, %v3165
    %v3167 = vpop.f32.mrf.mxu0
    %v3168 = vpop.f32.mrf.mxu0
    %v3169 = vpop.f32.mrf.mxu0
    %3170 = vdwg.mxu0
    %3171 = vst [vmem:[#allocation5] sm:$0xff] %v3166
    // Predicated region
    $region58: #{rnnlm_forward.1} parent=1 // pred_check
      _
    $region59: #{rnnlm_forward.1} parent=1 // pred_check_branch
      %3173 = sbr.rel (0) target = $region61
    $region60: #{rnnlm_forward.1} parent=1 // pred_region
      %s3175 = ssub.s32 128, 128
      %3176 = vsyncadd [#allocation6], %s3175
      %s3178 = sshll.u32 [#allocation5], 4
      %s3179 = int_to_ptr.vmem [resolvable:$true] %s3178
      %3181 = dma.vmem_to_hbm [thread:$0]  %s3179, 128, %s14, [#allocation6]
    $region61: #{rnnlm_forward.1} parent=1 // pred_fallthru
      _
    // Predicated region
    $region62: #{rnnlm_forward.1} parent=1 // pred_check
      _
    $region63: #{rnnlm_forward.1} parent=1 // pred_check_branch
      %3183 = sbr.rel (0) target = $region65
    $region64: #{rnnlm_forward.1} parent=1 // pred_region
      %s3185 = ssub.s32 384, 384
      %3186 = vsyncadd [#allocation8], %s3185
      %s3187 = sshll.u32 [#allocation7], 4
      %s3188 = int_to_ptr.vmem [resolvable:$true] %s3187
      %3193 = dma.vmem_to_hbm [thread:$0]  %s3188, 384, %s15, [#allocation8], 128, 128, 8
    $region65: #{rnnlm_forward.1} parent=1 // pred_fallthru
      _
    // Predicated region
    $region66: #{rnnlm_forward.1} parent=1 // pred_check
      _
    $region67: #{rnnlm_forward.1} parent=1 // pred_check_branch
      %3195 = sbr.rel (0) target = $region69
    $region68: #{rnnlm_forward.1} parent=1 // pred_region
      %s3197 = ssub.s32 384, 384
      %3198 = vsyncadd [#allocation8], %s3197
      %s3199 = sshll.u32 [#allocation9], 4
      %s3200 = int_to_ptr.vmem [resolvable:$true] %s3199
      %3205 = dma.vmem_to_hbm [thread:$0]  %s3200, 384, %s16, [#allocation8], 128, 128, 8
    $region69: #{rnnlm_forward.1} parent=1 // pred_fallthru
      _
    // Predicated region
    $region70: #{rnnlm_forward.1} parent=1 // pred_check
      _
    $region71: #{rnnlm_forward.1} parent=1 // pred_check_branch
      %3207 = sbr.rel (0) target = $region73
    $region72: #{rnnlm_forward.1} parent=1 // pred_region
      %3208 = dma.done [#allocation6], 128
    $region73: #{rnnlm_forward.1} parent=1 // pred_fallthru
      _
    // Predicated region
    $region74: #{rnnlm_forward.1} parent=1 // pred_check
      _
    $region75: #{rnnlm_forward.1} parent=1 // pred_check_branch
      %3210 = sbr.rel (0) target = $region77
    $region76: #{rnnlm_forward.1} parent=1 // pred_region
      %3211 = dma.done [#allocation8], 384
    $region77: #{rnnlm_forward.1} parent=1 // pred_fallthru
      _
    // Predicated region
    $region78: #{rnnlm_forward.1} parent=1 // pred_check
      _
    $region79: #{rnnlm_forward.1} parent=1 // pred_check_branch
      %3213 = sbr.rel (0) target = $region81
    $region80: #{rnnlm_forward.1} parent=1 // pred_region
      %3214 = dma.done [#allocation8], 384
    $region81: #{rnnlm_forward.1} parent=1 // pred_fallthru
      _
    %3215 = vsyncpa [#allocation6], 1
    %3216 = vsyncpa [#allocation8], 1

</llo_original>
